<compile_context>
chip_gen: v5e
topology: v5e:2x2
jax: 0.10.0
libtpu: 0.0.40
codegen_flags: <defaults>
</compile_context>

<pallas_src>
import functools
import numpy as np
import jax
import jax.numpy as jnp
from jax import lax
from jax.experimental import pallas as pl
from jax.experimental.pallas import tpu as pltpu

_HI = lax.Precision.HIGHEST   # only for tiny host-side weight folds


def _silu(x):
    return x * (1.0 / (1.0 + jnp.exp(-x)))


def _gelu(x):  # exact erf GELU (PyTorch nn.GELU default)
    return 0.5 * x * (1.0 + lax.erf(x * (1.0 / np.sqrt(2.0))))


def _dotf(a, b):  # small-K matmuls (K <= C); default precision = 1 MXU pass
    return jnp.dot(a, b, preferred_element_type=jnp.float32)


# ---------------- kernel 1: cv1 + FFT-branch prologue (fused) ----------------

def _front_kernel(x_ref, wok_ref, bok_ref, wid_ref, bid_ref, w3_ref, vec_ref,
                  iden_ref, x1_ref, x2_ref, z_ref):
    x = x_ref[...]
    # cv1 (+folded BN) + SiLU, split into ok / identity rows via host-split weights.
    ok = _silu(_dotf(wok_ref[...], x) + bok_ref[...])
    iden_ref[...] = _silu(_dotf(wid_ref[...], x) + bid_ref[...]).astype(iden_ref.dtype)

    in_b = vec_ref[:, 0:1]
    dw1_b = vec_ref[:, 1:2]
    dw2_b = vec_ref[:, 2:3]
    dw11_w = vec_ref[:, 3:4]
    dw11_b = vec_ref[:, 4:5]
    beta = vec_ref[:, 5:6]

    ic = _gelu(_dotf(w3_ref[0], ok) + in_b)            # in_conv + GELU
    x_sca = jnp.abs(ic)                                # torch.abs
    x1_ref[...] = (_dotf(w3_ref[1], x_sca) + dw1_b).astype(x1_ref.dtype)   # FFM.dwconv1
    x2_ref[...] = (_dotf(w3_ref[2], x_sca) + dw2_b).astype(x2_ref.dtype)   # FFM.dwconv2
    # everything the post-FFT combine needs except alpha*|ifft2(...)|
    z_ref[...] = (ok + dw11_w * ic + dw11_b + beta * x_sca).astype(z_ref.dtype)


def front_pass(x3, wok, bok, wid, bid, w3, vecs, t):
    N, C, HW = x3.shape
    c1 = wok.shape[0]
    c2 = wid.shape[0]
    blk = lambda n, i: (n, 0, i)
    full = lambda n, i: (0, 0)
    return pl.pallas_call(
        _front_kernel,
        out_shape=(jax.ShapeDtypeStruct((N, c2, HW), jnp.bfloat16),
                   jax.ShapeDtypeStruct((N, c1, HW), jnp.bfloat16),
                   jax.ShapeDtypeStruct((N, c1, HW), jnp.bfloat16),
                   jax.ShapeDtypeStruct((N, c1, HW), jnp.bfloat16)),
        grid=(N, HW // t),
        in_specs=[
            pl.BlockSpec((None, C, t), blk),
            pl.BlockSpec((c1, C), full),
            pl.BlockSpec((c1, 1), full),
            pl.BlockSpec((c2, C), full),
            pl.BlockSpec((c2, 1), full),
            pl.BlockSpec((3, c1, c1), lambda n, i: (0, 0, 0)),
            pl.BlockSpec((c1, 6), full),
        ],
        out_specs=(pl.BlockSpec((None, c2, t), blk),
                   pl.BlockSpec((None, c1, t), blk),
                   pl.BlockSpec((None, c1, t), blk),
                   pl.BlockSpec((None, c1, t), blk)),
        compiler_params=pltpu.CompilerParams(
            dimension_semantics=("parallel", "parallel"),
            vmem_limit_bytes=32 * 2 ** 20),
    )(x3, wok, bok, wid, bid, w3, vecs)


# ---------------- kernel 2: FFM fft2/ifft2 + combine + ReLU ------------------

def _ffm_kernel(x1_ref, x2_ref, z_ref, alpha_ref, ffwd_ref, finv_ref, o_ref, *, hw):
    x1 = x1_ref[...].astype(jnp.float32)
    # fft2(x2): rows are flattened (H,W) images; one merged [real|imag] bf16 matmul.
    xf = jnp.dot(x2_ref[...], ffwd_ref[...], preferred_element_type=jnp.float32)
    # frequency-domain pointwise multiply by the (real) x1, as the module does.
    y = jnp.concatenate([x1, x1], axis=1) * xf
    # ifft2 via one merged block matmul -> [real | imag]; 1/(H*W) folded into alpha.
    ri = jnp.dot(y.astype(jnp.bfloat16), finv_ref[...],
                 preferred_element_type=jnp.float32)
    re = ri[:, :hw]
    im = ri[:, hw:]
    mag = jnp.sqrt(re * re + im * im)
    # relu(z + alpha*|ifft2(...)|) == relu(ok + dw11*ic + dw11_b + beta*|ic| + ffm)
    o_ref[...] = jnp.maximum(
        z_ref[...].astype(jnp.float32) + alpha_ref[...] * mag, 0.0
    ).astype(o_ref.dtype)


def ffm_combine(x1, x2, z, alpha_rows, H, W, bc):
    NC, HW = x1.shape
    # Resident bf16 DFT matrices (double-buffered) ~ 24*HW^2 bytes.
    assert 24 * HW * HW <= 24 * 2 ** 20, "Kronecker DFT matrices too large for VMEM"
    # TODO(synk): for HW > ~1024 switch to separable per-axis DFTs (F_H then F_W).
    fh = np.exp(-2j * np.pi * np.outer(np.arange(H), np.arange(H)) / H)
    fw = np.exp(-2j * np.pi * np.outer(np.arange(W), np.arange(W)) / W)
    f2 = np.kron(fh, fw)                              # (HW, HW), symmetric
    f2r = f2.real.astype(np.float32)
    f2i = f2.imag.astype(np.float32)
    ffwd = jnp.asarray(np.concatenate([f2r, f2i], axis=1), jnp.bfloat16)   # (HW, 2HW)
    finv = jnp.asarray(np.block([[f2r, -f2i], [f2i, f2r]]), jnp.bfloat16)  # (2HW, 2HW)

    rows = lambda j: (j, 0)
    full = lambda j: (0, 0)
    return pl.pallas_call(
        functools.partial(_ffm_kernel, hw=HW),
        out_shape=jax.ShapeDtypeStruct((NC, HW), jnp.bfloat16),
        grid=(NC // bc,),
        in_specs=[
            pl.BlockSpec((bc, HW), rows),
            pl.BlockSpec((bc, HW), rows),
            pl.BlockSpec((bc, HW), rows),
            pl.BlockSpec((bc, 1), rows),
            pl.BlockSpec((HW, 2 * HW), full),
            pl.BlockSpec((2 * HW, 2 * HW), full),
        ],
        out_specs=pl.BlockSpec((bc, HW), rows),
        compiler_params=pltpu.CompilerParams(
            dimension_semantics=("parallel",),
            vmem_limit_bytes=48 * 2 ** 20),
    )(x1, x2, z, alpha_rows, ffwd, finv)


# ---------------- kernel 3: out_conv + cat + cv2 (algebraic fusion) ----------

def _tail_kernel(iden_ref, comb_ref, weff_ref, wid_ref, beff_ref, o_ref):
    v = (_dotf(weff_ref[...], comb_ref[...].astype(jnp.float32)) +
         _dotf(wid_ref[...], iden_ref[...].astype(jnp.float32)) +
         beff_ref[...])
    o_ref[...] = _silu(v)


def tail_pass(iden, comb, w_eff, w_id, b_eff, t):
    N, c2, HW = iden.shape
    c1 = comb.shape[1]
    C = w_eff.shape[0]
    blk = lambda n, i: (n, 0, i)
    full = lambda n, i: (0, 0)
    return pl.pallas_call(
        _tail_kernel,
        out_shape=jax.ShapeDtypeStruct((N, C, HW), jnp.float32),
        grid=(N, HW // t),
        in_specs=[
            pl.BlockSpec((None, c2, t), blk),
            pl.BlockSpec((None, c1, t), blk),
            pl.BlockSpec((C, c1), full),
            pl.BlockSpec((C, c2), full),
            pl.BlockSpec((C, 1), full),
        ],
        out_specs=pl.BlockSpec((None, C, t), blk),
        compiler_params=pltpu.CompilerParams(
            dimension_semantics=("parallel", "parallel"),
            vmem_limit_bytes=32 * 2 ** 20),
    )(iden, comb, w_eff, w_id, b_eff)


# ----------------------------- parameters -----------------------------------

def init_params(key, dim, e=0.25):
    c1 = int(round(dim * e))   # consistent with forward's round()
    ks = jax.random.split(key, 14)
    rn = lambda k, shape, s=0.1: jax.random.normal(k, shape, jnp.float32) * s
    eps = 1e-3  # ultralytics BatchNorm2d eps
    bn_scale = jnp.ones((dim,), jnp.float32) / jnp.sqrt(1.0 + eps)
    bn_bias = jnp.zeros((dim,), jnp.float32)
    return {
        # Conv = Conv2d(no bias) + BN + SiLU ; weights stored as (Cin, Cout)
        "cv1_w": rn(ks[0], (dim, dim)), "cv1_scale": bn_scale, "cv1_bias": bn_bias,
        "cv2_w": rn(ks[1], (dim, dim)), "cv2_scale": bn_scale, "cv2_bias": bn_bias,
        # ImprovedFFTKernel(c1)
        "in_w": rn(ks[2], (c1, c1)), "in_b": rn(ks[3], (c1,)),
        "out_w": rn(ks[4], (c1, c1)), "out_b": rn(ks[5], (c1,)),
        "dw11_w": rn(ks[6], (c1,)) + 1.0, "dw11_b": rn(ks[7], (c1,)),
        # FFM(c1)
        "dw1_w": rn(ks[8], (c1, c1)), "dw1_b": rn(ks[9], (c1,)),
        "dw2_w": rn(ks[10], (c1, c1)), "dw2_b": rn(ks[11], (c1,)),
        # module inits alpha=zeros / beta=ones; use small nonzero alpha so the
        # FFT branch is exercised.
        "alpha": rn(ks[12], (c1,)) + 0.5,
        "beta": jnp.ones((c1,), jnp.float32),
    }


# ----------------------------- tile selection --------------------------------

def _pick_hw_tile(HW, N, C):
    # Largest lane-dense (multiple-of-128) divisor of HW such that a (C, t)
    # f32 block stays ~<=2 MiB; prefer >=2 total grid steps (v7x megacore).
    cap = max(128, min(2048, ((2 * 2 ** 20) // (C * 4)) // 128 * 128))
    cands = [t for t in range(128, min(HW, cap) + 1, 128) if HW % t == 0]
    if not cands:
        return HW                        # full extent (legal: equals array dim)
    t = cands[-1]
    if N * (HW // t) < 2 and len(cands) > 1:
        t = cands[-2]
    return t


def _pick_rows(NC, HW, cap=256):
    # FFM row-block: ~48*bc*HW bytes of live f32 temporaries per block.
    cap = min(cap, max(8, ((8 * 2 ** 20) // (HW * 48)) // 8 * 8))
    cands = [b for b in range(8, min(NC, cap) + 1, 8) if NC % b == 0]
    if not cands:
        return NC
    b = cands[-1]
    if NC // b < 2 and len(cands) > 1:
        b = cands[-2]
    return b


# ----------------------------- forward pass ---------------------------------

def ddf_forward(params, x_nchw, e=0.25):
    N, C, H, W = x_nchw.shape
    c1 = int(round(C * e))
    c2 = C - c1
    HW = H * W
    NC = N * c1
    t_hw = _pick_hw_tile(HW, N, C)
    bc = _pick_rows(NC, HW)

    # ---- host-side weight folding (tiny matrices) ----
    cv1_wt = params["cv1_scale"][:, None] * params["cv1_w"].T        # (C, C)
    wok, wid_cv1 = cv1_wt[:c1], cv1_wt[c1:]
    bok = params["cv1_bias"][:c1, None]
    bid = params["cv1_bias"][c1:, None]
    w3 = jnp.stack([params["in_w"].T, params["dw1_w"].T, params["dw2_w"].T], 0)
    vecs = jnp.stack([params["in_b"], params["dw1_b"], params["dw2_b"],
                      params["dw11_w"], params["dw11_b"], params["beta"]], axis=1)

    cv2_wt = params["cv2_scale"][:, None] * params["cv2_w"].T        # (C, C)
    # cv2(cat(out_conv(comb), identity)) == W_eff@comb + W_id@identity + b_eff
    w_eff = jnp.matmul(cv2_wt[:, :c1], params["out_w"].T, precision=_HI)
    w_id = cv2_wt[:, c1:]
    b_eff = (params["cv2_bias"] +
             jnp.matmul(cv2_wt[:, :c1], params["out_b"], precision=_HI))[:, None]

    # NCHW -> (N, C, H*W): pure reshape, no host-side transpose.
    x3 = x_nchw.reshape(N, C, HW).astype(jnp.float32)

    iden, x1, x2, z = front_pass(x3, wok, bok, wid_cv1, bid, w3, vecs, t_hw)

    # (N, c1, HW) -> (N*c1, HW) is a free reshape; fold 1/(H*W) into alpha.
    alpha_rows = jnp.tile(params["alpha"].astype(jnp.float32) / float(HW), N)[:, None]
    comb = ffm_combine(x1.reshape(NC, HW), x2.reshape(NC, HW),
                       z.reshape(NC, HW), alpha_rows, H, W, bc)

    out = tail_pass(iden, comb.reshape(N, c1, HW), w_eff, w_id, b_eff, t_hw)
    return out.reshape(N, C, H, W)


# ----------------------------- reference (pure JAX) --------------------------

def ddf_reference(params, x, e=0.25):
    N, C, H, W = x.shape
    c1 = int(round(C * e))

    def conv1x1(v, w, b=None):
        y = jnp.einsum("nchw,cd->ndhw", v, w)
        return y if b is None else y + b[None, :, None, None]

    silu = lambda v: v * jax.nn.sigmoid(v)
    per_c = lambda a: a[None, :, None, None]

    y = conv1x1(x, params["cv1_w"]) * per_c(params["cv1_scale"]) + per_c(params["cv1_bias"])
    y = silu(y)
    ok, identity = y[:, :c1], y[:, c1:]
    ic = jax.nn.gelu(conv1x1(ok, params["in_w"], params["in_b"]), approximate=False)
    xs = jnp.abs(ic)
    x1 = conv1x1(xs, params["dw1_w"], params["dw1_b"])
    x2 = conv1x1(xs, params["dw2_w"], params["dw2_b"])
    of = jnp.abs(jnp.fft.ifft2(x1 * jnp.fft.fft2(x2)))
    ffm = of * per_c(params["alpha"]) + xs * per_c(params["beta"])
    comb = jax.nn.relu(ok + ic * per_c(params["dw11_w"]) + per_c(params["dw11_b"]) + ffm)
    m_out = conv1x1(comb, params["out_w"], params["out_b"])
    cat = jnp.concatenate([m_out, identity], axis=1)
    out = conv1x1(cat, params["cv2_w"]) * per_c(params["cv2_scale"]) + per_c(params["cv2_bias"])
    return silu(out)


# ----------------------------- main ------------------------------------------

if __name__ == "__main__":
    key = jax.random.PRNGKey(0)
    kx, kp = jax.random.split(key)

    N, C, H, W = 2, 16, 16, 16          # dim=16, e=0.25 -> FFT branch dim = 4
    x = jax.random.normal(kx, (N, C, H, W), jnp.float32)
    params = init_params(kp, C, e=0.25)

    fwd = jax.jit(ddf_forward)
    out = jax.block_until_ready(fwd(params, x))

    ref = jax.block_until_ready(ddf_reference(params, x))
    if not np.allclose(np.asarray(out), np.asarray(ref), atol=2e-2, rtol=2e-2):
        print("WARNING: pallas output differs from pure-JAX reference")

    print("KERNEL_OK")
</pallas_src>

<mosaic_0001>
module attributes {stable_mosaic.version = 11 : i64} {
  func.func @_front_kernel(%arg0: i32, %arg1: i32, %arg2: memref<1x16x256xf32, #tpu.memory_space<vmem>>, %arg3: memref<4x16xf32, #tpu.memory_space<vmem>>, %arg4: memref<4x1xf32, #tpu.memory_space<vmem>>, %arg5: memref<12x16xf32, #tpu.memory_space<vmem>>, %arg6: memref<12x1xf32, #tpu.memory_space<vmem>>, %arg7: memref<3x4x4xf32, #tpu.memory_space<vmem>>, %arg8: memref<4x6xf32, #tpu.memory_space<vmem>>, %arg9: memref<1x12x256xbf16, #tpu.memory_space<vmem>>, %arg10: memref<1x4x256xbf16, #tpu.memory_space<vmem>>, %arg11: memref<1x4x256xbf16, #tpu.memory_space<vmem>>, %arg12: memref<1x4x256xbf16, #tpu.memory_space<vmem>>) attributes {dimension_semantics = [#tpu.dimension_semantics<parallel>, #tpu.dimension_semantics<parallel>], iteration_bounds = array<i64: 2, 1>, scalar_prefetch = 0 : i64, scratch_operands = 0 : i64, tpu.core_type = #tpu.core_type<tc>, window_params = [{transform_indices = @transform_0, window_bounds = array<i64: 1, 16, 256>}, {pipeline_mode = #tpu.pipeline_mode<synchronous>, transform_indices = @transform_1, window_bounds = array<i64: 4, 16>}, {pipeline_mode = #tpu.pipeline_mode<synchronous>, transform_indices = @transform_2, window_bounds = array<i64: 4, 1>}, {pipeline_mode = #tpu.pipeline_mode<synchronous>, transform_indices = @transform_3, window_bounds = array<i64: 12, 16>}, {pipeline_mode = #tpu.pipeline_mode<synchronous>, transform_indices = @transform_4, window_bounds = array<i64: 12, 1>}, {pipeline_mode = #tpu.pipeline_mode<synchronous>, transform_indices = @transform_5, window_bounds = array<i64: 3, 4, 4>}, {pipeline_mode = #tpu.pipeline_mode<synchronous>, transform_indices = @transform_6, window_bounds = array<i64: 4, 6>}, {transform_indices = @transform_7, window_bounds = array<i64: 1, 12, 256>}, {transform_indices = @transform_8, window_bounds = array<i64: 1, 4, 256>}, {transform_indices = @transform_9, window_bounds = array<i64: 1, 4, 256>}, {transform_indices = @transform_10, window_bounds = array<i64: 1, 4, 256>}]} {
    %c0 = arith.constant 0 : index
    %c0_0 = arith.constant 0 : index
    %c0_1 = arith.constant 0 : index
    %0 = vector.load %arg2[%c0, %c0_0, %c0_1] : memref<1x16x256xf32, #tpu.memory_space<vmem>>, vector<1x16x256xf32>
    %1 = vector.shape_cast %0 : vector<1x16x256xf32> to vector<16x256xf32>
    %c0_2 = arith.constant 0 : index
    %c0_3 = arith.constant 0 : index
    %2 = vector.load %arg3[%c0_2, %c0_3] : memref<4x16xf32, #tpu.memory_space<vmem>>, vector<4x16xf32>
    %cst = arith.constant dense<0.000000e+00> : vector<4x256xf32>
    %3 = tpu.matmul %2, %1, %cst {dimension_numbers = #tpu.dot_dimension_numbers<[1], [0], [0], [1], [0, 0, 1, 1], [], []>} : vector<4x16xf32>, vector<16x256xf32>, vector<4x256xf32> -> vector<4x256xf32>
    %c0_4 = arith.constant 0 : index
    %c0_5 = arith.constant 0 : index
    %4 = vector.load %arg4[%c0_4, %c0_5] : memref<4x1xf32, #tpu.memory_space<vmem>>, vector<4x1xf32>
    %5 = vector.broadcast %4 : vector<4x1xf32> to vector<4x256xf32>
    %6 = arith.addf %3, %5 : vector<4x256xf32>
    %cst_6 = arith.constant 0.000000e+00 : f32
    %7 = vector.broadcast %cst_6 : f32 to vector<4x256xf32>
    %8 = arith.subf %7, %6 : vector<4x256xf32>
    %9 = math.exp %8 : vector<4x256xf32>
    %cst_7 = arith.constant 1.000000e+00 : f32
    %10 = vector.broadcast %cst_7 : f32 to vector<4x256xf32>
    %11 = arith.addf %10, %9 : vector<4x256xf32>
    %cst_8 = arith.constant 1.000000e+00 : f32
    %12 = vector.broadcast %cst_8 : f32 to vector<4x256xf32>
    %13 = arith.divf %12, %11 : vector<4x256xf32>
    %14 = arith.mulf %6, %13 : vector<4x256xf32>
    %c0_9 = arith.constant 0 : index
    %c0_10 = arith.constant 0 : index
    %15 = vector.load %arg5[%c0_9, %c0_10] : memref<12x16xf32, #tpu.memory_space<vmem>>, vector<12x16xf32>
    %cst_11 = arith.constant dense<0.000000e+00> : vector<12x256xf32>
    %16 = tpu.matmul %15, %1, %cst_11 {dimension_numbers = #tpu.dot_dimension_numbers<[1], [0], [0], [1], [0, 0, 1, 1], [], []>} : vector<12x16xf32>, vector<16x256xf32>, vector<12x256xf32> -> vector<12x256xf32>
    %c0_12 = arith.constant 0 : index
    %c0_13 = arith.constant 0 : index
    %17 = vector.load %arg6[%c0_12, %c0_13] : memref<12x1xf32, #tpu.memory_space<vmem>>, vector<12x1xf32>
    %18 = vector.broadcast %17 : vector<12x1xf32> to vector<12x256xf32>
    %19 = arith.addf %16, %18 : vector<12x256xf32>
    %cst_14 = arith.constant 0.000000e+00 : f32
    %20 = vector.broadcast %cst_14 : f32 to vector<12x256xf32>
    %21 = arith.subf %20, %19 : vector<12x256xf32>
    %22 = math.exp %21 : vector<12x256xf32>
    %cst_15 = arith.constant 1.000000e+00 : f32
    %23 = vector.broadcast %cst_15 : f32 to vector<12x256xf32>
    %24 = arith.addf %23, %22 : vector<12x256xf32>
    %cst_16 = arith.constant 1.000000e+00 : f32
    %25 = vector.broadcast %cst_16 : f32 to vector<12x256xf32>
    %26 = arith.divf %25, %24 : vector<12x256xf32>
    %27 = arith.mulf %19, %26 : vector<12x256xf32>
    %28 = arith.truncf %27 : vector<12x256xf32> to vector<12x256xbf16>
    %c0_17 = arith.constant 0 : index
    %c0_18 = arith.constant 0 : index
    %c0_19 = arith.constant 0 : index
    %29 = vector.load %arg9[%c0_17, %c0_18, %c0_19] : memref<1x12x256xbf16, #tpu.memory_space<vmem>>, vector<1x12x256xbf16>
    %30 = vector.shape_cast %29 : vector<1x12x256xbf16> to vector<12x256xbf16>
    %31 = vector.shape_cast %28 : vector<12x256xbf16> to vector<1x12x256xbf16>
    tpu.vector_store %arg9[%c0_17, %c0_18, %c0_19], %31 {strides = array<i32>} : memref<1x12x256xbf16, #tpu.memory_space<vmem>>, vector<1x12x256xbf16>,
    %c0_20 = arith.constant 0 : index
    %c0_21 = arith.constant 0 : index
    %32 = vector.load %arg8[%c0_20, %c0_21] : memref<4x6xf32, #tpu.memory_space<vmem>>, vector<4x1xf32>
    %c0_22 = arith.constant 0 : index
    %c1 = arith.constant 1 : index
    %33 = vector.load %arg8[%c0_22, %c1] : memref<4x6xf32, #tpu.memory_space<vmem>>, vector<4x1xf32>
    %c0_23 = arith.constant 0 : index
    %c2 = arith.constant 2 : index
    %34 = vector.load %arg8[%c0_23, %c2] : memref<4x6xf32, #tpu.memory_space<vmem>>, vector<4x1xf32>
    %c0_24 = arith.constant 0 : index
    %c3 = arith.constant 3 : index
    %35 = vector.load %arg8[%c0_24, %c3] : memref<4x6xf32, #tpu.memory_space<vmem>>, vector<4x1xf32>
    %c0_25 = arith.constant 0 : index
    %c4 = arith.constant 4 : index
    %36 = vector.load %arg8[%c0_25, %c4] : memref<4x6xf32, #tpu.memory_space<vmem>>, vector<4x1xf32>
    %c0_26 = arith.constant 0 : index
    %c5 = arith.constant 5 : index
    %37 = vector.load %arg8[%c0_26, %c5] : memref<4x6xf32, #tpu.memory_space<vmem>>, vector<4x1xf32>
    %c0_27 = arith.constant 0 : index
    %c0_28 = arith.constant 0 : index
    %c0_29 = arith.constant 0 : index
    %38 = vector.load %arg7[%c0_27, %c0_28, %c0_29] : memref<3x4x4xf32, #tpu.memory_space<vmem>>, vector<1x4x4xf32>
    %39 = vector.shape_cast %38 : vector<1x4x4xf32> to vector<4x4xf32>
    %cst_30 = arith.constant dense<0.000000e+00> : vector<4x256xf32>
    %40 = tpu.matmul %39, %14, %cst_30 {dimension_numbers = #tpu.dot_dimension_numbers<[1], [0], [0], [1], [0, 0, 1, 1], [], []>} : vector<4x4xf32>, vector<4x256xf32>, vector<4x256xf32> -> vector<4x256xf32>
    %41 = vector.broadcast %32 : vector<4x1xf32> to vector<4x256xf32>
    %42 = arith.addf %40, %41 : vector<4x256xf32>
    %cst_31 = arith.constant 5.000000e-01 : f32
    %43 = vector.broadcast %cst_31 : f32 to vector<4x256xf32>
    %44 = arith.mulf %43, %42 : vector<4x256xf32>
    %cst_32 = arith.constant 0.707106769 : f32
    %45 = vector.broadcast %cst_32 : f32 to vector<4x256xf32>
    %46 = arith.mulf %42, %45 : vector<4x256xf32>
    %47 = math.erf %46 : vector<4x256xf32>
    %cst_33 = arith.constant 1.000000e+00 : f32
    %48 = vector.broadcast %cst_33 : f32 to vector<4x256xf32>
    %49 = arith.addf %48, %47 : vector<4x256xf32>
    %50 = arith.mulf %44, %49 : vector<4x256xf32>
    %51 = math.absf %50 : vector<4x256xf32>
    %c1_34 = arith.constant 1 : index
    %c0_35 = arith.constant 0 : index
    %c0_36 = arith.constant 0 : index
    %52 = vector.load %arg7[%c1_34, %c0_35, %c0_36] : memref<3x4x4xf32, #tpu.memory_space<vmem>>, vector<1x4x4xf32>
    %53 = vector.shape_cast %52 : vector<1x4x4xf32> to vector<4x4xf32>
    %cst_37 = arith.constant dense<0.000000e+00> : vector<4x256xf32>
    %54 = tpu.matmul %53, %51, %cst_37 {dimension_numbers = #tpu.dot_dimension_numbers<[1], [0], [0], [1], [0, 0, 1, 1], [], []>} : vector<4x4xf32>, vector<4x256xf32>, vector<4x256xf32> -> vector<4x256xf32>
    %55 = vector.broadcast %33 : vector<4x1xf32> to vector<4x256xf32>
    %56 = arith.addf %54, %55 : vector<4x256xf32>
    %57 = arith.truncf %56 : vector<4x256xf32> to vector<4x256xbf16>
    %c0_38 = arith.constant 0 : index
    %c0_39 = arith.constant 0 : index
    %c0_40 = arith.constant 0 : index
    %58 = vector.load %arg10[%c0_38, %c0_39, %c0_40] : memref<1x4x256xbf16, #tpu.memory_space<vmem>>, vector<1x4x256xbf16>
    %59 = vector.shape_cast %58 : vector<1x4x256xbf16> to vector<4x256xbf16>
    %60 = vector.shape_cast %57 : vector<4x256xbf16> to vector<1x4x256xbf16>
    tpu.vector_store %arg10[%c0_38, %c0_39, %c0_40], %60 {strides = array<i32>} : memref<1x4x256xbf16, #tpu.memory_space<vmem>>, vector<1x4x256xbf16>,
    %c2_41 = arith.constant 2 : index
    %c0_42 = arith.constant 0 : index
    %c0_43 = arith.constant 0 : index
    %61 = vector.load %arg7[%c2_41, %c0_42, %c0_43] : memref<3x4x4xf32, #tpu.memory_space<vmem>>, vector<1x4x4xf32>
    %62 = vector.shape_cast %61 : vector<1x4x4xf32> to vector<4x4xf32>
    %cst_44 = arith.constant dense<0.000000e+00> : vector<4x256xf32>
    %63 = tpu.matmul %62, %51, %cst_44 {dimension_numbers = #tpu.dot_dimension_numbers<[1], [0], [0], [1], [0, 0, 1, 1], [], []>} : vector<4x4xf32>, vector<4x256xf32>, vector<4x256xf32> -> vector<4x256xf32>
    %64 = vector.broadcast %34 : vector<4x1xf32> to vector<4x256xf32>
    %65 = arith.addf %63, %64 : vector<4x256xf32>
    %66 = arith.truncf %65 : vector<4x256xf32> to vector<4x256xbf16>
    %c0_45 = arith.constant 0 : index
    %c0_46 = arith.constant 0 : index
    %c0_47 = arith.constant 0 : index
    %67 = vector.load %arg11[%c0_45, %c0_46, %c0_47] : memref<1x4x256xbf16, #tpu.memory_space<vmem>>, vector<1x4x256xbf16>
    %68 = vector.shape_cast %67 : vector<1x4x256xbf16> to vector<4x256xbf16>
    %69 = vector.shape_cast %66 : vector<4x256xbf16> to vector<1x4x256xbf16>
    tpu.vector_store %arg11[%c0_45, %c0_46, %c0_47], %69 {strides = array<i32>} : memref<1x4x256xbf16, #tpu.memory_space<vmem>>, vector<1x4x256xbf16>,
    %70 = vector.broadcast %35 : vector<4x1xf32> to vector<4x256xf32>
    %71 = arith.mulf %70, %50 : vector<4x256xf32>
    %72 = arith.addf %14, %71 : vector<4x256xf32>
    %73 = vector.broadcast %36 : vector<4x1xf32> to vector<4x256xf32>
    %74 = arith.addf %72, %73 : vector<4x256xf32>
    %75 = vector.broadcast %37 : vector<4x1xf32> to vector<4x256xf32>
    %76 = arith.mulf %75, %51 : vector<4x256xf32>
    %77 = arith.addf %74, %76 : vector<4x256xf32>
    %78 = arith.truncf %77 : vector<4x256xf32> to vector<4x256xbf16>
    %c0_48 = arith.constant 0 : index
    %c0_49 = arith.constant 0 : index
    %c0_50 = arith.constant 0 : index
    %79 = vector.load %arg12[%c0_48, %c0_49, %c0_50] : memref<1x4x256xbf16, #tpu.memory_space<vmem>>, vector<1x4x256xbf16>
    %80 = vector.shape_cast %79 : vector<1x4x256xbf16> to vector<4x256xbf16>
    %81 = vector.shape_cast %78 : vector<4x256xbf16> to vector<1x4x256xbf16>
    tpu.vector_store %arg12[%c0_48, %c0_49, %c0_50], %81 {strides = array<i32>} : memref<1x4x256xbf16, #tpu.memory_space<vmem>>, vector<1x4x256xbf16>,
    return
  }
  func.func @transform_0(%arg0: i32, %arg1: i32) -> (i32, i32, i32) {
    %c0_i32 = arith.constant 0 : i32
    %c0_i32_0 = arith.constant 0 : i32
    return %arg0, %c0_i32, %arg1 : i32, i32, i32
  }
  func.func @transform_1(%arg0: i32, %arg1: i32) -> (i32, i32) {
    %c0_i32 = arith.constant 0 : i32
    %c0_i32_0 = arith.constant 0 : i32
    %c0_i32_1 = arith.constant 0 : i32
    return %c0_i32, %c0_i32_0 : i32, i32
  }
  func.func @transform_2(%arg0: i32, %arg1: i32) -> (i32, i32) {
    %c0_i32 = arith.constant 0 : i32
    %c0_i32_0 = arith.constant 0 : i32
    %c0_i32_1 = arith.constant 0 : i32
    return %c0_i32, %c0_i32_0 : i32, i32
  }
  func.func @transform_3(%arg0: i32, %arg1: i32) -> (i32, i32) {
    %c0_i32 = arith.constant 0 : i32
    %c0_i32_0 = arith.constant 0 : i32
    %c0_i32_1 = arith.constant 0 : i32
    return %c0_i32, %c0_i32_0 : i32, i32
  }
  func.func @transform_4(%arg0: i32, %arg1: i32) -> (i32, i32) {
    %c0_i32 = arith.constant 0 : i32
    %c0_i32_0 = arith.constant 0 : i32
    %c0_i32_1 = arith.constant 0 : i32
    return %c0_i32, %c0_i32_0 : i32, i32
  }
  func.func @transform_5(%arg0: i32, %arg1: i32) -> (i32, i32, i32) {
    %c0_i32 = arith.constant 0 : i32
    %c0_i32_0 = arith.constant 0 : i32
    %c0_i32_1 = arith.constant 0 : i32
    %c0_i32_2 = arith.constant 0 : i32
    return %c0_i32, %c0_i32_0, %c0_i32_1 : i32, i32, i32
  }
  func.func @transform_6(%arg0: i32, %arg1: i32) -> (i32, i32) {
    %c0_i32 = arith.constant 0 : i32
    %c0_i32_0 = arith.constant 0 : i32
    %c0_i32_1 = arith.constant 0 : i32
    return %c0_i32, %c0_i32_0 : i32, i32
  }
  func.func @transform_7(%arg0: i32, %arg1: i32) -> (i32, i32, i32) {
    %c0_i32 = arith.constant 0 : i32
    %c0_i32_0 = arith.constant 0 : i32
    return %arg0, %c0_i32, %arg1 : i32, i32, i32
  }
  func.func @transform_8(%arg0: i32, %arg1: i32) -> (i32, i32, i32) {
    %c0_i32 = arith.constant 0 : i32
    %c0_i32_0 = arith.constant 0 : i32
    return %arg0, %c0_i32, %arg1 : i32, i32, i32
  }
  func.func @transform_9(%arg0: i32, %arg1: i32) -> (i32, i32, i32) {
    %c0_i32 = arith.constant 0 : i32
    %c0_i32_0 = arith.constant 0 : i32
    return %arg0, %c0_i32, %arg1 : i32, i32, i32
  }
  func.func @transform_10(%arg0: i32, %arg1: i32) -> (i32, i32, i32) {
    %c0_i32 = arith.constant 0 : i32
    %c0_i32_0 = arith.constant 0 : i32
    return %arg0, %c0_i32, %arg1 : i32, i32, i32
  }
}

module attributes {stable_mosaic.version = 11 : i64} {
  func.func @_tail_kernel(%arg0: i32, %arg1: i32, %arg2: memref<1x12x256xbf16, #tpu.memory_space<vmem>>, %arg3: memref<1x4x256xbf16, #tpu.memory_space<vmem>>, %arg4: memref<16x4xf32, #tpu.memory_space<vmem>>, %arg5: memref<16x12xf32, #tpu.memory_space<vmem>>, %arg6: memref<16x1xf32, #tpu.memory_space<vmem>>, %arg7: memref<1x16x256xf32, #tpu.memory_space<vmem>>) attributes {dimension_semantics = [#tpu.dimension_semantics<parallel>, #tpu.dimension_semantics<parallel>], iteration_bounds = array<i64: 2, 1>, scalar_prefetch = 0 : i64, scratch_operands = 0 : i64, tpu.core_type = #tpu.core_type<tc>, window_params = [{transform_indices = @transform_0, window_bounds = array<i64: 1, 12, 256>}, {transform_indices = @transform_1, window_bounds = array<i64: 1, 4, 256>}, {pipeline_mode = #tpu.pipeline_mode<synchronous>, transform_indices = @transform_2, window_bounds = array<i64: 16, 4>}, {pipeline_mode = #tpu.pipeline_mode<synchronous>, transform_indices = @transform_3, window_bounds = array<i64: 16, 12>}, {pipeline_mode = #tpu.pipeline_mode<synchronous>, transform_indices = @transform_4, window_bounds = array<i64: 16, 1>}, {transform_indices = @transform_5, window_bounds = array<i64: 1, 16, 256>}]} {
    %c0 = arith.constant 0 : index
    %c0_0 = arith.constant 0 : index
    %0 = vector.load %arg4[%c0, %c0_0] : memref<16x4xf32, #tpu.memory_space<vmem>>, vector<16x4xf32>
    %c0_1 = arith.constant 0 : index
    %c0_2 = arith.constant 0 : index
    %c0_3 = arith.constant 0 : index
    %1 = vector.load %arg3[%c0_1, %c0_2, %c0_3] : memref<1x4x256xbf16, #tpu.memory_space<vmem>>, vector<1x4x256xbf16>
    %2 = vector.shape_cast %1 : vector<1x4x256xbf16> to vector<4x256xbf16>
    %3 = arith.extf %2 : vector<4x256xbf16> to vector<4x256xf32>
    %cst = arith.constant dense<0.000000e+00> : vector<16x256xf32>
    %4 = tpu.matmul %0, %3, %cst {dimension_numbers = #tpu.dot_dimension_numbers<[1], [0], [0], [1], [0, 0, 1, 1], [], []>} : vector<16x4xf32>, vector<4x256xf32>, vector<16x256xf32> -> vector<16x256xf32>
    %c0_4 = arith.constant 0 : index
    %c0_5 = arith.constant 0 : index
    %5 = vector.load %arg5[%c0_4, %c0_5] : memref<16x12xf32, #tpu.memory_space<vmem>>, vector<16x12xf32>
    %c0_6 = arith.constant 0 : index
    %c0_7 = arith.constant 0 : index
    %c0_8 = arith.constant 0 : index
    %6 = vector.load %arg2[%c0_6, %c0_7, %c0_8] : memref<1x12x256xbf16, #tpu.memory_space<vmem>>, vector<1x12x256xbf16>
    %7 = vector.shape_cast %6 : vector<1x12x256xbf16> to vector<12x256xbf16>
    %8 = arith.extf %7 : vector<12x256xbf16> to vector<12x256xf32>
    %cst_9 = arith.constant dense<0.000000e+00> : vector<16x256xf32>
    %9 = tpu.matmul %5, %8, %cst_9 {dimension_numbers = #tpu.dot_dimension_numbers<[1], [0], [0], [1], [0, 0, 1, 1], [], []>} : vector<16x12xf32>, vector<12x256xf32>, vector<16x256xf32> -> vector<16x256xf32>
    %10 = arith.addf %4, %9 : vector<16x256xf32>
    %c0_10 = arith.constant 0 : index
    %c0_11 = arith.constant 0 : index
    %11 = vector.load %arg6[%c0_10, %c0_11] : memref<16x1xf32, #tpu.memory_space<vmem>>, vector<16x1xf32>
    %12 = vector.broadcast %11 : vector<16x1xf32> to vector<16x256xf32>
    %13 = arith.addf %10, %12 : vector<16x256xf32>
    %cst_12 = arith.constant 0.000000e+00 : f32
    %14 = vector.broadcast %cst_12 : f32 to vector<16x256xf32>
    %15 = arith.subf %14, %13 : vector<16x256xf32>
    %16 = math.exp %15 : vector<16x256xf32>
    %cst_13 = arith.constant 1.000000e+00 : f32
    %17 = vector.broadcast %cst_13 : f32 to vector<16x256xf32>
    %18 = arith.addf %17, %16 : vector<16x256xf32>
    %cst_14 = arith.constant 1.000000e+00 : f32
    %19 = vector.broadcast %cst_14 : f32 to vector<16x256xf32>
    %20 = arith.divf %19, %18 : vector<16x256xf32>
    %21 = arith.mulf %13, %20 : vector<16x256xf32>
    %c0_15 = arith.constant 0 : index
    %c0_16 = arith.constant 0 : index
    %c0_17 = arith.constant 0 : index
    %22 = vector.load %arg7[%c0_15, %c0_16, %c0_17] : memref<1x16x256xf32, #tpu.memory_space<vmem>>, vector<1x16x256xf32>
    %23 = vector.shape_cast %22 : vector<1x16x256xf32> to vector<16x256xf32>
    %24 = vector.shape_cast %21 : vector<16x256xf32> to vector<1x16x256xf32>
    tpu.vector_store %arg7[%c0_15, %c0_16, %c0_17], %24 {strides = array<i32>} : memref<1x16x256xf32, #tpu.memory_space<vmem>>, vector<1x16x256xf32>,
    return
  }
  func.func @transform_0(%arg0: i32, %arg1: i32) -> (i32, i32, i32) {
    %c0_i32 = arith.constant 0 : i32
    %c0_i32_0 = arith.constant 0 : i32
    return %arg0, %c0_i32, %arg1 : i32, i32, i32
  }
  func.func @transform_1(%arg0: i32, %arg1: i32) -> (i32, i32, i32) {
    %c0_i32 = arith.constant 0 : i32
    %c0_i32_0 = arith.constant 0 : i32
    return %arg0, %c0_i32, %arg1 : i32, i32, i32
  }
  func.func @transform_2(%arg0: i32, %arg1: i32) -> (i32, i32) {
    %c0_i32 = arith.constant 0 : i32
    %c0_i32_0 = arith.constant 0 : i32
    %c0_i32_1 = arith.constant 0 : i32
    return %c0_i32, %c0_i32_0 : i32, i32
  }
  func.func @transform_3(%arg0: i32, %arg1: i32) -> (i32, i32) {
    %c0_i32 = arith.constant 0 : i32
    %c0_i32_0 = arith.constant 0 : i32
    %c0_i32_1 = arith.constant 0 : i32
    return %c0_i32, %c0_i32_0 : i32, i32
  }
  func.func @transform_4(%arg0: i32, %arg1: i32) -> (i32, i32) {
    %c0_i32 = arith.constant 0 : i32
    %c0_i32_0 = arith.constant 0 : i32
    %c0_i32_1 = arith.constant 0 : i32
    return %c0_i32, %c0_i32_0 : i32, i32
  }
  func.func @transform_5(%arg0: i32, %arg1: i32) -> (i32, i32, i32) {
    %c0_i32 = arith.constant 0 : i32
    %c0_i32_0 = arith.constant 0 : i32
    return %arg0, %c0_i32, %arg1 : i32, i32, i32
  }
}

module attributes {stable_mosaic.version = 11 : i64} {
  func.func @_ffm_kernel(%arg0: i32, %arg1: memref<8x256xbf16, #tpu.memory_space<vmem>>, %arg2: memref<8x256xbf16, #tpu.memory_space<vmem>>, %arg3: memref<8x256xbf16, #tpu.memory_space<vmem>>, %arg4: memref<8x1xf32, #tpu.memory_space<vmem>>, %arg5: memref<256x512xbf16, #tpu.memory_space<vmem>>, %arg6: memref<512x512xbf16, #tpu.memory_space<vmem>>, %arg7: memref<8x256xbf16, #tpu.memory_space<vmem>>) attributes {dimension_semantics = [#tpu.dimension_semantics<parallel>], iteration_bounds = array<i64: 1>, scalar_prefetch = 0 : i64, scratch_operands = 0 : i64, tpu.core_type = #tpu.core_type<tc>, window_params = [{transform_indices = @transform_0, window_bounds = array<i64: 8, 256>}, {transform_indices = @transform_1, window_bounds = array<i64: 8, 256>}, {transform_indices = @transform_2, window_bounds = array<i64: 8, 256>}, {transform_indices = @transform_3, window_bounds = array<i64: 8, 1>}, {pipeline_mode = #tpu.pipeline_mode<synchronous>, transform_indices = @transform_4, window_bounds = array<i64: 256, 512>}, {pipeline_mode = #tpu.pipeline_mode<synchronous>, transform_indices = @transform_5, window_bounds = array<i64: 512, 512>}, {transform_indices = @transform_6, window_bounds = array<i64: 8, 256>}]} {
    %c0 = arith.constant 0 : index
    %c0_0 = arith.constant 0 : index
    %0 = vector.load %arg1[%c0, %c0_0] : memref<8x256xbf16, #tpu.memory_space<vmem>>, vector<8x256xbf16>
    %1 = arith.extf %0 : vector<8x256xbf16> to vector<8x256xf32>
    %c0_1 = arith.constant 0 : index
    %c0_2 = arith.constant 0 : index
    %2 = vector.load %arg2[%c0_1, %c0_2] : memref<8x256xbf16, #tpu.memory_space<vmem>>, vector<8x256xbf16>
    %c0_3 = arith.constant 0 : index
    %c0_4 = arith.constant 0 : index
    %3 = vector.load %arg5[%c0_3, %c0_4] : memref<256x512xbf16, #tpu.memory_space<vmem>>, vector<256x512xbf16>
    %cst = arith.constant dense<0.000000e+00> : vector<8x512xf32>
    %4 = tpu.matmul %2, %3, %cst {dimension_numbers = #tpu.dot_dimension_numbers<[1], [0], [0], [1], [0, 0, 1, 1], [], []>} : vector<8x256xbf16>, vector<256x512xbf16>, vector<8x512xf32> -> vector<8x512xf32>
    %5 = tpu.concatenate %1, %1 in 1 : vector<8x256xf32>, vector<8x256xf32> -> vector<8x512xf32>
    %6 = arith.mulf %5, %4 : vector<8x512xf32>
    %7 = arith.truncf %6 : vector<8x512xf32> to vector<8x512xbf16>
    %c0_5 = arith.constant 0 : index
    %c0_6 = arith.constant 0 : index
    %8 = vector.load %arg6[%c0_5, %c0_6] : memref<512x512xbf16, #tpu.memory_space<vmem>>, vector<512x512xbf16>
    %cst_7 = arith.constant dense<0.000000e+00> : vector<8x512xf32>
    %9 = tpu.matmul %7, %8, %cst_7 {dimension_numbers = #tpu.dot_dimension_numbers<[1], [0], [0], [1], [0, 0, 1, 1], [], []>} : vector<8x512xbf16>, vector<512x512xbf16>, vector<8x512xf32> -> vector<8x512xf32>
    %10 = vector.extract_strided_slice %9 {offsets = [0, 0], sizes = [8, 256], strides = [1, 1]} : vector<8x512xf32> to vector<8x256xf32>
    %11 = vector.extract_strided_slice %9 {offsets = [0, 256], sizes = [8, 256], strides = [1, 1]} : vector<8x512xf32> to vector<8x256xf32>
    %12 = arith.mulf %10, %10 : vector<8x256xf32>
    %13 = arith.mulf %11, %11 : vector<8x256xf32>
    %14 = arith.addf %12, %13 : vector<8x256xf32>
    %15 = math.sqrt %14 : vector<8x256xf32>
    %c0_8 = arith.constant 0 : index
    %c0_9 = arith.constant 0 : index
    %16 = vector.load %arg3[%c0_8, %c0_9] : memref<8x256xbf16, #tpu.memory_space<vmem>>, vector<8x256xbf16>
    %17 = arith.extf %16 : vector<8x256xbf16> to vector<8x256xf32>
    %c0_10 = arith.constant 0 : index
    %c0_11 = arith.constant 0 : index
    %18 = vector.load %arg4[%c0_10, %c0_11] : memref<8x1xf32, #tpu.memory_space<vmem>>, vector<8x1xf32>
    %19 = vector.broadcast %18 : vector<8x1xf32> to vector<8x256xf32>
    %20 = arith.mulf %19, %15 : vector<8x256xf32>
    %21 = arith.addf %17, %20 : vector<8x256xf32>
    %cst_12 = arith.constant 0.000000e+00 : f32
    %22 = vector.broadcast %cst_12 : f32 to vector<8x256xf32>
    %23 = arith.maximumf %21, %22 : vector<8x256xf32>
    %24 = arith.truncf %23 : vector<8x256xf32> to vector<8x256xbf16>
    %c0_13 = arith.constant 0 : index
    %c0_14 = arith.constant 0 : index
    %25 = vector.load %arg7[%c0_13, %c0_14] : memref<8x256xbf16, #tpu.memory_space<vmem>>, vector<8x256xbf16>
    tpu.vector_store %arg7[%c0_13, %c0_14], %24 {strides = array<i32>} : memref<8x256xbf16, #tpu.memory_space<vmem>>, vector<8x256xbf16>,
    return
  }
  func.func @transform_0(%arg0: i32) -> (i32, i32) {
    %c0_i32 = arith.constant 0 : i32
    %c0_i32_0 = arith.constant 0 : i32
    return %arg0, %c0_i32 : i32, i32
  }
  func.func @transform_1(%arg0: i32) -> (i32, i32) {
    %c0_i32 = arith.constant 0 : i32
    %c0_i32_0 = arith.constant 0 : i32
    return %arg0, %c0_i32 : i32, i32
  }
  func.func @transform_2(%arg0: i32) -> (i32, i32) {
    %c0_i32 = arith.constant 0 : i32
    %c0_i32_0 = arith.constant 0 : i32
    return %arg0, %c0_i32 : i32, i32
  }
  func.func @transform_3(%arg0: i32) -> (i32, i32) {
    %c0_i32 = arith.constant 0 : i32
    %c0_i32_0 = arith.constant 0 : i32
    return %arg0, %c0_i32 : i32, i32
  }
  func.func @transform_4(%arg0: i32) -> (i32, i32) {
    %c0_i32 = arith.constant 0 : i32
    %c0_i32_0 = arith.constant 0 : i32
    %c0_i32_1 = arith.constant 0 : i32
    return %c0_i32, %c0_i32_0 : i32, i32
  }
  func.func @transform_5(%arg0: i32) -> (i32, i32) {
    %c0_i32 = arith.constant 0 : i32
    %c0_i32_0 = arith.constant 0 : i32
    %c0_i32_1 = arith.constant 0 : i32
    return %c0_i32, %c0_i32_0 : i32, i32
  }
  func.func @transform_6(%arg0: i32) -> (i32, i32) {
    %c0_i32 = arith.constant 0 : i32
    %c0_i32_0 = arith.constant 0 : i32
    return %arg0, %c0_i32 : i32, i32
  }
}

</mosaic_0001>

<llo_original>
// kernel: tile.8
$region0: #{tile.8}
  #allocation0 [shape = 's32[1]{0}', space=sflag, size = 0x4, scoped, tag = 'scoped memory for tile.8']
  %s0 = inlined_call_operand.vmem [shape: f32[4], index: 0, kind: input, shape index: {}]
  %s1 = inlined_call_operand.vmem [shape: f32[2,4], index: 1, kind: output, shape index: {}]
  // Predicated region
  $region2: #{tile.8} parent=0 // pred_check
    _
  $region3: #{tile.8} parent=0 // pred_check_branch
    %3 = sbr.rel (0) target = $region5
  $region4: #{tile.8} parent=0 // pred_region
    _
  $region5: #{tile.8} parent=0 // pred_fallthru
    _
  %v4 = vld [vmem:[%s0] ss:$0 sm:$0xff]
  %5 = vst [vmem:[%s1] sm:$0x3] %v4

// kernel: tile.0
$region0: #{tile.0}
  %s0 = inlined_call_operand.vmem [shape: f32[2,4], index: 0, kind: input, shape index: {}]
  %s1 = inlined_call_operand.vmem [shape: f32[8,1], index: 1, kind: output, shape index: {}]
  $region1: #{tile.0} parent=0
    #allocation0 [shape = 'u8[4096]{0}', space=vmem, size = 0x1000, scoped, tag = 'scoped mem for input reshape']
    %s3 = ssub.s32 4, 1
    %v4 = vld [vmem:[%s0] sm:%s3]
    %5 = vst [vmem:[#allocation0] sm:%s3] %v4
    %v6 = vld [vmem:[#allocation0] sm:$0x3]
    %vm7 = vcmask 7168
    %8 = vst.msk [vmem:[%s1] ss:$4 sm:$0x3] %vm7, %v6
    %v9 = vld [vmem:[#allocation0] sm:$0x3]
    %10 = vrot.lane.b32.xlu0 %v9, 127
    %v11 = vpop.permute.xlu0 %10
    %vm12 = vcmask 7168
    %s13 = scalar_lea.vmem %s1, 1
    %14 = vst.msk [vmem:[%s13] ss:$4 sm:$0x3] %vm12, %v11
    %v15 = vld [vmem:[#allocation0] sm:$0x3]
    %16 = vrot.lane.b32.xlu0 %v15, 126
    %v17 = vpop.permute.xlu0 %16
    %vm18 = vcmask 7168
    %s19 = scalar_lea.vmem %s1, 2
    %20 = vst.msk [vmem:[%s19] ss:$4 sm:$0x3] %vm18, %v17
    %v21 = vld [vmem:[#allocation0] sm:$0x3]
    %22 = vrot.lane.b32.xlu0 %v21, 125
    %v23 = vpop.permute.xlu0 %22
    %vm24 = vcmask 7168
    %s25 = scalar_lea.vmem %s1, 3
    %26 = vst.msk [vmem:[%s25] ss:$4 sm:$0x3] %vm24, %v23

// kernel: ddf_forward.5
$region0: #{ddf_forward.5}
  #allocation0 [shape = 'u32[]', space=smem, size = 0x4, offset = 0x4, fixed_abs, tag = 'smem constant byte address 0x4 - core index']
  #allocation1 [shape = 'u32[72,128]{1,0:T(1,128)}', space=vmem, size = 0x9000, scoped, tag = 'internal scratch']
  %s0 = inlined_call_operand.vmem [shape: bf16[2,12,256], index: 0, kind: input, shape index: {}]
  %s1 = inlined_call_operand.vmem [shape: bf16[2,4,256], index: 1, kind: input, shape index: {}]
  %s2 = inlined_call_operand.vmem [shape: f32[16,4], index: 2, kind: input, shape index: {}]
  %s3 = inlined_call_operand.vmem [shape: f32[16,12], index: 3, kind: input, shape index: {}]
  %s4 = inlined_call_operand.vmem [shape: f32[16,1], index: 4, kind: input, shape index: {}]
  %s5 = inlined_call_operand.vmem [shape: f32[2,16,256], index: 5, kind: output, shape index: {}]
  %s6 = sld [smem:[#allocation0]]
  $region53: #{ddf_forward.5} parent=0
    _
  %s8 = ssub.s32 1, %s6
  %s9 = scalar_select 0, %s8, %s6
  loop: start=0, step=1, limit=4
  $region2: #{ddf_forward.5} parent=0 // loop_pre_header
    _
  $region3: #{ddf_forward.5} parent=0 // loop_header
    %s11 = sphi 0, %s15
    %p12 = scmp.ge.s32.totalorder %s11, 4
    %s18 = sphi 0, %s30
    %s19 = sphi 0, %s26
    %s20 = sphi 0, %s18
    %s21 = sphi 0, %s19
    %s22 = sphi 0, %s20
    %s23 = sphi 0, %s21
    %s35 = sphi 0, %s37
    %s38 = sphi 0, %s35
    %s39 = sphi 0, %s38
    %s55 = sphi 0, %s39
    %s63 = sphi 0, %s65
    %s66 = sphi 0, %s63
    %s67 = sphi 0, %s66
    %s83 = sphi 0, %s67
    %s87 = sphi 0, %s87
    %s89 = sphi 0, %s87
    %s90 = sphi 0, %s89
    %s104 = sphi 0, %s90
    %s108 = sphi 0, %s108
    %s110 = sphi 0, %s108
    %s111 = sphi 0, %s110
    %s125 = sphi 0, %s111
    %s129 = sphi 0, %s129
    %s131 = sphi 0, %s129
    %s132 = sphi 0, %s131
    %s146 = sphi 0, %s132
    %s154 = sphi 0, %s156
    %s157 = sphi 0, %s154
    %s158 = sphi 0, %s157
    %s174 = sphi 0, %s158
  $region4: #{ddf_forward.5} parent=0 // loop_header_branch
    %14 = sbr.rel (%p12) target = $region8
  $region5: #{ddf_forward.5} parent=0 // loop_body
    %s16 = ssub.s32 %s11, 1
    %s17 = ssub.s32 %s11, 2
    %s24 = sadd.s32 1, %s19
    %p25 = scmp.ge.s32.totalorder %s24, 1
    %s26 = scalar_select %p25, 0, %s24
    %s27 = sadd.s32 1, %s18
    %s28 = scalar_select %p25, %s27, %s18
    %p29 = scmp.ge.s32.totalorder %s28, 2
    %s30 = scalar_select %p29, 0, %s28
    %s31 = ssub.s32 %s18, %s30
    %s32 = ssub.s32 %s19, %s26
    %s33 = sor.u32 %s31, %s32
    %p34 = scmp.eq.s32.totalorder %s33, 0
    %s36 = sadd.s32 %s35, 1
    %s37 = scalar_select %p34, %s35, %s36
    %p40 = pneg %p34
    %p41 = scmp.eq.s32.totalorder %s11, 1
    %p42 = por %p40, %p41
    %p43 = scmp.ne.s32.totalorder %s35, %s38
    %p44 = scmp.eq.s32.totalorder %s11, 0
    %p45 = por %p43, %p44
    %p46 = scmp.ne.s32.totalorder %s35, %s38
    %p47 = scmp.eq.s32.totalorder %s16, 1
    %p48 = por %p46, %p47
    %p49 = scmp.ne.s32.totalorder %s38, %s39
    %p50 = scmp.eq.s32.totalorder %s16, 0
    %p51 = por %p49, %p50
    %p52 = scmp.ne.s32.totalorder %s38, %s39
    %p53 = scmp.eq.s32.totalorder %s17, 1
    %p54 = por %p52, %p53
    %p56 = scmp.ne.s32.totalorder %s39, %s55
    %p57 = scmp.eq.s32.totalorder %s17, 0
    %p58 = por %p56, %p57
    %s59 = ssub.s32 %s18, %s30
    %s60 = ssub.s32 %s19, %s26
    %s61 = sor.u32 %s59, %s60
    %p62 = scmp.eq.s32.totalorder %s61, 0
    %s64 = sadd.s32 %s63, 1
    %s65 = scalar_select %p62, %s63, %s64
    %p68 = pneg %p62
    %p69 = scmp.eq.s32.totalorder %s11, 1
    %p70 = por %p68, %p69
    %p71 = scmp.ne.s32.totalorder %s63, %s66
    %p72 = scmp.eq.s32.totalorder %s11, 0
    %p73 = por %p71, %p72
    %p74 = scmp.ne.s32.totalorder %s63, %s66
    %p75 = scmp.eq.s32.totalorder %s16, 1
    %p76 = por %p74, %p75
    %p77 = scmp.ne.s32.totalorder %s66, %s67
    %p78 = scmp.eq.s32.totalorder %s16, 0
    %p79 = por %p77, %p78
    %p80 = scmp.ne.s32.totalorder %s66, %s67
    %p81 = scmp.eq.s32.totalorder %s17, 1
    %p82 = por %p80, %p81
    %p84 = scmp.ne.s32.totalorder %s67, %s83
    %p85 = scmp.eq.s32.totalorder %s17, 0
    %p86 = por %p84, %p85
    %s88 = sadd.s32 %s87, 1
    %p91 = scmp.eq.s32.totalorder %s11, 1
    %p92 = scmp.ne.s32.totalorder %s87, %s89
    %p93 = scmp.eq.s32.totalorder %s11, 0
    %p94 = por %p92, %p93
    %p95 = scmp.ne.s32.totalorder %s87, %s89
    %p96 = scmp.eq.s32.totalorder %s16, 1
    %p97 = por %p95, %p96
    %p98 = scmp.ne.s32.totalorder %s89, %s90
    %p99 = scmp.eq.s32.totalorder %s16, 0
    %p100 = por %p98, %p99
    %p101 = scmp.ne.s32.totalorder %s89, %s90
    %p102 = scmp.eq.s32.totalorder %s17, 1
    %p103 = por %p101, %p102
    %p105 = scmp.ne.s32.totalorder %s90, %s104
    %p106 = scmp.eq.s32.totalorder %s17, 0
    %p107 = por %p105, %p106
    %s109 = sadd.s32 %s108, 1
    %p112 = scmp.eq.s32.totalorder %s11, 1
    %p113 = scmp.ne.s32.totalorder %s108, %s110
    %p114 = scmp.eq.s32.totalorder %s11, 0
    %p115 = por %p113, %p114
    %p116 = scmp.ne.s32.totalorder %s108, %s110
    %p117 = scmp.eq.s32.totalorder %s16, 1
    %p118 = por %p116, %p117
    %p119 = scmp.ne.s32.totalorder %s110, %s111
    %p120 = scmp.eq.s32.totalorder %s16, 0
    %p121 = por %p119, %p120
    %p122 = scmp.ne.s32.totalorder %s110, %s111
    %p123 = scmp.eq.s32.totalorder %s17, 1
    %p124 = por %p122, %p123
    %p126 = scmp.ne.s32.totalorder %s111, %s125
    %p127 = scmp.eq.s32.totalorder %s17, 0
    %p128 = por %p126, %p127
    %s130 = sadd.s32 %s129, 1
    %p133 = scmp.eq.s32.totalorder %s11, 1
    %p134 = scmp.ne.s32.totalorder %s129, %s131
    %p135 = scmp.eq.s32.totalorder %s11, 0
    %p136 = por %p134, %p135
    %p137 = scmp.ne.s32.totalorder %s129, %s131
    %p138 = scmp.eq.s32.totalorder %s16, 1
    %p139 = por %p137, %p138
    %p140 = scmp.ne.s32.totalorder %s131, %s132
    %p141 = scmp.eq.s32.totalorder %s16, 0
    %p142 = por %p140, %p141
    %p143 = scmp.ne.s32.totalorder %s131, %s132
    %p144 = scmp.eq.s32.totalorder %s17, 1
    %p145 = por %p143, %p144
    %p147 = scmp.ne.s32.totalorder %s132, %s146
    %p148 = scmp.eq.s32.totalorder %s17, 0
    %p149 = por %p147, %p148
    %s150 = ssub.s32 %s18, %s30
    %s151 = ssub.s32 %s19, %s26
    %s152 = sor.u32 %s150, %s151
    %p153 = scmp.eq.s32.totalorder %s152, 0
    %s155 = sadd.s32 %s154, 1
    %s156 = scalar_select %p153, %s154, %s155
    %p159 = pneg %p153
    %p160 = scmp.eq.s32.totalorder %s11, 1
    %p161 = por %p159, %p160
    %p162 = scmp.ne.s32.totalorder %s154, %s157
    %p163 = scmp.eq.s32.totalorder %s11, 0
    %p164 = por %p162, %p163
    %p165 = scmp.ne.s32.totalorder %s154, %s157
    %p166 = scmp.eq.s32.totalorder %s16, 1
    %p167 = por %p165, %p166
    %p168 = scmp.ne.s32.totalorder %s157, %s158
    %p169 = scmp.eq.s32.totalorder %s16, 0
    %p170 = por %p168, %p169
    %p171 = scmp.ne.s32.totalorder %s157, %s158
    %p172 = scmp.eq.s32.totalorder %s17, 1
    %p173 = por %p171, %p172
    %p175 = scmp.ne.s32.totalorder %s158, %s174
    %p176 = scmp.eq.s32.totalorder %s17, 0
    %p177 = por %p175, %p176
    %p178 = scmp.le.s32.totalorder 1, %s11
    %p179 = scmp.lt.s32.totalorder %s11, 3
    %p180 = pnand %p178, %p179
    %p181 = pneg %p180
    // Predicated region
    $region9: #{ddf_forward.5} parent=5 // pred_check
      _
    $region10: #{ddf_forward.5} parent=5 // pred_check_branch
      %183 = sbr.rel (%p180) target = $region12
    $region11: #{ddf_forward.5} parent=5 // pred_region
      %s184 = ssub.s32 %s11, 1
      // Predicated region
      $region13: #{ddf_forward.5} parent=11 // pred_check
        %p185 = pneg %p100
      $region14: #{ddf_forward.5} parent=11 // pred_check_branch
        %187 = sbr.rel (%p185) target = $region16
      $region15: #{ddf_forward.5} parent=11 // pred_region
        _
      $region16: #{ddf_forward.5} parent=11 // pred_fallthru
        _
      // Predicated region
      $region17: #{ddf_forward.5} parent=11 // pred_check
        %p188 = pneg %p121
      $region18: #{ddf_forward.5} parent=11 // pred_check_branch
        %190 = sbr.rel (%p188) target = $region20
      $region19: #{ddf_forward.5} parent=11 // pred_region
        _
      $region20: #{ddf_forward.5} parent=11 // pred_fallthru
        _
      // Predicated region
      $region21: #{ddf_forward.5} parent=11 // pred_check
        %p191 = pneg %p142
      $region22: #{ddf_forward.5} parent=11 // pred_check_branch
        %193 = sbr.rel (%p191) target = $region24
      $region23: #{ddf_forward.5} parent=11 // pred_region
        _
      $region24: #{ddf_forward.5} parent=11 // pred_fallthru
        _
    $region12: #{ddf_forward.5} parent=5 // pred_fallthru
      _
    %p194 = scmp.lt.s32.totalorder %s11, 2
    // Predicated region
    $region25: #{ddf_forward.5} parent=5 // pred_check
      %p195 = pneg %p194
    $region26: #{ddf_forward.5} parent=5 // pred_check_branch
      %197 = sbr.rel (%p195) target = $region28
    $region27: #{ddf_forward.5} parent=5 // pred_region
      // Predicated region
      $region29: #{ddf_forward.5} parent=27 // pred_check
        %p198 = pneg %p45
      $region30: #{ddf_forward.5} parent=27 // pred_check_branch
        %200 = sbr.rel (%p198) target = $region32
      $region31: #{ddf_forward.5} parent=27 // pred_region
        %s201 = smul.u32 2, %s19
        %p202 = scmp.lt.s32.totalorder %s18, 1
        %s203 = scalar_select %p202, %s18, 1
        %p204 = scmp.lt.s32.totalorder %s201, 1
        %s205 = scalar_select %p204, %s201, 1
        %s206 = smul.addr %s203, 4
        %s207 = sadd.s32 %s205, %s206
        %s208 = smul.addr %s207, 4
        %s209 = scalar_lea.vmem %s0, %s208
        %s210 = smul.u32 2, %s19
      $region32: #{ddf_forward.5} parent=27 // pred_fallthru
        _
      // Predicated region
      $region33: #{ddf_forward.5} parent=27 // pred_check
        %p211 = pneg %p73
      $region34: #{ddf_forward.5} parent=27 // pred_check_branch
        %213 = sbr.rel (%p211) target = $region36
      $region35: #{ddf_forward.5} parent=27 // pred_region
        %s214 = smul.u32 2, %s19
        %p215 = scmp.lt.s32.totalorder %s18, 1
        %s216 = scalar_select %p215, %s18, 1
        %p217 = scmp.lt.s32.totalorder %s214, 1
        %s218 = scalar_select %p217, %s214, 1
        %s219 = smul.addr %s216, 2
        %s220 = sadd.s32 %s218, %s219
        %s221 = smul.addr %s220, 2
        %s222 = scalar_lea.vmem %s1, %s221
        %s223 = smul.u32 2, %s19
      $region36: #{ddf_forward.5} parent=27 // pred_fallthru
        _
    $region28: #{ddf_forward.5} parent=5 // pred_fallthru
      _
    %p224 = scmp.le.s32.totalorder 1, %s11
    %p225 = scmp.lt.s32.totalorder %s11, 3
    %p226 = pnand %p224, %p225
    %p227 = pneg %p226
    // Predicated region
    $region37: #{ddf_forward.5} parent=5 // pred_check
      _
    $region38: #{ddf_forward.5} parent=5 // pred_check_branch
      %229 = sbr.rel (%p226) target = $region40
    $region39: #{ddf_forward.5} parent=5 // pred_region
      %s230 = ssub.s32 %s11, 1
      %s231 = smul.u32 2, %s21
      %p232 = scmp.lt.s32.totalorder %s20, 1
      %s233 = scalar_select %p232, %s20, 1
      %p234 = scmp.lt.s32.totalorder %s231, 1
      %s235 = scalar_select %p234, %s231, 1
      %s236 = smul.addr %s233, 4
      %s237 = sadd.s32 %s235, %s236
      %s238 = smul.addr %s237, 4
      %s239 = scalar_lea.vmem %s0, %s238
      %p240 = pneg %p51
      %p241 = pneg %p48
      %s242 = smul.u32 2, %s21
      %p243 = scmp.lt.s32.totalorder %s20, 1
      %s244 = scalar_select %p243, %s20, 1
      %p245 = scmp.lt.s32.totalorder %s242, 1
      %s246 = scalar_select %p245, %s242, 1
      %s247 = smul.addr %s244, 2
      %s248 = sadd.s32 %s246, %s247
      %s249 = smul.addr %s248, 2
      %s250 = scalar_lea.vmem %s1, %s249
      %p251 = pneg %p79
      %p252 = pneg %p76
      %p253 = pneg %p100
      %p254 = pneg %p97
      %p255 = pneg %p121
      %p256 = pneg %p118
      %p257 = pneg %p142
      %p258 = pneg %p139
      %p259 = pneg %p170
      %p260 = pneg %p167
      %s261 = smul.u32 2, %s21
      %p262 = scmp.lt.s32.totalorder %s20, 1
      %s263 = scalar_select %p262, %s20, 1
      %p264 = scmp.lt.s32.totalorder %s261, 1
      %s265 = scalar_select %p264, %s261, 1
      %s266 = smul.addr %s263, 4
      %s267 = sadd.s32 %s265, %s266
      %s268 = smul.addr %s267, 8
      %s269 = scalar_lea.vmem %s5, %s268
      %s270 = smul.u32 2, %s21
      %p271 = scmp.lt.s32.totalorder %s20, 1
      %s272 = scalar_select %p271, %s20, 1
      %p273 = scmp.lt.s32.totalorder %s270, 1
      %s274 = scalar_select %p273, %s270, 1
      %s275 = smul.addr %s272, 4
      %s276 = sadd.s32 %s274, %s275
      %s277 = smul.addr %s276, 4
      %s278 = scalar_lea.vmem %s0, %s277
      %s279 = smul.u32 2, %s21
      %s280 = smul.u32 2, %s21
      %p281 = scmp.lt.s32.totalorder %s20, 1
      %s282 = scalar_select %p281, %s20, 1
      %p283 = scmp.lt.s32.totalorder %s280, 1
      %s284 = scalar_select %p283, %s280, 1
      %s285 = smul.addr %s282, 2
      %s286 = sadd.s32 %s284, %s285
      %s287 = smul.addr %s286, 2
      %s288 = scalar_lea.vmem %s1, %s287
      %s289 = smul.u32 2, %s21
      %s290 = smul.u32 2, %s21
      %p291 = scmp.lt.s32.totalorder %s20, 1
      %s292 = scalar_select %p291, %s20, 1
      %p293 = scmp.lt.s32.totalorder %s290, 1
      %s294 = scalar_select %p293, %s290, 1
      %s295 = smul.addr %s292, 4
      %s296 = sadd.s32 %s294, %s295
      %s297 = smul.addr %s296, 8
      %s298 = scalar_lea.vmem %s5, %s297
      %s299 = smul.u32 2, %s21
      %v300 = vld [vmem:[%s2] sm:$0xff]
      %v301 = vld [vmem:[%s2 + $0x8] sm:$0xff]
      %v302 = vld [vmem:[%s288] sm:$0xf]
      %v303 = vunpack.c.l.bf16 %v302
      %v304 = vld [vmem:[%s3] sm:$0xff]
      %v305 = vld [vmem:[%s3 + $0x8] sm:$0xff]
      %v306 = vld [vmem:[%s278] sm:$0xff]
      %v307 = vld [vmem:[%s278 + $0x8] sm:$0x33]
      %v308 = vunpack.c.l.bf16 %v306
      %v309 = vunpack.c.h.bf16 %v306
      %v310 = vunpack.c.l.bf16 %v307
      %v311 = vunpack.c.h.bf16 %v307
      %vm312 = vcmask 97280
      %v314 = vsel %vm312, %v304, 0
      %v317 = vsel %vm312, %v305, 0
      %vm319 = vcmask 1043456
      %v321 = vsel %vm319, %v310, 0
      %v324 = vsel %vm319, %v311, 0
      %326 = vmatpush.msra.mxu0 0.0
      %327 = vmatpush.msra.mxu0 0.0
      %328 = vmatpush.msra.mxu0 0.0
      %329 = vmatpush.msra.mxu0 0.0
      %330 = vmatpush.msra.mxu0 0.0
      %331 = vmatpush.msra.mxu0 0.0
      %332 = vmatpush.msra.mxu0 0.0
      %333 = vmatpush.msra.mxu0 0.0
      %334 = vmatpush.msra.mxu0 0.0
      %335 = vmatpush.msra.mxu0 0.0
      %336 = vmatpush.msra.mxu0 0.0
      %337 = vmatpush.msra.mxu0 0.0
      %338 = vmatpush.msra.mxu0 0.0
      %339 = vmatpush.msra.mxu0 0.0
      %340 = vmatpush.msra.mxu0 %v321
      %341 = vmatpush.msra.mxu0 %v308
      %342 = vmatmul.f32.gmra.mxu0 %v314
      %v343 = vpop.f32.mrf.mxu0
      %v344 = vadd.f32 0.0, %v343
      %345 = vmatmul.f32.gmra.mxu0 %v317
      %v346 = vpop.f32.mrf.mxu0
      %v347 = vadd.f32 0.0, %v346
      %348 = vdwg.mxu0
      %349 = vmatpush.msra.mxu0 0.0
      %350 = vmatpush.msra.mxu0 0.0
      %351 = vmatpush.msra.mxu0 0.0
      %352 = vmatpush.msra.mxu0 0.0
      %353 = vmatpush.msra.mxu0 0.0
      %354 = vmatpush.msra.mxu0 0.0
      %355 = vmatpush.msra.mxu0 0.0
      %356 = vmatpush.msra.mxu0 0.0
      %357 = vmatpush.msra.mxu0 0.0
      %358 = vmatpush.msra.mxu0 0.0
      %359 = vmatpush.msra.mxu0 0.0
      %360 = vmatpush.msra.mxu0 0.0
      %361 = vmatpush.msra.mxu0 0.0
      %362 = vmatpush.msra.mxu0 0.0
      %363 = vmatpush.msra.mxu0 %v324
      %364 = vmatpush.msra.mxu0 %v309
      %365 = vmatmul.f32.gmra.mxu0 %v314
      %v366 = vpop.f32.mrf.mxu0
      %v367 = vadd.f32 0.0, %v366
      %368 = vmatmul.f32.gmra.mxu0 %v317
      %v369 = vpop.f32.mrf.mxu0
      %v370 = vadd.f32 0.0, %v369
      %371 = vdwg.mxu0
      %373 = vst [vmem:[#allocation1] ss:$2 sm:$0xff] %v303
      %v374 = vld.sshfl [vmem:[#allocation1] sm:$0xff pattern:$0x75316420]
      %v375 = vld.sshfl [vmem:[#allocation1 + $0x8] sm:$0xff pattern:$0x75316420]
      %vm376 = vcmask 31744
      %v378 = vsel %vm376, %v300, 0
      %v381 = vsel %vm376, %v301, 0
      %v383 = vsel %vm319, %v374, 0
      %v385 = vsel %vm319, %v375, 0
      %387 = vmatpush.msra.mxu0 0.0
      %388 = vmatpush.msra.mxu0 0.0
      %389 = vmatpush.msra.mxu0 0.0
      %390 = vmatpush.msra.mxu0 0.0
      %391 = vmatpush.msra.mxu0 0.0
      %392 = vmatpush.msra.mxu0 0.0
      %393 = vmatpush.msra.mxu0 0.0
      %394 = vmatpush.msra.mxu0 0.0
      %395 = vmatpush.msra.mxu0 0.0
      %396 = vmatpush.msra.mxu0 0.0
      %397 = vmatpush.msra.mxu0 0.0
      %398 = vmatpush.msra.mxu0 0.0
      %399 = vmatpush.msra.mxu0 0.0
      %400 = vmatpush.msra.mxu0 0.0
      %401 = vmatpush.msra.mxu0 0.0
      %402 = vmatpush.msra.mxu0 %v383
      %403 = vmatmul.f32.gmra.mxu0 %v378
      %v404 = vpop.f32.mrf.mxu0
      %v405 = vadd.f32 %v344, %v404
      %406 = vmatmul.f32.gmra.mxu0 %v381
      %v407 = vpop.f32.mrf.mxu0
      %v408 = vadd.f32 %v347, %v407
      %409 = vdwg.mxu0
      %410 = vmatpush.msra.mxu0 0.0
      %411 = vmatpush.msra.mxu0 0.0
      %412 = vmatpush.msra.mxu0 0.0
      %413 = vmatpush.msra.mxu0 0.0
      %414 = vmatpush.msra.mxu0 0.0
      %415 = vmatpush.msra.mxu0 0.0
      %416 = vmatpush.msra.mxu0 0.0
      %417 = vmatpush.msra.mxu0 0.0
      %418 = vmatpush.msra.mxu0 0.0
      %419 = vmatpush.msra.mxu0 0.0
      %420 = vmatpush.msra.mxu0 0.0
      %421 = vmatpush.msra.mxu0 0.0
      %422 = vmatpush.msra.mxu0 0.0
      %423 = vmatpush.msra.mxu0 0.0
      %424 = vmatpush.msra.mxu0 0.0
      %425 = vmatpush.msra.mxu0 %v385
      %426 = vmatmul.f32.gmra.mxu0 %v378
      %v427 = vpop.f32.mrf.mxu0
      %v428 = vadd.f32 %v367, %v427
      %429 = vmatmul.f32.gmra.mxu0 %v381
      %v430 = vpop.f32.mrf.mxu0
      %v431 = vadd.f32 %v370, %v430
      %432 = vdwg.mxu0
      %v433 = vld [vmem:[%s4] sm:$0xff]
      %v434 = vld [vmem:[%s4 + $0x8] sm:$0xff]
      %436 = vset.pattern.permute.xlu0 0
      %437 = vperm.xlu0 %436, %v433
      %v438 = vpop.permute.xlu0 %437
      %441 = vset.pattern.permute.xlu0 0
      %442 = vperm.xlu0 %441, %v434
      %v443 = vpop.permute.xlu0 %442
      %v445 = vadd.f32 %v405, %v438
      %v446 = vadd.f32 %v428, %v438
      %v447 = vadd.f32 %v408, %v443
      %v448 = vadd.f32 %v431, %v443
      %v449 = vsub.f32 0.0, %v445
      %v450 = vsub.f32 0.0, %v446
      %v451 = vsub.f32 0.0, %v447
      %v452 = vsub.f32 0.0, %v448
      %v453 = vmul.f32 %v449, 1.442695
      %v454 = vpow.pop %v453
      %v455 = vmul.f32 %v450, 1.442695
      %v456 = vpow.pop %v455
      %v457 = vmul.f32 %v451, 1.442695
      %v458 = vpow.pop %v457
      %v459 = vmul.f32 %v452, 1.442695
      %v460 = vpow.pop %v459
      %v461 = vadd.f32 %v454, 1.0
      %v462 = vadd.f32 %v456, 1.0
      %v463 = vadd.f32 %v458, 1.0
      %v464 = vadd.f32 %v460, 1.0
      %v465 = vrcp.pop %v461
      %v466 = vmul.f32 %v461, %v465
      %v467 = vsub.f32 1.0, %v466
      %v468 = vmul.f32 %v465, %v467
      %v469 = vadd.f32 %v465, %v468
      %vm470 = vweird.f32 %v461
      %vm471 = vweird.f32 %v465
      %vm472 = vmor %vm470, %vm471
      %v473 = vsel %vm472, %v465, %v469
      %v474 = vand.u32 2147483647, %v461
      %vm475 = vcmp.eq.f32.partialorder %v474, 8.507059e+37
      %v476 = vand.u32 %v461, 2147483648
      %v477 = vor.u32 1.1754944e-38, %v476
      %v478 = vsel %vm475, %v477, %v473
      %v479 = vmul.f32 1.0, %v478
      %v480 = vrcp.pop %v462
      %v481 = vmul.f32 %v462, %v480
      %v482 = vsub.f32 1.0, %v481
      %v483 = vmul.f32 %v480, %v482
      %v484 = vadd.f32 %v480, %v483
      %vm485 = vweird.f32 %v462
      %vm486 = vweird.f32 %v480
      %vm487 = vmor %vm485, %vm486
      %v488 = vsel %vm487, %v480, %v484
      %v489 = vand.u32 2147483647, %v462
      %vm490 = vcmp.eq.f32.partialorder %v489, 8.507059e+37
      %v491 = vand.u32 %v462, 2147483648
      %v492 = vor.u32 1.1754944e-38, %v491
      %v493 = vsel %vm490, %v492, %v488
      %v494 = vmul.f32 1.0, %v493
      %v495 = vrcp.pop %v463
      %v496 = vmul.f32 %v463, %v495
      %v497 = vsub.f32 1.0, %v496
      %v498 = vmul.f32 %v495, %v497
      %v499 = vadd.f32 %v495, %v498
      %vm500 = vweird.f32 %v463
      %vm501 = vweird.f32 %v495
      %vm502 = vmor %vm500, %vm501
      %v503 = vsel %vm502, %v495, %v499
      %v504 = vand.u32 2147483647, %v463
      %vm505 = vcmp.eq.f32.partialorder %v504, 8.507059e+37
      %v506 = vand.u32 %v463, 2147483648
      %v507 = vor.u32 1.1754944e-38, %v506
      %v508 = vsel %vm505, %v507, %v503
      %v509 = vmul.f32 1.0, %v508
      %v510 = vrcp.pop %v464
      %v511 = vmul.f32 %v464, %v510
      %v512 = vsub.f32 1.0, %v511
      %v513 = vmul.f32 %v510, %v512
      %v514 = vadd.f32 %v510, %v513
      %vm515 = vweird.f32 %v464
      %vm516 = vweird.f32 %v510
      %vm517 = vmor %vm515, %vm516
      %v518 = vsel %vm517, %v510, %v514
      %v519 = vand.u32 2147483647, %v464
      %vm520 = vcmp.eq.f32.partialorder %v519, 8.507059e+37
      %v521 = vand.u32 %v464, 2147483648
      %v522 = vor.u32 1.1754944e-38, %v521
      %v523 = vsel %vm520, %v522, %v518
      %v524 = vmul.f32 1.0, %v523
      %v525 = vmul.f32 %v445, %v479
      %v526 = vmul.f32 %v446, %v494
      %v527 = vmul.f32 %v447, %v509
      %v528 = vmul.f32 %v448, %v524
      %529 = vst [vmem:[%s298] sm:$0xff] %v525
      %530 = vst [vmem:[%s298 + $0x8] sm:$0xff] %v526
      %531 = vst [vmem:[%s298 + $0x10] sm:$0xff] %v527
      %532 = vst [vmem:[%s298 + $0x18] sm:$0xff] %v528
      %s533 = smul.u32 2, %s21
      %p534 = scmp.lt.s32.totalorder %s20, 1
      %s535 = scalar_select %p534, %s20, 1
      %p536 = scmp.lt.s32.totalorder %s533, 1
      %s537 = scalar_select %p536, %s533, 1
      %s538 = smul.addr %s535, 4
      %s539 = sadd.s32 %s537, %s538
      %s540 = smul.addr %s539, 8
      %s541 = scalar_lea.vmem %s5, %s540
      // Predicated region
      $region41: #{ddf_forward.5} parent=39 // pred_check
        %p542 = pneg %p167
      $region42: #{ddf_forward.5} parent=39 // pred_check_branch
        %544 = sbr.rel (%p542) target = $region44
      $region43: #{ddf_forward.5} parent=39 // pred_region
        %s545 = smul.u32 2, %s21
      $region44: #{ddf_forward.5} parent=39 // pred_fallthru
        _
    $region40: #{ddf_forward.5} parent=5 // pred_fallthru
      _
    %p546 = scmp.le.s32.totalorder 2, %s11
    // Predicated region
    $region45: #{ddf_forward.5} parent=5 // pred_check
      %p547 = pneg %p546
    $region46: #{ddf_forward.5} parent=5 // pred_check_branch
      %549 = sbr.rel (%p547) target = $region48
    $region47: #{ddf_forward.5} parent=5 // pred_region
      %s550 = ssub.s32 %s11, 2
      // Predicated region
      $region49: #{ddf_forward.5} parent=47 // pred_check
        %p551 = pneg %p173
      $region50: #{ddf_forward.5} parent=47 // pred_check_branch
        %553 = sbr.rel (%p551) target = $region52
      $region51: #{ddf_forward.5} parent=47 // pred_region
        %s554 = smul.u32 2, %s23
        %p555 = scmp.lt.s32.totalorder %s22, 1
        %s556 = scalar_select %p555, %s22, 1
        %p557 = scmp.lt.s32.totalorder %s554, 1
        %s558 = scalar_select %p557, %s554, 1
        %s559 = smul.addr %s556, 4
        %s560 = sadd.s32 %s558, %s559
        %s561 = smul.addr %s560, 8
        %s562 = scalar_lea.vmem %s5, %s561
      $region52: #{ddf_forward.5} parent=47 // pred_fallthru
        _
    $region48: #{ddf_forward.5} parent=5 // pred_fallthru
      _
  $region6: #{ddf_forward.5} parent=0 // loop_footer
    %s15 = sadd.s32 1, %s11
  $region7: #{ddf_forward.5} parent=0 // loop_footer_branch
    %10 = sbr.rel target = $region3
  $region8: #{ddf_forward.5} parent=0 // loop_exit
    _

// kernel: ddf_forward.3
$region0: #{ddf_forward.3}
  #allocation0 [shape = 'u32[]', space=smem, size = 0x4, offset = 0x4, fixed_abs, tag = 'smem constant byte address 0x4 - core index']
  #allocation1 [shape = 'u32[72,128]{1,0:T(1,128)}', space=vmem, size = 0x9000, scoped, tag = 'internal scratch']
  %s0 = inlined_call_operand.vmem [shape: f32[2,16,256], index: 0, kind: input, shape index: {}]
  %s1 = inlined_call_operand.vmem [shape: f32[4,16], index: 1, kind: input, shape index: {}]
  %s2 = inlined_call_operand.vmem [shape: f32[4,1], index: 2, kind: input, shape index: {}]
  %s3 = inlined_call_operand.vmem [shape: f32[12,16], index: 3, kind: input, shape index: {}]
  %s4 = inlined_call_operand.vmem [shape: f32[12,1], index: 4, kind: input, shape index: {}]
  %s5 = inlined_call_operand.vmem [shape: f32[3,4,4], index: 5, kind: input, shape index: {}]
  %s6 = inlined_call_operand.vmem [shape: f32[4,6], index: 6, kind: input, shape index: {}]
  %s7 = inlined_call_operand.vmem [shape: bf16[2,12,256], index: 7, kind: output, shape index: {0}]
  %s8 = inlined_call_operand.vmem [shape: bf16[2,4,256], index: 8, kind: output, shape index: {1}]
  %s9 = inlined_call_operand.vmem [shape: bf16[2,4,256], index: 9, kind: output, shape index: {2}]
  %s10 = inlined_call_operand.vmem [shape: bf16[2,4,256], index: 10, kind: output, shape index: {3}]
  %11 = xla_tuple %s7, %s8, %s9, %s10
  %s12 = sld [smem:[#allocation0]]
  $region85: #{ddf_forward.3} parent=0
    _
  %s14 = ssub.s32 1, %s12
  %s15 = scalar_select 0, %s14, %s12
  loop: start=0, step=1, limit=4
  $region2: #{ddf_forward.3} parent=0 // loop_pre_header
    _
  $region3: #{ddf_forward.3} parent=0 // loop_header
    %s17 = sphi 0, %s21
    %p18 = scmp.ge.s32.totalorder %s17, 4
    %s24 = sphi 0, %s36
    %s25 = sphi 0, %s32
    %s26 = sphi 0, %s24
    %s27 = sphi 0, %s25
    %s28 = sphi 0, %s26
    %s29 = sphi 0, %s27
    %s41 = sphi 0, %s43
    %s44 = sphi 0, %s41
    %s45 = sphi 0, %s44
    %s61 = sphi 0, %s45
    %s65 = sphi 0, %s65
    %s67 = sphi 0, %s65
    %s68 = sphi 0, %s67
    %s82 = sphi 0, %s68
    %s86 = sphi 0, %s86
    %s88 = sphi 0, %s86
    %s89 = sphi 0, %s88
    %s103 = sphi 0, %s89
    %s107 = sphi 0, %s107
    %s109 = sphi 0, %s107
    %s110 = sphi 0, %s109
    %s124 = sphi 0, %s110
    %s128 = sphi 0, %s128
    %s130 = sphi 0, %s128
    %s131 = sphi 0, %s130
    %s145 = sphi 0, %s131
    %s149 = sphi 0, %s149
    %s151 = sphi 0, %s149
    %s152 = sphi 0, %s151
    %s166 = sphi 0, %s152
    %s170 = sphi 0, %s170
    %s172 = sphi 0, %s170
    %s173 = sphi 0, %s172
    %s187 = sphi 0, %s173
    %s195 = sphi 0, %s197
    %s198 = sphi 0, %s195
    %s199 = sphi 0, %s198
    %s215 = sphi 0, %s199
    %s223 = sphi 0, %s225
    %s226 = sphi 0, %s223
    %s227 = sphi 0, %s226
    %s243 = sphi 0, %s227
    %s251 = sphi 0, %s253
    %s254 = sphi 0, %s251
    %s255 = sphi 0, %s254
    %s271 = sphi 0, %s255
    %s279 = sphi 0, %s281
    %s282 = sphi 0, %s279
    %s283 = sphi 0, %s282
    %s299 = sphi 0, %s283
  $region4: #{ddf_forward.3} parent=0 // loop_header_branch
    %20 = sbr.rel (%p18) target = $region8
  $region5: #{ddf_forward.3} parent=0 // loop_body
    %s22 = ssub.s32 %s17, 1
    %s23 = ssub.s32 %s17, 2
    %s30 = sadd.s32 1, %s25
    %p31 = scmp.ge.s32.totalorder %s30, 1
    %s32 = scalar_select %p31, 0, %s30
    %s33 = sadd.s32 1, %s24
    %s34 = scalar_select %p31, %s33, %s24
    %p35 = scmp.ge.s32.totalorder %s34, 2
    %s36 = scalar_select %p35, 0, %s34
    %s37 = ssub.s32 %s24, %s36
    %s38 = ssub.s32 %s25, %s32
    %s39 = sor.u32 %s37, %s38
    %p40 = scmp.eq.s32.totalorder %s39, 0
    %s42 = sadd.s32 %s41, 1
    %s43 = scalar_select %p40, %s41, %s42
    %p46 = pneg %p40
    %p47 = scmp.eq.s32.totalorder %s17, 1
    %p48 = por %p46, %p47
    %p49 = scmp.ne.s32.totalorder %s41, %s44
    %p50 = scmp.eq.s32.totalorder %s17, 0
    %p51 = por %p49, %p50
    %p52 = scmp.ne.s32.totalorder %s41, %s44
    %p53 = scmp.eq.s32.totalorder %s22, 1
    %p54 = por %p52, %p53
    %p55 = scmp.ne.s32.totalorder %s44, %s45
    %p56 = scmp.eq.s32.totalorder %s22, 0
    %p57 = por %p55, %p56
    %p58 = scmp.ne.s32.totalorder %s44, %s45
    %p59 = scmp.eq.s32.totalorder %s23, 1
    %p60 = por %p58, %p59
    %p62 = scmp.ne.s32.totalorder %s45, %s61
    %p63 = scmp.eq.s32.totalorder %s23, 0
    %p64 = por %p62, %p63
    %s66 = sadd.s32 %s65, 1
    %p69 = scmp.eq.s32.totalorder %s17, 1
    %p70 = scmp.ne.s32.totalorder %s65, %s67
    %p71 = scmp.eq.s32.totalorder %s17, 0
    %p72 = por %p70, %p71
    %p73 = scmp.ne.s32.totalorder %s65, %s67
    %p74 = scmp.eq.s32.totalorder %s22, 1
    %p75 = por %p73, %p74
    %p76 = scmp.ne.s32.totalorder %s67, %s68
    %p77 = scmp.eq.s32.totalorder %s22, 0
    %p78 = por %p76, %p77
    %p79 = scmp.ne.s32.totalorder %s67, %s68
    %p80 = scmp.eq.s32.totalorder %s23, 1
    %p81 = por %p79, %p80
    %p83 = scmp.ne.s32.totalorder %s68, %s82
    %p84 = scmp.eq.s32.totalorder %s23, 0
    %p85 = por %p83, %p84
    %s87 = sadd.s32 %s86, 1
    %p90 = scmp.eq.s32.totalorder %s17, 1
    %p91 = scmp.ne.s32.totalorder %s86, %s88
    %p92 = scmp.eq.s32.totalorder %s17, 0
    %p93 = por %p91, %p92
    %p94 = scmp.ne.s32.totalorder %s86, %s88
    %p95 = scmp.eq.s32.totalorder %s22, 1
    %p96 = por %p94, %p95
    %p97 = scmp.ne.s32.totalorder %s88, %s89
    %p98 = scmp.eq.s32.totalorder %s22, 0
    %p99 = por %p97, %p98
    %p100 = scmp.ne.s32.totalorder %s88, %s89
    %p101 = scmp.eq.s32.totalorder %s23, 1
    %p102 = por %p100, %p101
    %p104 = scmp.ne.s32.totalorder %s89, %s103
    %p105 = scmp.eq.s32.totalorder %s23, 0
    %p106 = por %p104, %p105
    %s108 = sadd.s32 %s107, 1
    %p111 = scmp.eq.s32.totalorder %s17, 1
    %p112 = scmp.ne.s32.totalorder %s107, %s109
    %p113 = scmp.eq.s32.totalorder %s17, 0
    %p114 = por %p112, %p113
    %p115 = scmp.ne.s32.totalorder %s107, %s109
    %p116 = scmp.eq.s32.totalorder %s22, 1
    %p117 = por %p115, %p116
    %p118 = scmp.ne.s32.totalorder %s109, %s110
    %p119 = scmp.eq.s32.totalorder %s22, 0
    %p120 = por %p118, %p119
    %p121 = scmp.ne.s32.totalorder %s109, %s110
    %p122 = scmp.eq.s32.totalorder %s23, 1
    %p123 = por %p121, %p122
    %p125 = scmp.ne.s32.totalorder %s110, %s124
    %p126 = scmp.eq.s32.totalorder %s23, 0
    %p127 = por %p125, %p126
    %s129 = sadd.s32 %s128, 1
    %p132 = scmp.eq.s32.totalorder %s17, 1
    %p133 = scmp.ne.s32.totalorder %s128, %s130
    %p134 = scmp.eq.s32.totalorder %s17, 0
    %p135 = por %p133, %p134
    %p136 = scmp.ne.s32.totalorder %s128, %s130
    %p137 = scmp.eq.s32.totalorder %s22, 1
    %p138 = por %p136, %p137
    %p139 = scmp.ne.s32.totalorder %s130, %s131
    %p140 = scmp.eq.s32.totalorder %s22, 0
    %p141 = por %p139, %p140
    %p142 = scmp.ne.s32.totalorder %s130, %s131
    %p143 = scmp.eq.s32.totalorder %s23, 1
    %p144 = por %p142, %p143
    %p146 = scmp.ne.s32.totalorder %s131, %s145
    %p147 = scmp.eq.s32.totalorder %s23, 0
    %p148 = por %p146, %p147
    %s150 = sadd.s32 %s149, 1
    %p153 = scmp.eq.s32.totalorder %s17, 1
    %p154 = scmp.ne.s32.totalorder %s149, %s151
    %p155 = scmp.eq.s32.totalorder %s17, 0
    %p156 = por %p154, %p155
    %p157 = scmp.ne.s32.totalorder %s149, %s151
    %p158 = scmp.eq.s32.totalorder %s22, 1
    %p159 = por %p157, %p158
    %p160 = scmp.ne.s32.totalorder %s151, %s152
    %p161 = scmp.eq.s32.totalorder %s22, 0
    %p162 = por %p160, %p161
    %p163 = scmp.ne.s32.totalorder %s151, %s152
    %p164 = scmp.eq.s32.totalorder %s23, 1
    %p165 = por %p163, %p164
    %p167 = scmp.ne.s32.totalorder %s152, %s166
    %p168 = scmp.eq.s32.totalorder %s23, 0
    %p169 = por %p167, %p168
    %s171 = sadd.s32 %s170, 1
    %p174 = scmp.eq.s32.totalorder %s17, 1
    %p175 = scmp.ne.s32.totalorder %s170, %s172
    %p176 = scmp.eq.s32.totalorder %s17, 0
    %p177 = por %p175, %p176
    %p178 = scmp.ne.s32.totalorder %s170, %s172
    %p179 = scmp.eq.s32.totalorder %s22, 1
    %p180 = por %p178, %p179
    %p181 = scmp.ne.s32.totalorder %s172, %s173
    %p182 = scmp.eq.s32.totalorder %s22, 0
    %p183 = por %p181, %p182
    %p184 = scmp.ne.s32.totalorder %s172, %s173
    %p185 = scmp.eq.s32.totalorder %s23, 1
    %p186 = por %p184, %p185
    %p188 = scmp.ne.s32.totalorder %s173, %s187
    %p189 = scmp.eq.s32.totalorder %s23, 0
    %p190 = por %p188, %p189
    %s191 = ssub.s32 %s24, %s36
    %s192 = ssub.s32 %s25, %s32
    %s193 = sor.u32 %s191, %s192
    %p194 = scmp.eq.s32.totalorder %s193, 0
    %s196 = sadd.s32 %s195, 1
    %s197 = scalar_select %p194, %s195, %s196
    %p200 = pneg %p194
    %p201 = scmp.eq.s32.totalorder %s17, 1
    %p202 = por %p200, %p201
    %p203 = scmp.ne.s32.totalorder %s195, %s198
    %p204 = scmp.eq.s32.totalorder %s17, 0
    %p205 = por %p203, %p204
    %p206 = scmp.ne.s32.totalorder %s195, %s198
    %p207 = scmp.eq.s32.totalorder %s22, 1
    %p208 = por %p206, %p207
    %p209 = scmp.ne.s32.totalorder %s198, %s199
    %p210 = scmp.eq.s32.totalorder %s22, 0
    %p211 = por %p209, %p210
    %p212 = scmp.ne.s32.totalorder %s198, %s199
    %p213 = scmp.eq.s32.totalorder %s23, 1
    %p214 = por %p212, %p213
    %p216 = scmp.ne.s32.totalorder %s199, %s215
    %p217 = scmp.eq.s32.totalorder %s23, 0
    %p218 = por %p216, %p217
    %s219 = ssub.s32 %s24, %s36
    %s220 = ssub.s32 %s25, %s32
    %s221 = sor.u32 %s219, %s220
    %p222 = scmp.eq.s32.totalorder %s221, 0
    %s224 = sadd.s32 %s223, 1
    %s225 = scalar_select %p222, %s223, %s224
    %p228 = pneg %p222
    %p229 = scmp.eq.s32.totalorder %s17, 1
    %p230 = por %p228, %p229
    %p231 = scmp.ne.s32.totalorder %s223, %s226
    %p232 = scmp.eq.s32.totalorder %s17, 0
    %p233 = por %p231, %p232
    %p234 = scmp.ne.s32.totalorder %s223, %s226
    %p235 = scmp.eq.s32.totalorder %s22, 1
    %p236 = por %p234, %p235
    %p237 = scmp.ne.s32.totalorder %s226, %s227
    %p238 = scmp.eq.s32.totalorder %s22, 0
    %p239 = por %p237, %p238
    %p240 = scmp.ne.s32.totalorder %s226, %s227
    %p241 = scmp.eq.s32.totalorder %s23, 1
    %p242 = por %p240, %p241
    %p244 = scmp.ne.s32.totalorder %s227, %s243
    %p245 = scmp.eq.s32.totalorder %s23, 0
    %p246 = por %p244, %p245
    %s247 = ssub.s32 %s24, %s36
    %s248 = ssub.s32 %s25, %s32
    %s249 = sor.u32 %s247, %s248
    %p250 = scmp.eq.s32.totalorder %s249, 0
    %s252 = sadd.s32 %s251, 1
    %s253 = scalar_select %p250, %s251, %s252
    %p256 = pneg %p250
    %p257 = scmp.eq.s32.totalorder %s17, 1
    %p258 = por %p256, %p257
    %p259 = scmp.ne.s32.totalorder %s251, %s254
    %p260 = scmp.eq.s32.totalorder %s17, 0
    %p261 = por %p259, %p260
    %p262 = scmp.ne.s32.totalorder %s251, %s254
    %p263 = scmp.eq.s32.totalorder %s22, 1
    %p264 = por %p262, %p263
    %p265 = scmp.ne.s32.totalorder %s254, %s255
    %p266 = scmp.eq.s32.totalorder %s22, 0
    %p267 = por %p265, %p266
    %p268 = scmp.ne.s32.totalorder %s254, %s255
    %p269 = scmp.eq.s32.totalorder %s23, 1
    %p270 = por %p268, %p269
    %p272 = scmp.ne.s32.totalorder %s255, %s271
    %p273 = scmp.eq.s32.totalorder %s23, 0
    %p274 = por %p272, %p273
    %s275 = ssub.s32 %s24, %s36
    %s276 = ssub.s32 %s25, %s32
    %s277 = sor.u32 %s275, %s276
    %p278 = scmp.eq.s32.totalorder %s277, 0
    %s280 = sadd.s32 %s279, 1
    %s281 = scalar_select %p278, %s279, %s280
    %p284 = pneg %p278
    %p285 = scmp.eq.s32.totalorder %s17, 1
    %p286 = por %p284, %p285
    %p287 = scmp.ne.s32.totalorder %s279, %s282
    %p288 = scmp.eq.s32.totalorder %s17, 0
    %p289 = por %p287, %p288
    %p290 = scmp.ne.s32.totalorder %s279, %s282
    %p291 = scmp.eq.s32.totalorder %s22, 1
    %p292 = por %p290, %p291
    %p293 = scmp.ne.s32.totalorder %s282, %s283
    %p294 = scmp.eq.s32.totalorder %s22, 0
    %p295 = por %p293, %p294
    %p296 = scmp.ne.s32.totalorder %s282, %s283
    %p297 = scmp.eq.s32.totalorder %s23, 1
    %p298 = por %p296, %p297
    %p300 = scmp.ne.s32.totalorder %s283, %s299
    %p301 = scmp.eq.s32.totalorder %s23, 0
    %p302 = por %p300, %p301
    %p303 = scmp.le.s32.totalorder 1, %s17
    %p304 = scmp.lt.s32.totalorder %s17, 3
    %p305 = pnand %p303, %p304
    %p306 = pneg %p305
    // Predicated region
    $region9: #{ddf_forward.3} parent=5 // pred_check
      _
    $region10: #{ddf_forward.3} parent=5 // pred_check_branch
      %308 = sbr.rel (%p305) target = $region12
    $region11: #{ddf_forward.3} parent=5 // pred_region
      %s309 = ssub.s32 %s17, 1
      // Predicated region
      $region13: #{ddf_forward.3} parent=11 // pred_check
        %p310 = pneg %p78
      $region14: #{ddf_forward.3} parent=11 // pred_check_branch
        %312 = sbr.rel (%p310) target = $region16
      $region15: #{ddf_forward.3} parent=11 // pred_region
        _
      $region16: #{ddf_forward.3} parent=11 // pred_fallthru
        _
      // Predicated region
      $region17: #{ddf_forward.3} parent=11 // pred_check
        %p313 = pneg %p99
      $region18: #{ddf_forward.3} parent=11 // pred_check_branch
        %315 = sbr.rel (%p313) target = $region20
      $region19: #{ddf_forward.3} parent=11 // pred_region
        _
      $region20: #{ddf_forward.3} parent=11 // pred_fallthru
        _
      // Predicated region
      $region21: #{ddf_forward.3} parent=11 // pred_check
        %p316 = pneg %p120
      $region22: #{ddf_forward.3} parent=11 // pred_check_branch
        %318 = sbr.rel (%p316) target = $region24
      $region23: #{ddf_forward.3} parent=11 // pred_region
        _
      $region24: #{ddf_forward.3} parent=11 // pred_fallthru
        _
      // Predicated region
      $region25: #{ddf_forward.3} parent=11 // pred_check
        %p319 = pneg %p141
      $region26: #{ddf_forward.3} parent=11 // pred_check_branch
        %321 = sbr.rel (%p319) target = $region28
      $region27: #{ddf_forward.3} parent=11 // pred_region
        _
      $region28: #{ddf_forward.3} parent=11 // pred_fallthru
        _
      // Predicated region
      $region29: #{ddf_forward.3} parent=11 // pred_check
        %p322 = pneg %p162
      $region30: #{ddf_forward.3} parent=11 // pred_check_branch
        %324 = sbr.rel (%p322) target = $region32
      $region31: #{ddf_forward.3} parent=11 // pred_region
        _
      $region32: #{ddf_forward.3} parent=11 // pred_fallthru
        _
      // Predicated region
      $region33: #{ddf_forward.3} parent=11 // pred_check
        %p325 = pneg %p183
      $region34: #{ddf_forward.3} parent=11 // pred_check_branch
        %327 = sbr.rel (%p325) target = $region36
      $region35: #{ddf_forward.3} parent=11 // pred_region
        _
      $region36: #{ddf_forward.3} parent=11 // pred_fallthru
        _
    $region12: #{ddf_forward.3} parent=5 // pred_fallthru
      _
    %p328 = scmp.lt.s32.totalorder %s17, 2
    // Predicated region
    $region37: #{ddf_forward.3} parent=5 // pred_check
      %p329 = pneg %p328
    $region38: #{ddf_forward.3} parent=5 // pred_check_branch
      %331 = sbr.rel (%p329) target = $region40
    $region39: #{ddf_forward.3} parent=5 // pred_region
      // Predicated region
      $region41: #{ddf_forward.3} parent=39 // pred_check
        %p332 = pneg %p51
      $region42: #{ddf_forward.3} parent=39 // pred_check_branch
        %334 = sbr.rel (%p332) target = $region44
      $region43: #{ddf_forward.3} parent=39 // pred_region
        %s335 = smul.u32 2, %s25
        %p336 = scmp.lt.s32.totalorder %s24, 1
        %s337 = scalar_select %p336, %s24, 1
        %p338 = scmp.lt.s32.totalorder %s335, 1
        %s339 = scalar_select %p338, %s335, 1
        %s340 = smul.addr %s337, 4
        %s341 = sadd.s32 %s339, %s340
        %s342 = smul.addr %s341, 8
        %s343 = scalar_lea.vmem %s0, %s342
        %s344 = smul.u32 2, %s25
      $region44: #{ddf_forward.3} parent=39 // pred_fallthru
        _
    $region40: #{ddf_forward.3} parent=5 // pred_fallthru
      _
    %p345 = scmp.le.s32.totalorder 1, %s17
    %p346 = scmp.lt.s32.totalorder %s17, 3
    %p347 = pnand %p345, %p346
    %p348 = pneg %p347
    // Predicated region
    $region45: #{ddf_forward.3} parent=5 // pred_check
      _
    $region46: #{ddf_forward.3} parent=5 // pred_check_branch
      %350 = sbr.rel (%p347) target = $region48
    $region47: #{ddf_forward.3} parent=5 // pred_region
      %s351 = ssub.s32 %s17, 1
      %s352 = smul.u32 2, %s27
      %p353 = scmp.lt.s32.totalorder %s26, 1
      %s354 = scalar_select %p353, %s26, 1
      %p355 = scmp.lt.s32.totalorder %s352, 1
      %s356 = scalar_select %p355, %s352, 1
      %s357 = smul.addr %s354, 4
      %s358 = sadd.s32 %s356, %s357
      %s359 = smul.addr %s358, 8
      %s360 = scalar_lea.vmem %s0, %s359
      %p361 = pneg %p57
      %p362 = pneg %p54
      %p363 = pneg %p78
      %p364 = pneg %p75
      %p365 = pneg %p99
      %p366 = pneg %p96
      %p367 = pneg %p120
      %p368 = pneg %p117
      %p369 = pneg %p141
      %p370 = pneg %p138
      %p371 = pneg %p162
      %p372 = pneg %p159
      %p373 = pneg %p183
      %p374 = pneg %p180
      %p375 = pneg %p211
      %p376 = pneg %p208
      %s377 = smul.u32 2, %s27
      %p378 = scmp.lt.s32.totalorder %s26, 1
      %s379 = scalar_select %p378, %s26, 1
      %p380 = scmp.lt.s32.totalorder %s377, 1
      %s381 = scalar_select %p380, %s377, 1
      %s382 = smul.addr %s379, 4
      %s383 = sadd.s32 %s381, %s382
      %s384 = smul.addr %s383, 4
      %s385 = scalar_lea.vmem %s7, %s384
      %p386 = pneg %p239
      %p387 = pneg %p236
      %s388 = smul.u32 2, %s27
      %p389 = scmp.lt.s32.totalorder %s26, 1
      %s390 = scalar_select %p389, %s26, 1
      %p391 = scmp.lt.s32.totalorder %s388, 1
      %s392 = scalar_select %p391, %s388, 1
      %s393 = smul.addr %s390, 2
      %s394 = sadd.s32 %s392, %s393
      %s395 = smul.addr %s394, 2
      %s396 = scalar_lea.vmem %s8, %s395
      %p397 = pneg %p267
      %p398 = pneg %p264
      %s399 = smul.u32 2, %s27
      %p400 = scmp.lt.s32.totalorder %s26, 1
      %s401 = scalar_select %p400, %s26, 1
      %p402 = scmp.lt.s32.totalorder %s399, 1
      %s403 = scalar_select %p402, %s399, 1
      %s404 = smul.addr %s401, 2
      %s405 = sadd.s32 %s403, %s404
      %s406 = smul.addr %s405, 2
      %s407 = scalar_lea.vmem %s9, %s406
      %p408 = pneg %p295
      %p409 = pneg %p292
      %s410 = smul.u32 2, %s27
      %p411 = scmp.lt.s32.totalorder %s26, 1
      %s412 = scalar_select %p411, %s26, 1
      %p413 = scmp.lt.s32.totalorder %s410, 1
      %s414 = scalar_select %p413, %s410, 1
      %s415 = smul.addr %s412, 2
      %s416 = sadd.s32 %s414, %s415
      %s417 = smul.addr %s416, 2
      %s418 = scalar_lea.vmem %s10, %s417
      %s419 = smul.u32 2, %s27
      %p420 = scmp.lt.s32.totalorder %s26, 1
      %s421 = scalar_select %p420, %s26, 1
      %p422 = scmp.lt.s32.totalorder %s419, 1
      %s423 = scalar_select %p422, %s419, 1
      %s424 = smul.addr %s421, 4
      %s425 = sadd.s32 %s423, %s424
      %s426 = smul.addr %s425, 8
      %s427 = scalar_lea.vmem %s0, %s426
      %s428 = smul.u32 2, %s27
      %s429 = smul.u32 2, %s27
      %p430 = scmp.lt.s32.totalorder %s26, 1
      %s431 = scalar_select %p430, %s26, 1
      %p432 = scmp.lt.s32.totalorder %s429, 1
      %s433 = scalar_select %p432, %s429, 1
      %s434 = smul.addr %s431, 4
      %s435 = sadd.s32 %s433, %s434
      %s436 = smul.addr %s435, 4
      %s437 = scalar_lea.vmem %s7, %s436
      %s438 = smul.u32 2, %s27
      %s439 = smul.u32 2, %s27
      %p440 = scmp.lt.s32.totalorder %s26, 1
      %s441 = scalar_select %p440, %s26, 1
      %p442 = scmp.lt.s32.totalorder %s439, 1
      %s443 = scalar_select %p442, %s439, 1
      %s444 = smul.addr %s441, 2
      %s445 = sadd.s32 %s443, %s444
      %s446 = smul.addr %s445, 2
      %s447 = scalar_lea.vmem %s8, %s446
      %s448 = smul.u32 2, %s27
      %s449 = smul.u32 2, %s27
      %p450 = scmp.lt.s32.totalorder %s26, 1
      %s451 = scalar_select %p450, %s26, 1
      %p452 = scmp.lt.s32.totalorder %s449, 1
      %s453 = scalar_select %p452, %s449, 1
      %s454 = smul.addr %s451, 2
      %s455 = sadd.s32 %s453, %s454
      %s456 = smul.addr %s455, 2
      %s457 = scalar_lea.vmem %s9, %s456
      %s458 = smul.u32 2, %s27
      %s459 = smul.u32 2, %s27
      %p460 = scmp.lt.s32.totalorder %s26, 1
      %s461 = scalar_select %p460, %s26, 1
      %p462 = scmp.lt.s32.totalorder %s459, 1
      %s463 = scalar_select %p462, %s459, 1
      %s464 = smul.addr %s461, 2
      %s465 = sadd.s32 %s463, %s464
      %s466 = smul.addr %s465, 2
      %s467 = scalar_lea.vmem %s10, %s466
      %s468 = smul.u32 2, %s27
      %v469 = vld [vmem:[%s427] sm:$0xff]
      %v470 = vld [vmem:[%s427 + $0x8] sm:$0xff]
      %v471 = vld [vmem:[%s427 + $0x10] sm:$0xff]
      %v472 = vld [vmem:[%s427 + $0x18] sm:$0xff]
      %v473 = vld [vmem:[%s1] sm:$0xf]
      %v474 = vld [vmem:[%s2] sm:$0xf]
      %476 = vset.pattern.permute.xlu0 0
      %477 = vperm.xlu0 %476, %v474
      %v478 = vpop.permute.xlu0 %477
      %vm480 = vcmask 130048
      %v482 = vsel %vm480, %v473, 0
      %484 = vmatpush.msra.mxu0 0.0
      %485 = vmatpush.msra.mxu0 0.0
      %486 = vmatpush.msra.mxu0 0.0
      %487 = vmatpush.msra.mxu0 0.0
      %488 = vmatpush.msra.mxu0 0.0
      %489 = vmatpush.msra.mxu0 0.0
      %490 = vmatpush.msra.mxu0 0.0
      %491 = vmatpush.msra.mxu0 0.0
      %492 = vmatpush.msra.mxu0 0.0
      %493 = vmatpush.msra.mxu0 0.0
      %494 = vmatpush.msra.mxu0 0.0
      %495 = vmatpush.msra.mxu0 0.0
      %496 = vmatpush.msra.mxu0 0.0
      %497 = vmatpush.msra.mxu0 0.0
      %498 = vmatpush.msra.mxu0 %v471
      %499 = vmatpush.msra.mxu0 %v469
      %500 = vmatmul.f32.gmra.mxu0 %v482
      %v501 = vpop.f32.mrf.mxu0
      %v502 = vadd.f32 %v478, %v501
      %503 = vdwg.mxu0
      %504 = vmatpush.msra.mxu0 0.0
      %505 = vmatpush.msra.mxu0 0.0
      %506 = vmatpush.msra.mxu0 0.0
      %507 = vmatpush.msra.mxu0 0.0
      %508 = vmatpush.msra.mxu0 0.0
      %509 = vmatpush.msra.mxu0 0.0
      %510 = vmatpush.msra.mxu0 0.0
      %511 = vmatpush.msra.mxu0 0.0
      %512 = vmatpush.msra.mxu0 0.0
      %513 = vmatpush.msra.mxu0 0.0
      %514 = vmatpush.msra.mxu0 0.0
      %515 = vmatpush.msra.mxu0 0.0
      %516 = vmatpush.msra.mxu0 0.0
      %517 = vmatpush.msra.mxu0 0.0
      %518 = vmatpush.msra.mxu0 %v472
      %519 = vmatpush.msra.mxu0 %v470
      %520 = vmatmul.f32.gmra.mxu0 %v482
      %v521 = vpop.f32.mrf.mxu0
      %v522 = vadd.f32 %v478, %v521
      %523 = vdwg.mxu0
      %v524 = vsub.f32 0.0, %v502
      %v525 = vsub.f32 0.0, %v522
      %v526 = vmul.f32 %v524, 1.442695
      %v527 = vpow.pop %v526
      %v528 = vmul.f32 %v525, 1.442695
      %v529 = vpow.pop %v528
      %v530 = vadd.f32 %v527, 1.0
      %v531 = vadd.f32 %v529, 1.0
      %v532 = vrcp.pop %v530
      %v533 = vmul.f32 %v530, %v532
      %v534 = vsub.f32 1.0, %v533
      %v535 = vmul.f32 %v532, %v534
      %v536 = vadd.f32 %v532, %v535
      %vm537 = vweird.f32 %v530
      %vm538 = vweird.f32 %v532
      %vm539 = vmor %vm537, %vm538
      %v540 = vsel %vm539, %v532, %v536
      %v541 = vand.u32 2147483647, %v530
      %vm542 = vcmp.eq.f32.partialorder %v541, 8.507059e+37
      %v543 = vand.u32 %v530, 2147483648
      %v544 = vor.u32 1.1754944e-38, %v543
      %v545 = vsel %vm542, %v544, %v540
      %v546 = vmul.f32 1.0, %v545
      %v547 = vrcp.pop %v531
      %v548 = vmul.f32 %v531, %v547
      %v549 = vsub.f32 1.0, %v548
      %v550 = vmul.f32 %v547, %v549
      %v551 = vadd.f32 %v547, %v550
      %vm552 = vweird.f32 %v531
      %vm553 = vweird.f32 %v547
      %vm554 = vmor %vm552, %vm553
      %v555 = vsel %vm554, %v547, %v551
      %v556 = vand.u32 2147483647, %v531
      %vm557 = vcmp.eq.f32.partialorder %v556, 8.507059e+37
      %v558 = vand.u32 %v531, 2147483648
      %v559 = vor.u32 1.1754944e-38, %v558
      %v560 = vsel %vm557, %v559, %v555
      %v561 = vmul.f32 1.0, %v560
      %v562 = vmul.f32 %v502, %v546
      %v563 = vmul.f32 %v522, %v561
      %v564 = vld [vmem:[%s3] sm:$0xff]
      %v565 = vld [vmem:[%s3 + $0x8] sm:$0xf]
      %v566 = vld [vmem:[%s4] sm:$0xff]
      %v567 = vld [vmem:[%s4 + $0x8] sm:$0xf]
      %569 = vset.pattern.permute.xlu0 0
      %570 = vperm.xlu0 %569, %v566
      %v571 = vpop.permute.xlu0 %570
      %574 = vset.pattern.permute.xlu0 0
      %575 = vperm.xlu0 %574, %v567
      %v576 = vpop.permute.xlu0 %575
      %v579 = vsel %vm480, %v564, 0
      %v582 = vsel %vm480, %v565, 0
      %584 = vmatpush.msra.mxu0 0.0
      %585 = vmatpush.msra.mxu0 0.0
      %586 = vmatpush.msra.mxu0 0.0
      %587 = vmatpush.msra.mxu0 0.0
      %588 = vmatpush.msra.mxu0 0.0
      %589 = vmatpush.msra.mxu0 0.0
      %590 = vmatpush.msra.mxu0 0.0
      %591 = vmatpush.msra.mxu0 0.0
      %592 = vmatpush.msra.mxu0 0.0
      %593 = vmatpush.msra.mxu0 0.0
      %594 = vmatpush.msra.mxu0 0.0
      %595 = vmatpush.msra.mxu0 0.0
      %596 = vmatpush.msra.mxu0 0.0
      %597 = vmatpush.msra.mxu0 0.0
      %598 = vmatpush.msra.mxu0 %v471
      %599 = vmatpush.msra.mxu0 %v469
      %600 = vmatmul.f32.gmra.mxu0 %v579
      %v601 = vpop.f32.mrf.mxu0
      %v602 = vadd.f32 %v571, %v601
      %603 = vmatmul.f32.gmra.mxu0 %v582
      %v604 = vpop.f32.mrf.mxu0
      %v605 = vadd.f32 %v576, %v604
      %606 = vdwg.mxu0
      %607 = vmatpush.msra.mxu0 0.0
      %608 = vmatpush.msra.mxu0 0.0
      %609 = vmatpush.msra.mxu0 0.0
      %610 = vmatpush.msra.mxu0 0.0
      %611 = vmatpush.msra.mxu0 0.0
      %612 = vmatpush.msra.mxu0 0.0
      %613 = vmatpush.msra.mxu0 0.0
      %614 = vmatpush.msra.mxu0 0.0
      %615 = vmatpush.msra.mxu0 0.0
      %616 = vmatpush.msra.mxu0 0.0
      %617 = vmatpush.msra.mxu0 0.0
      %618 = vmatpush.msra.mxu0 0.0
      %619 = vmatpush.msra.mxu0 0.0
      %620 = vmatpush.msra.mxu0 0.0
      %621 = vmatpush.msra.mxu0 %v472
      %622 = vmatpush.msra.mxu0 %v470
      %623 = vmatmul.f32.gmra.mxu0 %v579
      %v624 = vpop.f32.mrf.mxu0
      %v625 = vadd.f32 %v571, %v624
      %626 = vmatmul.f32.gmra.mxu0 %v582
      %v627 = vpop.f32.mrf.mxu0
      %v628 = vadd.f32 %v576, %v627
      %629 = vdwg.mxu0
      %v630 = vsub.f32 0.0, %v602
      %v631 = vsub.f32 0.0, %v625
      %v632 = vsub.f32 0.0, %v605
      %v633 = vsub.f32 0.0, %v628
      %v634 = vmul.f32 %v630, 1.442695
      %v635 = vpow.pop %v634
      %v636 = vmul.f32 %v631, 1.442695
      %v637 = vpow.pop %v636
      %v638 = vmul.f32 %v632, 1.442695
      %v639 = vpow.pop %v638
      %v640 = vmul.f32 %v633, 1.442695
      %v641 = vpow.pop %v640
      %v642 = vadd.f32 %v635, 1.0
      %v643 = vadd.f32 %v637, 1.0
      %v644 = vadd.f32 %v639, 1.0
      %v645 = vadd.f32 %v641, 1.0
      %v646 = vrcp.pop %v642
      %v647 = vmul.f32 %v642, %v646
      %v648 = vsub.f32 1.0, %v647
      %v649 = vmul.f32 %v646, %v648
      %v650 = vadd.f32 %v646, %v649
      %vm651 = vweird.f32 %v642
      %vm652 = vweird.f32 %v646
      %vm653 = vmor %vm651, %vm652
      %v654 = vsel %vm653, %v646, %v650
      %v655 = vand.u32 2147483647, %v642
      %vm656 = vcmp.eq.f32.partialorder %v655, 8.507059e+37
      %v657 = vand.u32 %v642, 2147483648
      %v658 = vor.u32 1.1754944e-38, %v657
      %v659 = vsel %vm656, %v658, %v654
      %v660 = vmul.f32 1.0, %v659
      %v661 = vrcp.pop %v643
      %v662 = vmul.f32 %v643, %v661
      %v663 = vsub.f32 1.0, %v662
      %v664 = vmul.f32 %v661, %v663
      %v665 = vadd.f32 %v661, %v664
      %vm666 = vweird.f32 %v643
      %vm667 = vweird.f32 %v661
      %vm668 = vmor %vm666, %vm667
      %v669 = vsel %vm668, %v661, %v665
      %v670 = vand.u32 2147483647, %v643
      %vm671 = vcmp.eq.f32.partialorder %v670, 8.507059e+37
      %v672 = vand.u32 %v643, 2147483648
      %v673 = vor.u32 1.1754944e-38, %v672
      %v674 = vsel %vm671, %v673, %v669
      %v675 = vmul.f32 1.0, %v674
      %v676 = vrcp.pop %v644
      %v677 = vmul.f32 %v644, %v676
      %v678 = vsub.f32 1.0, %v677
      %v679 = vmul.f32 %v676, %v678
      %v680 = vadd.f32 %v676, %v679
      %vm681 = vweird.f32 %v644
      %vm682 = vweird.f32 %v676
      %vm683 = vmor %vm681, %vm682
      %v684 = vsel %vm683, %v676, %v680
      %v685 = vand.u32 2147483647, %v644
      %vm686 = vcmp.eq.f32.partialorder %v685, 8.507059e+37
      %v687 = vand.u32 %v644, 2147483648
      %v688 = vor.u32 1.1754944e-38, %v687
      %v689 = vsel %vm686, %v688, %v684
      %v690 = vmul.f32 1.0, %v689
      %v691 = vrcp.pop %v645
      %v692 = vmul.f32 %v645, %v691
      %v693 = vsub.f32 1.0, %v692
      %v694 = vmul.f32 %v691, %v693
      %v695 = vadd.f32 %v691, %v694
      %vm696 = vweird.f32 %v645
      %vm697 = vweird.f32 %v691
      %vm698 = vmor %vm696, %vm697
      %v699 = vsel %vm698, %v691, %v695
      %v700 = vand.u32 2147483647, %v645
      %vm701 = vcmp.eq.f32.partialorder %v700, 8.507059e+37
      %v702 = vand.u32 %v645, 2147483648
      %v703 = vor.u32 1.1754944e-38, %v702
      %v704 = vsel %vm701, %v703, %v699
      %v705 = vmul.f32 1.0, %v704
      %v706 = vmul.f32 %v602, %v660
      %v707 = vmul.f32 %v625, %v675
      %v708 = vmul.f32 %v605, %v690
      %v709 = vmul.f32 %v628, %v705
      %v710 = vpack.c.bf16 %v707, %v706
      %v711 = vpack.c.bf16 %v709, %v708
      %712 = vst [vmem:[%s437] sm:$0xff] %v710
      %713 = vst [vmem:[%s437 + $0x8] sm:$0x33] %v711
      %v714 = vld [vmem:[%s6] sm:$0xf]
      %v715 = vld [vmem:[%s5] sm:$0xf]
      %717 = vset.pattern.permute.xlu0 0
      %718 = vperm.xlu0 %717, %v714
      %v719 = vpop.permute.xlu0 %718
      %vm721 = vcmask 31744
      %v723 = vsel %vm721, %v715, 0
      %vm725 = vcmask 1043456
      %v727 = vsel %vm725, %v562, 0
      %v730 = vsel %vm725, %v563, 0
      %732 = vmatpush.msra.mxu0 0.0
      %733 = vmatpush.msra.mxu0 0.0
      %734 = vmatpush.msra.mxu0 0.0
      %735 = vmatpush.msra.mxu0 0.0
      %736 = vmatpush.msra.mxu0 0.0
      %737 = vmatpush.msra.mxu0 0.0
      %738 = vmatpush.msra.mxu0 0.0
      %739 = vmatpush.msra.mxu0 0.0
      %740 = vmatpush.msra.mxu0 0.0
      %741 = vmatpush.msra.mxu0 0.0
      %742 = vmatpush.msra.mxu0 0.0
      %743 = vmatpush.msra.mxu0 0.0
      %744 = vmatpush.msra.mxu0 0.0
      %745 = vmatpush.msra.mxu0 0.0
      %746 = vmatpush.msra.mxu0 0.0
      %747 = vmatpush.msra.mxu0 %v727
      %748 = vmatmul.f32.gmra.mxu0 %v723
      %v749 = vpop.f32.mrf.mxu0
      %v750 = vadd.f32 %v719, %v749
      %751 = vdwg.mxu0
      %752 = vmatpush.msra.mxu0 0.0
      %753 = vmatpush.msra.mxu0 0.0
      %754 = vmatpush.msra.mxu0 0.0
      %755 = vmatpush.msra.mxu0 0.0
      %756 = vmatpush.msra.mxu0 0.0
      %757 = vmatpush.msra.mxu0 0.0
      %758 = vmatpush.msra.mxu0 0.0
      %759 = vmatpush.msra.mxu0 0.0
      %760 = vmatpush.msra.mxu0 0.0
      %761 = vmatpush.msra.mxu0 0.0
      %762 = vmatpush.msra.mxu0 0.0
      %763 = vmatpush.msra.mxu0 0.0
      %764 = vmatpush.msra.mxu0 0.0
      %765 = vmatpush.msra.mxu0 0.0
      %766 = vmatpush.msra.mxu0 0.0
      %767 = vmatpush.msra.mxu0 %v730
      %768 = vmatmul.f32.gmra.mxu0 %v723
      %v769 = vpop.f32.mrf.mxu0
      %v770 = vadd.f32 %v719, %v769
      %771 = vdwg.mxu0
      %v772 = vmul.f32 %v750, 0.5
      %v773 = vmul.f32 %v770, 0.5
      %v774 = vmul.f32 %v750, 0.70710677
      %v775 = vmul.f32 %v770, 0.70710677
      %v776 = vmul.f32 %v774, %v774
      %v777 = vmin.f32 16.0, %v776
      %v778 = vmul.f32 %v777, 2.1237322e-06
      %v779 = vadd.f32 %v778, 0.00028619796
      %v780 = vmul.f32 %v777, %v779
      %v781 = vadd.f32 %v780, 0.0036580483
      %v782 = vmul.f32 %v777, %v781
      %v783 = vadd.f32 %v782, 0.05243302
      %v784 = vmul.f32 %v777, %v783
      %v785 = vadd.f32 %v784, 0.18741608
      %v786 = vmul.f32 %v777, %v785
      %v787 = vadd.f32 %v786, 1.1283791
      %v788 = vmul.f32 %v774, %v787
      %v789 = vmul.f32 %v777, 3.8918573e-05
      %v790 = vadd.f32 %v789, 0.001143296
      %v791 = vmul.f32 %v777, %v790
      %v792 = vadd.f32 %v791, 0.014752088
      %v793 = vmul.f32 %v777, %v792
      %v794 = vadd.f32 %v793, 0.112945676
      %v795 = vmul.f32 %v777, %v794
      %v796 = vadd.f32 %v795, 0.4994258
      %v797 = vmul.f32 %v777, %v796
      %v798 = vadd.f32 %v797, 1.0
      %v799 = vrcp.pop %v798
      %v800 = vmul.f32 %v798, %v799
      %v801 = vsub.f32 1.0, %v800
      %v802 = vmul.f32 %v799, %v801
      %v803 = vadd.f32 %v799, %v802
      %vm804 = vweird.f32 %v798
      %vm805 = vweird.f32 %v799
      %vm806 = vmor %vm804, %vm805
      %v807 = vsel %vm806, %v799, %v803
      %v808 = vand.u32 2147483647, %v798
      %vm809 = vcmp.eq.f32.partialorder %v808, 8.507059e+37
      %v810 = vand.u32 %v798, 2147483648
      %v811 = vor.u32 1.1754944e-38, %v810
      %v812 = vsel %vm809, %v811, %v807
      %v813 = vmul.f32 %v788, %v812
      %v814 = vmin.f32 %v813, 1.0
      %v815 = vmax.f32 %v814, -1.0
      %v816 = vmul.f32 %v775, %v775
      %v817 = vmin.f32 16.0, %v816
      %v818 = vmul.f32 %v817, 2.1237322e-06
      %v819 = vadd.f32 %v818, 0.00028619796
      %v820 = vmul.f32 %v817, %v819
      %v821 = vadd.f32 %v820, 0.0036580483
      %v822 = vmul.f32 %v817, %v821
      %v823 = vadd.f32 %v822, 0.05243302
      %v824 = vmul.f32 %v817, %v823
      %v825 = vadd.f32 %v824, 0.18741608
      %v826 = vmul.f32 %v817, %v825
      %v827 = vadd.f32 %v826, 1.1283791
      %v828 = vmul.f32 %v775, %v827
      %v829 = vmul.f32 %v817, 3.8918573e-05
      %v830 = vadd.f32 %v829, 0.001143296
      %v831 = vmul.f32 %v817, %v830
      %v832 = vadd.f32 %v831, 0.014752088
      %v833 = vmul.f32 %v817, %v832
      %v834 = vadd.f32 %v833, 0.112945676
      %v835 = vmul.f32 %v817, %v834
      %v836 = vadd.f32 %v835, 0.4994258
      %v837 = vmul.f32 %v817, %v836
      %v838 = vadd.f32 %v837, 1.0
      %v839 = vrcp.pop %v838
      %v840 = vmul.f32 %v838, %v839
      %v841 = vsub.f32 1.0, %v840
      %v842 = vmul.f32 %v839, %v841
      %v843 = vadd.f32 %v839, %v842
      %vm844 = vweird.f32 %v838
      %vm845 = vweird.f32 %v839
      %vm846 = vmor %vm844, %vm845
      %v847 = vsel %vm846, %v839, %v843
      %v848 = vand.u32 2147483647, %v838
      %vm849 = vcmp.eq.f32.partialorder %v848, 8.507059e+37
      %v850 = vand.u32 %v838, 2147483648
      %v851 = vor.u32 1.1754944e-38, %v850
      %v852 = vsel %vm849, %v851, %v847
      %v853 = vmul.f32 %v828, %v852
      %v854 = vmin.f32 %v853, 1.0
      %v855 = vmax.f32 %v854, -1.0
      %v856 = vadd.f32 %v815, 1.0
      %v857 = vadd.f32 %v855, 1.0
      %v858 = vmul.f32 %v772, %v856
      %v859 = vmul.f32 %v773, %v857
      %v860 = vand.u32 2147483647, %v858
      %v861 = vand.u32 2147483647, %v859
      %s862 = scalar_lea.vmem %s5, 4
      %v863 = vld [vmem:[%s862] sm:$0xf]
      %864 = vset.pattern.permute.xlu0 1
      %865 = vperm.xlu0 %864, %v714
      %v866 = vpop.permute.xlu0 %865
      %v869 = vsel %vm721, %v863, 0
      %v872 = vsel %vm725, %v860, 0
      %v875 = vsel %vm725, %v861, 0
      %877 = vmatpush.msra.mxu0 0.0
      %878 = vmatpush.msra.mxu0 0.0
      %879 = vmatpush.msra.mxu0 0.0
      %880 = vmatpush.msra.mxu0 0.0
      %881 = vmatpush.msra.mxu0 0.0
      %882 = vmatpush.msra.mxu0 0.0
      %883 = vmatpush.msra.mxu0 0.0
      %884 = vmatpush.msra.mxu0 0.0
      %885 = vmatpush.msra.mxu0 0.0
      %886 = vmatpush.msra.mxu0 0.0
      %887 = vmatpush.msra.mxu0 0.0
      %888 = vmatpush.msra.mxu0 0.0
      %889 = vmatpush.msra.mxu0 0.0
      %890 = vmatpush.msra.mxu0 0.0
      %891 = vmatpush.msra.mxu0 0.0
      %892 = vmatpush.msra.mxu0 %v872
      %893 = vmatmul.f32.gmra.mxu0 %v869
      %v894 = vpop.f32.mrf.mxu0
      %v895 = vadd.f32 %v866, %v894
      %896 = vdwg.mxu0
      %897 = vmatpush.msra.mxu0 0.0
      %898 = vmatpush.msra.mxu0 0.0
      %899 = vmatpush.msra.mxu0 0.0
      %900 = vmatpush.msra.mxu0 0.0
      %901 = vmatpush.msra.mxu0 0.0
      %902 = vmatpush.msra.mxu0 0.0
      %903 = vmatpush.msra.mxu0 0.0
      %904 = vmatpush.msra.mxu0 0.0
      %905 = vmatpush.msra.mxu0 0.0
      %906 = vmatpush.msra.mxu0 0.0
      %907 = vmatpush.msra.mxu0 0.0
      %908 = vmatpush.msra.mxu0 0.0
      %909 = vmatpush.msra.mxu0 0.0
      %910 = vmatpush.msra.mxu0 0.0
      %911 = vmatpush.msra.mxu0 0.0
      %912 = vmatpush.msra.mxu0 %v875
      %913 = vmatmul.f32.gmra.mxu0 %v869
      %v914 = vpop.f32.mrf.mxu0
      %v915 = vadd.f32 %v866, %v914
      %916 = vdwg.mxu0
      %v917 = vpack.c.bf16 %v915, %v895
      %v919 = vrot.slane %v917, 2
      %vm920 = vcmask 1041408
      %v923 = vsel %vm920, %v917, %v919
      %925 = vst [vmem:[%s447] sm:$0xf] %v923
      %s926 = scalar_lea.vmem %s5, 8
      %v927 = vld [vmem:[%s926] sm:$0xf]
      %928 = vset.pattern.permute.xlu0 2
      %929 = vperm.xlu0 %928, %v714
      %v930 = vpop.permute.xlu0 %929
      %v933 = vsel %vm721, %v927, 0
      %935 = vmatpush.msra.mxu0 0.0
      %936 = vmatpush.msra.mxu0 0.0
      %937 = vmatpush.msra.mxu0 0.0
      %938 = vmatpush.msra.mxu0 0.0
      %939 = vmatpush.msra.mxu0 0.0
      %940 = vmatpush.msra.mxu0 0.0
      %941 = vmatpush.msra.mxu0 0.0
      %942 = vmatpush.msra.mxu0 0.0
      %943 = vmatpush.msra.mxu0 0.0
      %944 = vmatpush.msra.mxu0 0.0
      %945 = vmatpush.msra.mxu0 0.0
      %946 = vmatpush.msra.mxu0 0.0
      %947 = vmatpush.msra.mxu0 0.0
      %948 = vmatpush.msra.mxu0 0.0
      %949 = vmatpush.msra.mxu0 0.0
      %950 = vmatpush.msra.mxu0 %v872
      %951 = vmatmul.f32.gmra.mxu0 %v933
      %v952 = vpop.f32.mrf.mxu0
      %v953 = vadd.f32 %v930, %v952
      %954 = vdwg.mxu0
      %955 = vmatpush.msra.mxu0 0.0
      %956 = vmatpush.msra.mxu0 0.0
      %957 = vmatpush.msra.mxu0 0.0
      %958 = vmatpush.msra.mxu0 0.0
      %959 = vmatpush.msra.mxu0 0.0
      %960 = vmatpush.msra.mxu0 0.0
      %961 = vmatpush.msra.mxu0 0.0
      %962 = vmatpush.msra.mxu0 0.0
      %963 = vmatpush.msra.mxu0 0.0
      %964 = vmatpush.msra.mxu0 0.0
      %965 = vmatpush.msra.mxu0 0.0
      %966 = vmatpush.msra.mxu0 0.0
      %967 = vmatpush.msra.mxu0 0.0
      %968 = vmatpush.msra.mxu0 0.0
      %969 = vmatpush.msra.mxu0 0.0
      %970 = vmatpush.msra.mxu0 %v875
      %971 = vmatmul.f32.gmra.mxu0 %v933
      %v972 = vpop.f32.mrf.mxu0
      %v973 = vadd.f32 %v930, %v972
      %974 = vdwg.mxu0
      %v975 = vpack.c.bf16 %v973, %v953
      %v977 = vrot.slane %v975, 2
      %v980 = vsel %vm920, %v975, %v977
      %982 = vst [vmem:[%s457] sm:$0xf] %v980
      %983 = vset.pattern.permute.xlu0 3
      %984 = vperm.xlu0 %983, %v714
      %v985 = vpop.permute.xlu0 %984
      %v987 = vmul.f32 %v985, %v858
      %v988 = vmul.f32 %v985, %v859
      %v989 = vadd.f32 %v562, %v987
      %v990 = vadd.f32 %v563, %v988
      %991 = vset.pattern.permute.xlu0 4
      %992 = vperm.xlu0 %991, %v714
      %v993 = vpop.permute.xlu0 %992
      %v995 = vadd.f32 %v989, %v993
      %v996 = vadd.f32 %v990, %v993
      %997 = vset.pattern.permute.xlu0 5
      %998 = vperm.xlu0 %997, %v714
      %v999 = vpop.permute.xlu0 %998
      %v1001 = vmul.f32 %v999, %v860
      %v1002 = vmul.f32 %v999, %v861
      %v1003 = vadd.f32 %v995, %v1001
      %v1004 = vadd.f32 %v996, %v1002
      %v1005 = vpack.c.bf16 %v1004, %v1003
      %v1007 = vrot.slane %v1005, 2
      %v1010 = vsel %vm920, %v1005, %v1007
      %1012 = vst [vmem:[%s467] sm:$0xf] %v1010
      %s1013 = smul.u32 2, %s27
      %p1014 = scmp.lt.s32.totalorder %s26, 1
      %s1015 = scalar_select %p1014, %s26, 1
      %p1016 = scmp.lt.s32.totalorder %s1013, 1
      %s1017 = scalar_select %p1016, %s1013, 1
      %s1018 = smul.addr %s1015, 4
      %s1019 = sadd.s32 %s1017, %s1018
      %s1020 = smul.addr %s1019, 4
      %s1021 = scalar_lea.vmem %s7, %s1020
      %s1022 = smul.u32 2, %s27
      %p1023 = scmp.lt.s32.totalorder %s26, 1
      %s1024 = scalar_select %p1023, %s26, 1
      %p1025 = scmp.lt.s32.totalorder %s1022, 1
      %s1026 = scalar_select %p1025, %s1022, 1
      %s1027 = smul.addr %s1024, 2
      %s1028 = sadd.s32 %s1026, %s1027
      %s1029 = smul.addr %s1028, 2
      %s1030 = scalar_lea.vmem %s8, %s1029
      %s1031 = smul.u32 2, %s27
      %p1032 = scmp.lt.s32.totalorder %s26, 1
      %s1033 = scalar_select %p1032, %s26, 1
      %p1034 = scmp.lt.s32.totalorder %s1031, 1
      %s1035 = scalar_select %p1034, %s1031, 1
      %s1036 = smul.addr %s1033, 2
      %s1037 = sadd.s32 %s1035, %s1036
      %s1038 = smul.addr %s1037, 2
      %s1039 = scalar_lea.vmem %s9, %s1038
      %s1040 = smul.u32 2, %s27
      %p1041 = scmp.lt.s32.totalorder %s26, 1
      %s1042 = scalar_select %p1041, %s26, 1
      %p1043 = scmp.lt.s32.totalorder %s1040, 1
      %s1044 = scalar_select %p1043, %s1040, 1
      %s1045 = smul.addr %s1042, 2
      %s1046 = sadd.s32 %s1044, %s1045
      %s1047 = smul.addr %s1046, 2
      %s1048 = scalar_lea.vmem %s10, %s1047
      // Predicated region
      $region49: #{ddf_forward.3} parent=47 // pred_check
        %p1049 = pneg %p208
      $region50: #{ddf_forward.3} parent=47 // pred_check_branch
        %1051 = sbr.rel (%p1049) target = $region52
      $region51: #{ddf_forward.3} parent=47 // pred_region
        %s1052 = smul.u32 2, %s27
      $region52: #{ddf_forward.3} parent=47 // pred_fallthru
        _
      // Predicated region
      $region53: #{ddf_forward.3} parent=47 // pred_check
        %p1053 = pneg %p236
      $region54: #{ddf_forward.3} parent=47 // pred_check_branch
        %1055 = sbr.rel (%p1053) target = $region56
      $region55: #{ddf_forward.3} parent=47 // pred_region
        %s1056 = smul.u32 2, %s27
      $region56: #{ddf_forward.3} parent=47 // pred_fallthru
        _
      // Predicated region
      $region57: #{ddf_forward.3} parent=47 // pred_check
        %p1057 = pneg %p264
      $region58: #{ddf_forward.3} parent=47 // pred_check_branch
        %1059 = sbr.rel (%p1057) target = $region60
      $region59: #{ddf_forward.3} parent=47 // pred_region
        %s1060 = smul.u32 2, %s27
      $region60: #{ddf_forward.3} parent=47 // pred_fallthru
        _
      // Predicated region
      $region61: #{ddf_forward.3} parent=47 // pred_check
        %p1061 = pneg %p292
      $region62: #{ddf_forward.3} parent=47 // pred_check_branch
        %1063 = sbr.rel (%p1061) target = $region64
      $region63: #{ddf_forward.3} parent=47 // pred_region
        %s1064 = smul.u32 2, %s27
      $region64: #{ddf_forward.3} parent=47 // pred_fallthru
        _
    $region48: #{ddf_forward.3} parent=5 // pred_fallthru
      _
    %p1065 = scmp.le.s32.totalorder 2, %s17
    // Predicated region
    $region65: #{ddf_forward.3} parent=5 // pred_check
      %p1066 = pneg %p1065
    $region66: #{ddf_forward.3} parent=5 // pred_check_branch
      %1068 = sbr.rel (%p1066) target = $region68
    $region67: #{ddf_forward.3} parent=5 // pred_region
      %s1069 = ssub.s32 %s17, 2
      // Predicated region
      $region69: #{ddf_forward.3} parent=67 // pred_check
        %p1070 = pneg %p214
      $region70: #{ddf_forward.3} parent=67 // pred_check_branch
        %1072 = sbr.rel (%p1070) target = $region72
      $region71: #{ddf_forward.3} parent=67 // pred_region
        %s1073 = smul.u32 2, %s29
        %p1074 = scmp.lt.s32.totalorder %s28, 1
        %s1075 = scalar_select %p1074, %s28, 1
        %p1076 = scmp.lt.s32.totalorder %s1073, 1
        %s1077 = scalar_select %p1076, %s1073, 1
        %s1078 = smul.addr %s1075, 4
        %s1079 = sadd.s32 %s1077, %s1078
        %s1080 = smul.addr %s1079, 4
        %s1081 = scalar_lea.vmem %s7, %s1080
      $region72: #{ddf_forward.3} parent=67 // pred_fallthru
        _
      // Predicated region
      $region73: #{ddf_forward.3} parent=67 // pred_check
        %p1082 = pneg %p242
      $region74: #{ddf_forward.3} parent=67 // pred_check_branch
        %1084 = sbr.rel (%p1082) target = $region76
      $region75: #{ddf_forward.3} parent=67 // pred_region
        %s1085 = smul.u32 2, %s29
        %p1086 = scmp.lt.s32.totalorder %s28, 1
        %s1087 = scalar_select %p1086, %s28, 1
        %p1088 = scmp.lt.s32.totalorder %s1085, 1
        %s1089 = scalar_select %p1088, %s1085, 1
        %s1090 = smul.addr %s1087, 2
        %s1091 = sadd.s32 %s1089, %s1090
        %s1092 = smul.addr %s1091, 2
        %s1093 = scalar_lea.vmem %s8, %s1092
      $region76: #{ddf_forward.3} parent=67 // pred_fallthru
        _
      // Predicated region
      $region77: #{ddf_forward.3} parent=67 // pred_check
        %p1094 = pneg %p270
      $region78: #{ddf_forward.3} parent=67 // pred_check_branch
        %1096 = sbr.rel (%p1094) target = $region80
      $region79: #{ddf_forward.3} parent=67 // pred_region
        %s1097 = smul.u32 2, %s29
        %p1098 = scmp.lt.s32.totalorder %s28, 1
        %s1099 = scalar_select %p1098, %s28, 1
        %p1100 = scmp.lt.s32.totalorder %s1097, 1
        %s1101 = scalar_select %p1100, %s1097, 1
        %s1102 = smul.addr %s1099, 2
        %s1103 = sadd.s32 %s1101, %s1102
        %s1104 = smul.addr %s1103, 2
        %s1105 = scalar_lea.vmem %s9, %s1104
      $region80: #{ddf_forward.3} parent=67 // pred_fallthru
        _
      // Predicated region
      $region81: #{ddf_forward.3} parent=67 // pred_check
        %p1106 = pneg %p298
      $region82: #{ddf_forward.3} parent=67 // pred_check_branch
        %1108 = sbr.rel (%p1106) target = $region84
      $region83: #{ddf_forward.3} parent=67 // pred_region
        %s1109 = smul.u32 2, %s29
        %p1110 = scmp.lt.s32.totalorder %s28, 1
        %s1111 = scalar_select %p1110, %s28, 1
        %p1112 = scmp.lt.s32.totalorder %s1109, 1
        %s1113 = scalar_select %p1112, %s1109, 1
        %s1114 = smul.addr %s1111, 2
        %s1115 = sadd.s32 %s1113, %s1114
        %s1116 = smul.addr %s1115, 2
        %s1117 = scalar_lea.vmem %s10, %s1116
      $region84: #{ddf_forward.3} parent=67 // pred_fallthru
        _
    $region68: #{ddf_forward.3} parent=5 // pred_fallthru
      _
  $region6: #{ddf_forward.3} parent=0 // loop_footer
    %s21 = sadd.s32 1, %s17
  $region7: #{ddf_forward.3} parent=0 // loop_footer_branch
    %16 = sbr.rel target = $region3
  $region8: #{ddf_forward.3} parent=0 // loop_exit
    _

// kernel: ddf_forward.4
$region0: #{ddf_forward.4}
  #allocation0 [shape = 'u32[]', space=smem, size = 0x4, offset = 0x4, fixed_abs, tag = 'smem constant byte address 0x4 - core index']
  #allocation1 [shape = 'u32[72,128]{1,0:T(1,128)}', space=vmem, size = 0x9000, scoped, tag = 'internal scratch']
  %s0 = inlined_call_operand.vmem [shape: bf16[8,256], index: 0, kind: input, shape index: {}]
  %s1 = inlined_call_operand.vmem [shape: bf16[8,256], index: 1, kind: input, shape index: {}]
  %s2 = inlined_call_operand.vmem [shape: bf16[8,256], index: 2, kind: input, shape index: {}]
  %s3 = inlined_call_operand.vmem [shape: f32[8,1], index: 3, kind: input, shape index: {}]
  %s4 = inlined_call_operand.vmem [shape: bf16[256,512], index: 4, kind: input, shape index: {}]
  %s5 = inlined_call_operand.hbm [shape: bf16[512,512], index: 5, kind: input, shape index: {}]
  %s6 = inlined_call_operand.vmem [shape: bf16[8,256], index: 6, kind: output, shape index: {}]
  %s7 = sld [smem:[#allocation0]]
  $region38: #{ddf_forward.4} parent=0
    _
  %s9 = ssub.s32 1, %s7
  %s10 = scalar_select 0, %s9, %s7
  $region1: #{ddf_forward.4} parent=0
    #allocation2 [shape = 'u8[524288]{0}', space=vmem, size = 0x80000, scoped, tag = 'input window, operand 5, single buffered']
    #allocation3 [shape = 's32[1]{0}', space=sflag, size = 0x4, scoped, tag = 'scoped memory for ddf_forward.4']
    %11 = vsyncpa [#allocation3], 0
    // Predicated region
    $region2: #{ddf_forward.4} parent=1 // pred_check
      _
    $region3: #{ddf_forward.4} parent=1 // pred_check_branch
      %13 = sbr.rel (0) target = $region5
    $region4: #{ddf_forward.4} parent=1 // pred_region
      _
    $region5: #{ddf_forward.4} parent=1 // pred_fallthru
      _
    // Predicated region
    $region6: #{ddf_forward.4} parent=1 // pred_check
      _
    $region7: #{ddf_forward.4} parent=1 // pred_check_branch
      %15 = sbr.rel (0) target = $region9
    $region8: #{ddf_forward.4} parent=1 // pred_region
      _
    $region9: #{ddf_forward.4} parent=1 // pred_fallthru
      _
    // Predicated region
    $region10: #{ddf_forward.4} parent=1 // pred_check
      _
    $region11: #{ddf_forward.4} parent=1 // pred_check_branch
      %17 = sbr.rel (0) target = $region13
    $region12: #{ddf_forward.4} parent=1 // pred_region
      _
    $region13: #{ddf_forward.4} parent=1 // pred_fallthru
      _
    // Predicated region
    $region14: #{ddf_forward.4} parent=1 // pred_check
      _
    $region15: #{ddf_forward.4} parent=1 // pred_check_branch
      %19 = sbr.rel (0) target = $region17
    $region16: #{ddf_forward.4} parent=1 // pred_region
      _
    $region17: #{ddf_forward.4} parent=1 // pred_fallthru
      _
    // Predicated region
    $region18: #{ddf_forward.4} parent=1 // pred_check
      _
    $region19: #{ddf_forward.4} parent=1 // pred_check_branch
      %21 = sbr.rel (0) target = $region21
    $region20: #{ddf_forward.4} parent=1 // pred_region
      _
    $region21: #{ddf_forward.4} parent=1 // pred_fallthru
      _
    // Predicated region
    $region22: #{ddf_forward.4} parent=1 // pred_check
      _
    $region23: #{ddf_forward.4} parent=1 // pred_check_branch
      %23 = sbr.rel (0) target = $region25
    $region24: #{ddf_forward.4} parent=1 // pred_region
      %25 = vsyncadd [#allocation3], 0
      %s26 = sshll.u32 %s5, 4
      %s27 = int_to_ptr.hbm [resolvable:$true] %s26
      %s28 = sshll.u32 [#allocation2], 4
      %s29 = int_to_ptr.vmem [resolvable:$true] %s28
      %34 = dma.hbm_to_vmem [thread:$0]  %s27, 16384, %s29, [#allocation3], 256, 256, 16
    $region25: #{ddf_forward.4} parent=1 // pred_fallthru
      _
    // Predicated region
    $region26: #{ddf_forward.4} parent=1 // pred_check
      _
    $region27: #{ddf_forward.4} parent=1 // pred_check_branch
      %36 = sbr.rel (0) target = $region29
    $region28: #{ddf_forward.4} parent=1 // pred_region
      %38 = dma.done [#allocation3], 16384
    $region29: #{ddf_forward.4} parent=1 // pred_fallthru
      _
    %v39 = vld [vmem:[%s0] sm:$0xff]
    %v40 = vunpack.c.l.bf16 %v39
    %v41 = vunpack.c.h.bf16 %v39
    %v42 = vld [vmem:[%s1] sm:$0xff]
    %v43 = vld [vmem:[%s4] sm:$0xff]
    %v44 = vld [vmem:[%s4 + $0x8] sm:$0xff]
    %v45 = vld [vmem:[%s4 + $0x10] sm:$0xff]
    %v46 = vld [vmem:[%s4 + $0x18] sm:$0xff]
    %v47 = vld [vmem:[%s4 + $0x20] sm:$0xff]
    %v48 = vld [vmem:[%s4 + $0x28] sm:$0xff]
    %v49 = vld [vmem:[%s4 + $0x30] sm:$0xff]
    %v50 = vld [vmem:[%s4 + $0x38] sm:$0xff]
    %v51 = vld [vmem:[%s4 + $0x40] sm:$0xff]
    %v52 = vld [vmem:[%s4 + $0x48] sm:$0xff]
    %v53 = vld [vmem:[%s4 + $0x50] sm:$0xff]
    %v54 = vld [vmem:[%s4 + $0x58] sm:$0xff]
    %v55 = vld [vmem:[%s4 + $0x60] sm:$0xff]
    %v56 = vld [vmem:[%s4 + $0x68] sm:$0xff]
    %v57 = vld [vmem:[%s4 + $0x70] sm:$0xff]
    %v58 = vld [vmem:[%s4 + $0x78] sm:$0xff]
    %v59 = vld [vmem:[%s4 + $0x80] sm:$0xff]
    %v60 = vld [vmem:[%s4 + $0x88] sm:$0xff]
    %v61 = vld [vmem:[%s4 + $0x90] sm:$0xff]
    %v62 = vld [vmem:[%s4 + $0x98] sm:$0xff]
    %v63 = vld [vmem:[%s4 + $0xa0] sm:$0xff]
    %v64 = vld [vmem:[%s4 + $0xa8] sm:$0xff]
    %v65 = vld [vmem:[%s4 + $0xb0] sm:$0xff]
    %v66 = vld [vmem:[%s4 + $0xb8] sm:$0xff]
    %v67 = vld [vmem:[%s4 + $0xc0] sm:$0xff]
    %v68 = vld [vmem:[%s4 + $0xc8] sm:$0xff]
    %v69 = vld [vmem:[%s4 + $0xd0] sm:$0xff]
    %v70 = vld [vmem:[%s4 + $0xd8] sm:$0xff]
    %v71 = vld [vmem:[%s4 + $0xe0] sm:$0xff]
    %v72 = vld [vmem:[%s4 + $0xe8] sm:$0xff]
    %v73 = vld [vmem:[%s4 + $0xf0] sm:$0xff]
    %v74 = vld [vmem:[%s4 + $0xf8] sm:$0xff]
    %v75 = vld [vmem:[%s4 + $0x100] sm:$0xff]
    %v76 = vld [vmem:[%s4 + $0x108] sm:$0xff]
    %v77 = vld [vmem:[%s4 + $0x110] sm:$0xff]
    %v78 = vld [vmem:[%s4 + $0x118] sm:$0xff]
    %v79 = vld [vmem:[%s4 + $0x120] sm:$0xff]
    %v80 = vld [vmem:[%s4 + $0x128] sm:$0xff]
    %v81 = vld [vmem:[%s4 + $0x130] sm:$0xff]
    %v82 = vld [vmem:[%s4 + $0x138] sm:$0xff]
    %v83 = vld [vmem:[%s4 + $0x140] sm:$0xff]
    %v84 = vld [vmem:[%s4 + $0x148] sm:$0xff]
    %v85 = vld [vmem:[%s4 + $0x150] sm:$0xff]
    %v86 = vld [vmem:[%s4 + $0x158] sm:$0xff]
    %v87 = vld [vmem:[%s4 + $0x160] sm:$0xff]
    %v88 = vld [vmem:[%s4 + $0x168] sm:$0xff]
    %v89 = vld [vmem:[%s4 + $0x170] sm:$0xff]
    %v90 = vld [vmem:[%s4 + $0x178] sm:$0xff]
    %v91 = vld [vmem:[%s4 + $0x180] sm:$0xff]
    %v92 = vld [vmem:[%s4 + $0x188] sm:$0xff]
    %v93 = vld [vmem:[%s4 + $0x190] sm:$0xff]
    %v94 = vld [vmem:[%s4 + $0x198] sm:$0xff]
    %v95 = vld [vmem:[%s4 + $0x1a0] sm:$0xff]
    %v96 = vld [vmem:[%s4 + $0x1a8] sm:$0xff]
    %v97 = vld [vmem:[%s4 + $0x1b0] sm:$0xff]
    %v98 = vld [vmem:[%s4 + $0x1b8] sm:$0xff]
    %v99 = vld [vmem:[%s4 + $0x1c0] sm:$0xff]
    %v100 = vld [vmem:[%s4 + $0x1c8] sm:$0xff]
    %v101 = vld [vmem:[%s4 + $0x1d0] sm:$0xff]
    %v102 = vld [vmem:[%s4 + $0x1d8] sm:$0xff]
    %v103 = vld [vmem:[%s4 + $0x1e0] sm:$0xff]
    %v104 = vld [vmem:[%s4 + $0x1e8] sm:$0xff]
    %v105 = vld [vmem:[%s4 + $0x1f0] sm:$0xff]
    %v106 = vld [vmem:[%s4 + $0x1f8] sm:$0xff]
    %v108 = vunpack.c.l.b16 %v42
    %v109 = vunpack.c.h.b16 %v42
    %v110 = vpack.c.b16 %v108, %v108
    %v111 = vpack.c.b16 %v109, %v109
    %v178 = vunpack.c.l.b16 %v43
    %v179 = vunpack.c.h.b16 %v43
    %v180 = vunpack.c.l.b16 %v44
    %v181 = vunpack.c.h.b16 %v44
    %v182 = vunpack.c.l.b16 %v45
    %v183 = vunpack.c.h.b16 %v45
    %v184 = vunpack.c.l.b16 %v46
    %v185 = vunpack.c.h.b16 %v46
    %v186 = vunpack.c.l.b16 %v47
    %v187 = vunpack.c.h.b16 %v47
    %v188 = vunpack.c.l.b16 %v48
    %v189 = vunpack.c.h.b16 %v48
    %v190 = vunpack.c.l.b16 %v49
    %v191 = vunpack.c.h.b16 %v49
    %v192 = vunpack.c.l.b16 %v50
    %v193 = vunpack.c.h.b16 %v50
    %v194 = vunpack.c.l.b16 %v51
    %v195 = vunpack.c.h.b16 %v51
    %v196 = vunpack.c.l.b16 %v52
    %v197 = vunpack.c.h.b16 %v52
    %v198 = vunpack.c.l.b16 %v53
    %v199 = vunpack.c.h.b16 %v53
    %v200 = vunpack.c.l.b16 %v54
    %v201 = vunpack.c.h.b16 %v54
    %v202 = vunpack.c.l.b16 %v55
    %v203 = vunpack.c.h.b16 %v55
    %v204 = vunpack.c.l.b16 %v56
    %v205 = vunpack.c.h.b16 %v56
    %v206 = vunpack.c.l.b16 %v57
    %v207 = vunpack.c.h.b16 %v57
    %v208 = vunpack.c.l.b16 %v58
    %v209 = vunpack.c.h.b16 %v58
    %v210 = vunpack.c.l.b16 %v59
    %v211 = vunpack.c.h.b16 %v59
    %v212 = vunpack.c.l.b16 %v60
    %v213 = vunpack.c.h.b16 %v60
    %v214 = vunpack.c.l.b16 %v61
    %v215 = vunpack.c.h.b16 %v61
    %v216 = vunpack.c.l.b16 %v62
    %v217 = vunpack.c.h.b16 %v62
    %v218 = vunpack.c.l.b16 %v63
    %v219 = vunpack.c.h.b16 %v63
    %v220 = vunpack.c.l.b16 %v64
    %v221 = vunpack.c.h.b16 %v64
    %v222 = vunpack.c.l.b16 %v65
    %v223 = vunpack.c.h.b16 %v65
    %v224 = vunpack.c.l.b16 %v66
    %v225 = vunpack.c.h.b16 %v66
    %v226 = vunpack.c.l.b16 %v67
    %v227 = vunpack.c.h.b16 %v67
    %v228 = vunpack.c.l.b16 %v68
    %v229 = vunpack.c.h.b16 %v68
    %v230 = vunpack.c.l.b16 %v69
    %v231 = vunpack.c.h.b16 %v69
    %v232 = vunpack.c.l.b16 %v70
    %v233 = vunpack.c.h.b16 %v70
    %v234 = vunpack.c.l.b16 %v71
    %v235 = vunpack.c.h.b16 %v71
    %v236 = vunpack.c.l.b16 %v72
    %v237 = vunpack.c.h.b16 %v72
    %v238 = vunpack.c.l.b16 %v73
    %v239 = vunpack.c.h.b16 %v73
    %v240 = vunpack.c.l.b16 %v74
    %v241 = vunpack.c.h.b16 %v74
    %v242 = vunpack.c.l.b16 %v75
    %v243 = vunpack.c.h.b16 %v75
    %v244 = vunpack.c.l.b16 %v76
    %v245 = vunpack.c.h.b16 %v76
    %v246 = vunpack.c.l.b16 %v77
    %v247 = vunpack.c.h.b16 %v77
    %v248 = vunpack.c.l.b16 %v78
    %v249 = vunpack.c.h.b16 %v78
    %v250 = vunpack.c.l.b16 %v79
    %v251 = vunpack.c.h.b16 %v79
    %v252 = vunpack.c.l.b16 %v80
    %v253 = vunpack.c.h.b16 %v80
    %v254 = vunpack.c.l.b16 %v81
    %v255 = vunpack.c.h.b16 %v81
    %v256 = vunpack.c.l.b16 %v82
    %v257 = vunpack.c.h.b16 %v82
    %v258 = vunpack.c.l.b16 %v83
    %v259 = vunpack.c.h.b16 %v83
    %v260 = vunpack.c.l.b16 %v84
    %v261 = vunpack.c.h.b16 %v84
    %v262 = vunpack.c.l.b16 %v85
    %v263 = vunpack.c.h.b16 %v85
    %v264 = vunpack.c.l.b16 %v86
    %v265 = vunpack.c.h.b16 %v86
    %v266 = vunpack.c.l.b16 %v87
    %v267 = vunpack.c.h.b16 %v87
    %v268 = vunpack.c.l.b16 %v88
    %v269 = vunpack.c.h.b16 %v88
    %v270 = vunpack.c.l.b16 %v89
    %v271 = vunpack.c.h.b16 %v89
    %v272 = vunpack.c.l.b16 %v90
    %v273 = vunpack.c.h.b16 %v90
    %v274 = vunpack.c.l.b16 %v91
    %v275 = vunpack.c.h.b16 %v91
    %v276 = vunpack.c.l.b16 %v92
    %v277 = vunpack.c.h.b16 %v92
    %v278 = vunpack.c.l.b16 %v93
    %v279 = vunpack.c.h.b16 %v93
    %v280 = vunpack.c.l.b16 %v94
    %v281 = vunpack.c.h.b16 %v94
    %v282 = vunpack.c.l.b16 %v95
    %v283 = vunpack.c.h.b16 %v95
    %v284 = vunpack.c.l.b16 %v96
    %v285 = vunpack.c.h.b16 %v96
    %v286 = vunpack.c.l.b16 %v97
    %v287 = vunpack.c.h.b16 %v97
    %v288 = vunpack.c.l.b16 %v98
    %v289 = vunpack.c.h.b16 %v98
    %v290 = vunpack.c.l.b16 %v99
    %v291 = vunpack.c.h.b16 %v99
    %v292 = vunpack.c.l.b16 %v100
    %v293 = vunpack.c.h.b16 %v100
    %v294 = vunpack.c.l.b16 %v101
    %v295 = vunpack.c.h.b16 %v101
    %v296 = vunpack.c.l.b16 %v102
    %v297 = vunpack.c.h.b16 %v102
    %v298 = vunpack.c.l.b16 %v103
    %v299 = vunpack.c.h.b16 %v103
    %v300 = vunpack.c.l.b16 %v104
    %v301 = vunpack.c.h.b16 %v104
    %v302 = vunpack.c.l.b16 %v105
    %v303 = vunpack.c.h.b16 %v105
    %v304 = vunpack.c.l.b16 %v106
    %v305 = vunpack.c.h.b16 %v106
    %v306 = vpack.c.b16 %v182, %v178
    %v307 = vpack.c.b16 %v183, %v179
    %v308 = vpack.c.b16 %v184, %v180
    %v309 = vpack.c.b16 %v185, %v181
    %v310 = vpack.c.b16 %v190, %v186
    %v311 = vpack.c.b16 %v191, %v187
    %v312 = vpack.c.b16 %v192, %v188
    %v313 = vpack.c.b16 %v193, %v189
    %v314 = vpack.c.b16 %v198, %v194
    %v315 = vpack.c.b16 %v199, %v195
    %v316 = vpack.c.b16 %v200, %v196
    %v317 = vpack.c.b16 %v201, %v197
    %v318 = vpack.c.b16 %v206, %v202
    %v319 = vpack.c.b16 %v207, %v203
    %v320 = vpack.c.b16 %v208, %v204
    %v321 = vpack.c.b16 %v209, %v205
    %v322 = vpack.c.b16 %v214, %v210
    %v323 = vpack.c.b16 %v215, %v211
    %v324 = vpack.c.b16 %v216, %v212
    %v325 = vpack.c.b16 %v217, %v213
    %v326 = vpack.c.b16 %v222, %v218
    %v327 = vpack.c.b16 %v223, %v219
    %v328 = vpack.c.b16 %v224, %v220
    %v329 = vpack.c.b16 %v225, %v221
    %v330 = vpack.c.b16 %v230, %v226
    %v331 = vpack.c.b16 %v231, %v227
    %v332 = vpack.c.b16 %v232, %v228
    %v333 = vpack.c.b16 %v233, %v229
    %v334 = vpack.c.b16 %v238, %v234
    %v335 = vpack.c.b16 %v239, %v235
    %v336 = vpack.c.b16 %v240, %v236
    %v337 = vpack.c.b16 %v241, %v237
    %v338 = vpack.c.b16 %v246, %v242
    %v339 = vpack.c.b16 %v247, %v243
    %v340 = vpack.c.b16 %v248, %v244
    %v341 = vpack.c.b16 %v249, %v245
    %v342 = vpack.c.b16 %v254, %v250
    %v343 = vpack.c.b16 %v255, %v251
    %v344 = vpack.c.b16 %v256, %v252
    %v345 = vpack.c.b16 %v257, %v253
    %v346 = vpack.c.b16 %v262, %v258
    %v347 = vpack.c.b16 %v263, %v259
    %v348 = vpack.c.b16 %v264, %v260
    %v349 = vpack.c.b16 %v265, %v261
    %v350 = vpack.c.b16 %v270, %v266
    %v351 = vpack.c.b16 %v271, %v267
    %v352 = vpack.c.b16 %v272, %v268
    %v353 = vpack.c.b16 %v273, %v269
    %v354 = vpack.c.b16 %v278, %v274
    %v355 = vpack.c.b16 %v279, %v275
    %v356 = vpack.c.b16 %v280, %v276
    %v357 = vpack.c.b16 %v281, %v277
    %v358 = vpack.c.b16 %v286, %v282
    %v359 = vpack.c.b16 %v287, %v283
    %v360 = vpack.c.b16 %v288, %v284
    %v361 = vpack.c.b16 %v289, %v285
    %v362 = vpack.c.b16 %v294, %v290
    %v363 = vpack.c.b16 %v295, %v291
    %v364 = vpack.c.b16 %v296, %v292
    %v365 = vpack.c.b16 %v297, %v293
    %v366 = vpack.c.b16 %v302, %v298
    %v367 = vpack.c.b16 %v303, %v299
    %v368 = vpack.c.b16 %v304, %v300
    %v369 = vpack.c.b16 %v305, %v301
    %434 = vmatpush.bf16.msra.mxu0 %v334
    %435 = vmatpush.bf16.msra.mxu0 %v330
    %436 = vmatpush.bf16.msra.mxu0 %v326
    %437 = vmatpush.bf16.msra.mxu0 %v322
    %438 = vmatpush.bf16.msra.mxu0 %v318
    %439 = vmatpush.bf16.msra.mxu0 %v314
    %440 = vmatpush.bf16.msra.mxu0 %v310
    %441 = vmatpush.bf16.msra.mxu0 %v306
    %442 = vmatmul.bf16.gmra.mxu0 %v110
    %v443 = vpop.f32.mrf.mxu0
    %v444 = vadd.f32 0.0, %v443
    %v445 = vpop.f32.mrf.mxu0
    %446 = vdwg.mxu0
    %447 = vmatpush.bf16.msra.mxu0 %v366
    %448 = vmatpush.bf16.msra.mxu0 %v362
    %449 = vmatpush.bf16.msra.mxu0 %v358
    %450 = vmatpush.bf16.msra.mxu0 %v354
    %451 = vmatpush.bf16.msra.mxu0 %v350
    %452 = vmatpush.bf16.msra.mxu0 %v346
    %453 = vmatpush.bf16.msra.mxu0 %v342
    %454 = vmatpush.bf16.msra.mxu0 %v338
    %455 = vmatmul.bf16.gmra.mxu0 %v111
    %v456 = vpop.f32.mrf.mxu0
    %v457 = vadd.f32 %v444, %v456
    %v458 = vpop.f32.mrf.mxu0
    %459 = vdwg.mxu0
    %460 = vmatpush.bf16.msra.mxu0 %v335
    %461 = vmatpush.bf16.msra.mxu0 %v331
    %462 = vmatpush.bf16.msra.mxu0 %v327
    %463 = vmatpush.bf16.msra.mxu0 %v323
    %464 = vmatpush.bf16.msra.mxu0 %v319
    %465 = vmatpush.bf16.msra.mxu0 %v315
    %466 = vmatpush.bf16.msra.mxu0 %v311
    %467 = vmatpush.bf16.msra.mxu0 %v307
    %468 = vmatmul.bf16.gmra.mxu0 %v110
    %v469 = vpop.f32.mrf.mxu0
    %v470 = vadd.f32 0.0, %v469
    %v471 = vpop.f32.mrf.mxu0
    %472 = vdwg.mxu0
    %473 = vmatpush.bf16.msra.mxu0 %v367
    %474 = vmatpush.bf16.msra.mxu0 %v363
    %475 = vmatpush.bf16.msra.mxu0 %v359
    %476 = vmatpush.bf16.msra.mxu0 %v355
    %477 = vmatpush.bf16.msra.mxu0 %v351
    %478 = vmatpush.bf16.msra.mxu0 %v347
    %479 = vmatpush.bf16.msra.mxu0 %v343
    %480 = vmatpush.bf16.msra.mxu0 %v339
    %481 = vmatmul.bf16.gmra.mxu0 %v111
    %v482 = vpop.f32.mrf.mxu0
    %v483 = vadd.f32 %v470, %v482
    %v484 = vpop.f32.mrf.mxu0
    %485 = vdwg.mxu0
    %486 = vmatpush.bf16.msra.mxu0 %v336
    %487 = vmatpush.bf16.msra.mxu0 %v332
    %488 = vmatpush.bf16.msra.mxu0 %v328
    %489 = vmatpush.bf16.msra.mxu0 %v324
    %490 = vmatpush.bf16.msra.mxu0 %v320
    %491 = vmatpush.bf16.msra.mxu0 %v316
    %492 = vmatpush.bf16.msra.mxu0 %v312
    %493 = vmatpush.bf16.msra.mxu0 %v308
    %494 = vmatmul.bf16.gmra.mxu0 %v110
    %v495 = vpop.f32.mrf.mxu0
    %v496 = vadd.f32 0.0, %v495
    %v497 = vpop.f32.mrf.mxu0
    %498 = vdwg.mxu0
    %499 = vmatpush.bf16.msra.mxu0 %v368
    %500 = vmatpush.bf16.msra.mxu0 %v364
    %501 = vmatpush.bf16.msra.mxu0 %v360
    %502 = vmatpush.bf16.msra.mxu0 %v356
    %503 = vmatpush.bf16.msra.mxu0 %v352
    %504 = vmatpush.bf16.msra.mxu0 %v348
    %505 = vmatpush.bf16.msra.mxu0 %v344
    %506 = vmatpush.bf16.msra.mxu0 %v340
    %507 = vmatmul.bf16.gmra.mxu0 %v111
    %v508 = vpop.f32.mrf.mxu0
    %v509 = vadd.f32 %v496, %v508
    %v510 = vpop.f32.mrf.mxu0
    %511 = vdwg.mxu0
    %512 = vmatpush.bf16.msra.mxu0 %v337
    %513 = vmatpush.bf16.msra.mxu0 %v333
    %514 = vmatpush.bf16.msra.mxu0 %v329
    %515 = vmatpush.bf16.msra.mxu0 %v325
    %516 = vmatpush.bf16.msra.mxu0 %v321
    %517 = vmatpush.bf16.msra.mxu0 %v317
    %518 = vmatpush.bf16.msra.mxu0 %v313
    %519 = vmatpush.bf16.msra.mxu0 %v309
    %520 = vmatmul.bf16.gmra.mxu0 %v110
    %v521 = vpop.f32.mrf.mxu0
    %v522 = vadd.f32 0.0, %v521
    %v523 = vpop.f32.mrf.mxu0
    %524 = vdwg.mxu0
    %525 = vmatpush.bf16.msra.mxu0 %v369
    %526 = vmatpush.bf16.msra.mxu0 %v365
    %527 = vmatpush.bf16.msra.mxu0 %v361
    %528 = vmatpush.bf16.msra.mxu0 %v357
    %529 = vmatpush.bf16.msra.mxu0 %v353
    %530 = vmatpush.bf16.msra.mxu0 %v349
    %531 = vmatpush.bf16.msra.mxu0 %v345
    %532 = vmatpush.bf16.msra.mxu0 %v341
    %533 = vmatmul.bf16.gmra.mxu0 %v111
    %v534 = vpop.f32.mrf.mxu0
    %v535 = vadd.f32 %v522, %v534
    %v536 = vpop.f32.mrf.mxu0
    %537 = vdwg.mxu0
    %v538 = vmul.f32 %v40, %v457
    %v539 = vmul.f32 %v41, %v483
    %v540 = vmul.f32 %v40, %v509
    %v541 = vmul.f32 %v41, %v535
    %v542 = vpack.c.bf16 %v538, %v538
    %v543 = vpack.c.bf16 %v539, %v539
    %v544 = vpack.c.bf16 %v540, %v540
    %v545 = vpack.c.bf16 %v541, %v541
    %v546 = vld [vmem:[#allocation2] sm:$0xff]
    %v547 = vld [vmem:[#allocation2 + $0x8] sm:$0xff]
    %v548 = vld [vmem:[#allocation2 + $0x10] sm:$0xff]
    %v549 = vld [vmem:[#allocation2 + $0x18] sm:$0xff]
    %v550 = vld [vmem:[#allocation2 + $0x20] sm:$0xff]
    %v551 = vld [vmem:[#allocation2 + $0x28] sm:$0xff]
    %v552 = vld [vmem:[#allocation2 + $0x30] sm:$0xff]
    %v553 = vld [vmem:[#allocation2 + $0x38] sm:$0xff]
    %v554 = vld [vmem:[#allocation2 + $0x40] sm:$0xff]
    %v555 = vld [vmem:[#allocation2 + $0x48] sm:$0xff]
    %v556 = vld [vmem:[#allocation2 + $0x50] sm:$0xff]
    %v557 = vld [vmem:[#allocation2 + $0x58] sm:$0xff]
    %v558 = vld [vmem:[#allocation2 + $0x60] sm:$0xff]
    %v559 = vld [vmem:[#allocation2 + $0x68] sm:$0xff]
    %v560 = vld [vmem:[#allocation2 + $0x70] sm:$0xff]
    %v561 = vld [vmem:[#allocation2 + $0x78] sm:$0xff]
    %v562 = vld [vmem:[#allocation2 + $0x80] sm:$0xff]
    %v563 = vld [vmem:[#allocation2 + $0x88] sm:$0xff]
    %v564 = vld [vmem:[#allocation2 + $0x90] sm:$0xff]
    %v565 = vld [vmem:[#allocation2 + $0x98] sm:$0xff]
    %v566 = vld [vmem:[#allocation2 + $0xa0] sm:$0xff]
    %v567 = vld [vmem:[#allocation2 + $0xa8] sm:$0xff]
    %v568 = vld [vmem:[#allocation2 + $0xb0] sm:$0xff]
    %v569 = vld [vmem:[#allocation2 + $0xb8] sm:$0xff]
    %v570 = vld [vmem:[#allocation2 + $0xc0] sm:$0xff]
    %v571 = vld [vmem:[#allocation2 + $0xc8] sm:$0xff]
    %v572 = vld [vmem:[#allocation2 + $0xd0] sm:$0xff]
    %v573 = vld [vmem:[#allocation2 + $0xd8] sm:$0xff]
    %v574 = vld [vmem:[#allocation2 + $0xe0] sm:$0xff]
    %v575 = vld [vmem:[#allocation2 + $0xe8] sm:$0xff]
    %v576 = vld [vmem:[#allocation2 + $0xf0] sm:$0xff]
    %v577 = vld [vmem:[#allocation2 + $0xf8] sm:$0xff]
    %v578 = vld [vmem:[#allocation2 + $0x100] sm:$0xff]
    %v579 = vld [vmem:[#allocation2 + $0x108] sm:$0xff]
    %v580 = vld [vmem:[#allocation2 + $0x110] sm:$0xff]
    %v581 = vld [vmem:[#allocation2 + $0x118] sm:$0xff]
    %v582 = vld [vmem:[#allocation2 + $0x120] sm:$0xff]
    %v583 = vld [vmem:[#allocation2 + $0x128] sm:$0xff]
    %v584 = vld [vmem:[#allocation2 + $0x130] sm:$0xff]
    %v585 = vld [vmem:[#allocation2 + $0x138] sm:$0xff]
    %v586 = vld [vmem:[#allocation2 + $0x140] sm:$0xff]
    %v587 = vld [vmem:[#allocation2 + $0x148] sm:$0xff]
    %v588 = vld [vmem:[#allocation2 + $0x150] sm:$0xff]
    %v589 = vld [vmem:[#allocation2 + $0x158] sm:$0xff]
    %v590 = vld [vmem:[#allocation2 + $0x160] sm:$0xff]
    %v591 = vld [vmem:[#allocation2 + $0x168] sm:$0xff]
    %v592 = vld [vmem:[#allocation2 + $0x170] sm:$0xff]
    %v593 = vld [vmem:[#allocation2 + $0x178] sm:$0xff]
    %v594 = vld [vmem:[#allocation2 + $0x180] sm:$0xff]
    %v595 = vld [vmem:[#allocation2 + $0x188] sm:$0xff]
    %v596 = vld [vmem:[#allocation2 + $0x190] sm:$0xff]
    %v597 = vld [vmem:[#allocation2 + $0x198] sm:$0xff]
    %v598 = vld [vmem:[#allocation2 + $0x1a0] sm:$0xff]
    %v599 = vld [vmem:[#allocation2 + $0x1a8] sm:$0xff]
    %v600 = vld [vmem:[#allocation2 + $0x1b0] sm:$0xff]
    %v601 = vld [vmem:[#allocation2 + $0x1b8] sm:$0xff]
    %v602 = vld [vmem:[#allocation2 + $0x1c0] sm:$0xff]
    %v603 = vld [vmem:[#allocation2 + $0x1c8] sm:$0xff]
    %v604 = vld [vmem:[#allocation2 + $0x1d0] sm:$0xff]
    %v605 = vld [vmem:[#allocation2 + $0x1d8] sm:$0xff]
    %v606 = vld [vmem:[#allocation2 + $0x1e0] sm:$0xff]
    %v607 = vld [vmem:[#allocation2 + $0x1e8] sm:$0xff]
    %v608 = vld [vmem:[#allocation2 + $0x1f0] sm:$0xff]
    %v609 = vld [vmem:[#allocation2 + $0x1f8] sm:$0xff]
    %v610 = vld [vmem:[#allocation2 + $0x200] sm:$0xff]
    %v611 = vld [vmem:[#allocation2 + $0x208] sm:$0xff]
    %v612 = vld [vmem:[#allocation2 + $0x210] sm:$0xff]
    %v613 = vld [vmem:[#allocation2 + $0x218] sm:$0xff]
    %v614 = vld [vmem:[#allocation2 + $0x220] sm:$0xff]
    %v615 = vld [vmem:[#allocation2 + $0x228] sm:$0xff]
    %v616 = vld [vmem:[#allocation2 + $0x230] sm:$0xff]
    %v617 = vld [vmem:[#allocation2 + $0x238] sm:$0xff]
    %v618 = vld [vmem:[#allocation2 + $0x240] sm:$0xff]
    %v619 = vld [vmem:[#allocation2 + $0x248] sm:$0xff]
    %v620 = vld [vmem:[#allocation2 + $0x250] sm:$0xff]
    %v621 = vld [vmem:[#allocation2 + $0x258] sm:$0xff]
    %v622 = vld [vmem:[#allocation2 + $0x260] sm:$0xff]
    %v623 = vld [vmem:[#allocation2 + $0x268] sm:$0xff]
    %v624 = vld [vmem:[#allocation2 + $0x270] sm:$0xff]
    %v625 = vld [vmem:[#allocation2 + $0x278] sm:$0xff]
    %v626 = vld [vmem:[#allocation2 + $0x280] sm:$0xff]
    %v627 = vld [vmem:[#allocation2 + $0x288] sm:$0xff]
    %v628 = vld [vmem:[#allocation2 + $0x290] sm:$0xff]
    %v629 = vld [vmem:[#allocation2 + $0x298] sm:$0xff]
    %v630 = vld [vmem:[#allocation2 + $0x2a0] sm:$0xff]
    %v631 = vld [vmem:[#allocation2 + $0x2a8] sm:$0xff]
    %v632 = vld [vmem:[#allocation2 + $0x2b0] sm:$0xff]
    %v633 = vld [vmem:[#allocation2 + $0x2b8] sm:$0xff]
    %v634 = vld [vmem:[#allocation2 + $0x2c0] sm:$0xff]
    %v635 = vld [vmem:[#allocation2 + $0x2c8] sm:$0xff]
    %v636 = vld [vmem:[#allocation2 + $0x2d0] sm:$0xff]
    %v637 = vld [vmem:[#allocation2 + $0x2d8] sm:$0xff]
    %v638 = vld [vmem:[#allocation2 + $0x2e0] sm:$0xff]
    %v639 = vld [vmem:[#allocation2 + $0x2e8] sm:$0xff]
    %v640 = vld [vmem:[#allocation2 + $0x2f0] sm:$0xff]
    %v641 = vld [vmem:[#allocation2 + $0x2f8] sm:$0xff]
    %v642 = vld [vmem:[#allocation2 + $0x300] sm:$0xff]
    %v643 = vld [vmem:[#allocation2 + $0x308] sm:$0xff]
    %v644 = vld [vmem:[#allocation2 + $0x310] sm:$0xff]
    %v645 = vld [vmem:[#allocation2 + $0x318] sm:$0xff]
    %v646 = vld [vmem:[#allocation2 + $0x320] sm:$0xff]
    %v647 = vld [vmem:[#allocation2 + $0x328] sm:$0xff]
    %v648 = vld [vmem:[#allocation2 + $0x330] sm:$0xff]
    %v649 = vld [vmem:[#allocation2 + $0x338] sm:$0xff]
    %v650 = vld [vmem:[#allocation2 + $0x340] sm:$0xff]
    %v651 = vld [vmem:[#allocation2 + $0x348] sm:$0xff]
    %v652 = vld [vmem:[#allocation2 + $0x350] sm:$0xff]
    %v653 = vld [vmem:[#allocation2 + $0x358] sm:$0xff]
    %v654 = vld [vmem:[#allocation2 + $0x360] sm:$0xff]
    %v655 = vld [vmem:[#allocation2 + $0x368] sm:$0xff]
    %v656 = vld [vmem:[#allocation2 + $0x370] sm:$0xff]
    %v657 = vld [vmem:[#allocation2 + $0x378] sm:$0xff]
    %v658 = vld [vmem:[#allocation2 + $0x380] sm:$0xff]
    %v659 = vld [vmem:[#allocation2 + $0x388] sm:$0xff]
    %v660 = vld [vmem:[#allocation2 + $0x390] sm:$0xff]
    %v661 = vld [vmem:[#allocation2 + $0x398] sm:$0xff]
    %v662 = vld [vmem:[#allocation2 + $0x3a0] sm:$0xff]
    %v663 = vld [vmem:[#allocation2 + $0x3a8] sm:$0xff]
    %v664 = vld [vmem:[#allocation2 + $0x3b0] sm:$0xff]
    %v665 = vld [vmem:[#allocation2 + $0x3b8] sm:$0xff]
    %v666 = vld [vmem:[#allocation2 + $0x3c0] sm:$0xff]
    %v667 = vld [vmem:[#allocation2 + $0x3c8] sm:$0xff]
    %v668 = vld [vmem:[#allocation2 + $0x3d0] sm:$0xff]
    %v669 = vld [vmem:[#allocation2 + $0x3d8] sm:$0xff]
    %v670 = vld [vmem:[#allocation2 + $0x3e0] sm:$0xff]
    %v671 = vld [vmem:[#allocation2 + $0x3e8] sm:$0xff]
    %v672 = vld [vmem:[#allocation2 + $0x3f0] sm:$0xff]
    %v673 = vld [vmem:[#allocation2 + $0x3f8] sm:$0xff]
    %v802 = vunpack.c.l.b16 %v546
    %v803 = vunpack.c.h.b16 %v546
    %v804 = vunpack.c.l.b16 %v547
    %v805 = vunpack.c.h.b16 %v547
    %v806 = vunpack.c.l.b16 %v548
    %v807 = vunpack.c.h.b16 %v548
    %v808 = vunpack.c.l.b16 %v549
    %v809 = vunpack.c.h.b16 %v549
    %v810 = vunpack.c.l.b16 %v550
    %v811 = vunpack.c.h.b16 %v550
    %v812 = vunpack.c.l.b16 %v551
    %v813 = vunpack.c.h.b16 %v551
    %v814 = vunpack.c.l.b16 %v552
    %v815 = vunpack.c.h.b16 %v552
    %v816 = vunpack.c.l.b16 %v553
    %v817 = vunpack.c.h.b16 %v553
    %v818 = vunpack.c.l.b16 %v554
    %v819 = vunpack.c.h.b16 %v554
    %v820 = vunpack.c.l.b16 %v555
    %v821 = vunpack.c.h.b16 %v555
    %v822 = vunpack.c.l.b16 %v556
    %v823 = vunpack.c.h.b16 %v556
    %v824 = vunpack.c.l.b16 %v557
    %v825 = vunpack.c.h.b16 %v557
    %v826 = vunpack.c.l.b16 %v558
    %v827 = vunpack.c.h.b16 %v558
    %v828 = vunpack.c.l.b16 %v559
    %v829 = vunpack.c.h.b16 %v559
    %v830 = vunpack.c.l.b16 %v560
    %v831 = vunpack.c.h.b16 %v560
    %v832 = vunpack.c.l.b16 %v561
    %v833 = vunpack.c.h.b16 %v561
    %v834 = vunpack.c.l.b16 %v562
    %v835 = vunpack.c.h.b16 %v562
    %v836 = vunpack.c.l.b16 %v563
    %v837 = vunpack.c.h.b16 %v563
    %v838 = vunpack.c.l.b16 %v564
    %v839 = vunpack.c.h.b16 %v564
    %v840 = vunpack.c.l.b16 %v565
    %v841 = vunpack.c.h.b16 %v565
    %v842 = vunpack.c.l.b16 %v566
    %v843 = vunpack.c.h.b16 %v566
    %v844 = vunpack.c.l.b16 %v567
    %v845 = vunpack.c.h.b16 %v567
    %v846 = vunpack.c.l.b16 %v568
    %v847 = vunpack.c.h.b16 %v568
    %v848 = vunpack.c.l.b16 %v569
    %v849 = vunpack.c.h.b16 %v569
    %v850 = vunpack.c.l.b16 %v570
    %v851 = vunpack.c.h.b16 %v570
    %v852 = vunpack.c.l.b16 %v571
    %v853 = vunpack.c.h.b16 %v571
    %v854 = vunpack.c.l.b16 %v572
    %v855 = vunpack.c.h.b16 %v572
    %v856 = vunpack.c.l.b16 %v573
    %v857 = vunpack.c.h.b16 %v573
    %v858 = vunpack.c.l.b16 %v574
    %v859 = vunpack.c.h.b16 %v574
    %v860 = vunpack.c.l.b16 %v575
    %v861 = vunpack.c.h.b16 %v575
    %v862 = vunpack.c.l.b16 %v576
    %v863 = vunpack.c.h.b16 %v576
    %v864 = vunpack.c.l.b16 %v577
    %v865 = vunpack.c.h.b16 %v577
    %v866 = vunpack.c.l.b16 %v578
    %v867 = vunpack.c.h.b16 %v578
    %v868 = vunpack.c.l.b16 %v579
    %v869 = vunpack.c.h.b16 %v579
    %v870 = vunpack.c.l.b16 %v580
    %v871 = vunpack.c.h.b16 %v580
    %v872 = vunpack.c.l.b16 %v581
    %v873 = vunpack.c.h.b16 %v581
    %v874 = vunpack.c.l.b16 %v582
    %v875 = vunpack.c.h.b16 %v582
    %v876 = vunpack.c.l.b16 %v583
    %v877 = vunpack.c.h.b16 %v583
    %v878 = vunpack.c.l.b16 %v584
    %v879 = vunpack.c.h.b16 %v584
    %v880 = vunpack.c.l.b16 %v585
    %v881 = vunpack.c.h.b16 %v585
    %v882 = vunpack.c.l.b16 %v586
    %v883 = vunpack.c.h.b16 %v586
    %v884 = vunpack.c.l.b16 %v587
    %v885 = vunpack.c.h.b16 %v587
    %v886 = vunpack.c.l.b16 %v588
    %v887 = vunpack.c.h.b16 %v588
    %v888 = vunpack.c.l.b16 %v589
    %v889 = vunpack.c.h.b16 %v589
    %v890 = vunpack.c.l.b16 %v590
    %v891 = vunpack.c.h.b16 %v590
    %v892 = vunpack.c.l.b16 %v591
    %v893 = vunpack.c.h.b16 %v591
    %v894 = vunpack.c.l.b16 %v592
    %v895 = vunpack.c.h.b16 %v592
    %v896 = vunpack.c.l.b16 %v593
    %v897 = vunpack.c.h.b16 %v593
    %v898 = vunpack.c.l.b16 %v594
    %v899 = vunpack.c.h.b16 %v594
    %v900 = vunpack.c.l.b16 %v595
    %v901 = vunpack.c.h.b16 %v595
    %v902 = vunpack.c.l.b16 %v596
    %v903 = vunpack.c.h.b16 %v596
    %v904 = vunpack.c.l.b16 %v597
    %v905 = vunpack.c.h.b16 %v597
    %v906 = vunpack.c.l.b16 %v598
    %v907 = vunpack.c.h.b16 %v598
    %v908 = vunpack.c.l.b16 %v599
    %v909 = vunpack.c.h.b16 %v599
    %v910 = vunpack.c.l.b16 %v600
    %v911 = vunpack.c.h.b16 %v600
    %v912 = vunpack.c.l.b16 %v601
    %v913 = vunpack.c.h.b16 %v601
    %v914 = vunpack.c.l.b16 %v602
    %v915 = vunpack.c.h.b16 %v602
    %v916 = vunpack.c.l.b16 %v603
    %v917 = vunpack.c.h.b16 %v603
    %v918 = vunpack.c.l.b16 %v604
    %v919 = vunpack.c.h.b16 %v604
    %v920 = vunpack.c.l.b16 %v605
    %v921 = vunpack.c.h.b16 %v605
    %v922 = vunpack.c.l.b16 %v606
    %v923 = vunpack.c.h.b16 %v606
    %v924 = vunpack.c.l.b16 %v607
    %v925 = vunpack.c.h.b16 %v607
    %v926 = vunpack.c.l.b16 %v608
    %v927 = vunpack.c.h.b16 %v608
    %v928 = vunpack.c.l.b16 %v609
    %v929 = vunpack.c.h.b16 %v609
    %v930 = vunpack.c.l.b16 %v610
    %v931 = vunpack.c.h.b16 %v610
    %v932 = vunpack.c.l.b16 %v611
    %v933 = vunpack.c.h.b16 %v611
    %v934 = vunpack.c.l.b16 %v612
    %v935 = vunpack.c.h.b16 %v612
    %v936 = vunpack.c.l.b16 %v613
    %v937 = vunpack.c.h.b16 %v613
    %v938 = vunpack.c.l.b16 %v614
    %v939 = vunpack.c.h.b16 %v614
    %v940 = vunpack.c.l.b16 %v615
    %v941 = vunpack.c.h.b16 %v615
    %v942 = vunpack.c.l.b16 %v616
    %v943 = vunpack.c.h.b16 %v616
    %v944 = vunpack.c.l.b16 %v617
    %v945 = vunpack.c.h.b16 %v617
    %v946 = vunpack.c.l.b16 %v618
    %v947 = vunpack.c.h.b16 %v618
    %v948 = vunpack.c.l.b16 %v619
    %v949 = vunpack.c.h.b16 %v619
    %v950 = vunpack.c.l.b16 %v620
    %v951 = vunpack.c.h.b16 %v620
    %v952 = vunpack.c.l.b16 %v621
    %v953 = vunpack.c.h.b16 %v621
    %v954 = vunpack.c.l.b16 %v622
    %v955 = vunpack.c.h.b16 %v622
    %v956 = vunpack.c.l.b16 %v623
    %v957 = vunpack.c.h.b16 %v623
    %v958 = vunpack.c.l.b16 %v624
    %v959 = vunpack.c.h.b16 %v624
    %v960 = vunpack.c.l.b16 %v625
    %v961 = vunpack.c.h.b16 %v625
    %v962 = vunpack.c.l.b16 %v626
    %v963 = vunpack.c.h.b16 %v626
    %v964 = vunpack.c.l.b16 %v627
    %v965 = vunpack.c.h.b16 %v627
    %v966 = vunpack.c.l.b16 %v628
    %v967 = vunpack.c.h.b16 %v628
    %v968 = vunpack.c.l.b16 %v629
    %v969 = vunpack.c.h.b16 %v629
    %v970 = vunpack.c.l.b16 %v630
    %v971 = vunpack.c.h.b16 %v630
    %v972 = vunpack.c.l.b16 %v631
    %v973 = vunpack.c.h.b16 %v631
    %v974 = vunpack.c.l.b16 %v632
    %v975 = vunpack.c.h.b16 %v632
    %v976 = vunpack.c.l.b16 %v633
    %v977 = vunpack.c.h.b16 %v633
    %v978 = vunpack.c.l.b16 %v634
    %v979 = vunpack.c.h.b16 %v634
    %v980 = vunpack.c.l.b16 %v635
    %v981 = vunpack.c.h.b16 %v635
    %v982 = vunpack.c.l.b16 %v636
    %v983 = vunpack.c.h.b16 %v636
    %v984 = vunpack.c.l.b16 %v637
    %v985 = vunpack.c.h.b16 %v637
    %v986 = vunpack.c.l.b16 %v638
    %v987 = vunpack.c.h.b16 %v638
    %v988 = vunpack.c.l.b16 %v639
    %v989 = vunpack.c.h.b16 %v639
    %v990 = vunpack.c.l.b16 %v640
    %v991 = vunpack.c.h.b16 %v640
    %v992 = vunpack.c.l.b16 %v641
    %v993 = vunpack.c.h.b16 %v641
    %v994 = vunpack.c.l.b16 %v642
    %v995 = vunpack.c.h.b16 %v642
    %v996 = vunpack.c.l.b16 %v643
    %v997 = vunpack.c.h.b16 %v643
    %v998 = vunpack.c.l.b16 %v644
    %v999 = vunpack.c.h.b16 %v644
    %v1000 = vunpack.c.l.b16 %v645
    %v1001 = vunpack.c.h.b16 %v645
    %v1002 = vunpack.c.l.b16 %v646
    %v1003 = vunpack.c.h.b16 %v646
    %v1004 = vunpack.c.l.b16 %v647
    %v1005 = vunpack.c.h.b16 %v647
    %v1006 = vunpack.c.l.b16 %v648
    %v1007 = vunpack.c.h.b16 %v648
    %v1008 = vunpack.c.l.b16 %v649
    %v1009 = vunpack.c.h.b16 %v649
    %v1010 = vunpack.c.l.b16 %v650
    %v1011 = vunpack.c.h.b16 %v650
    %v1012 = vunpack.c.l.b16 %v651
    %v1013 = vunpack.c.h.b16 %v651
    %v1014 = vunpack.c.l.b16 %v652
    %v1015 = vunpack.c.h.b16 %v652
    %v1016 = vunpack.c.l.b16 %v653
    %v1017 = vunpack.c.h.b16 %v653
    %v1018 = vunpack.c.l.b16 %v654
    %v1019 = vunpack.c.h.b16 %v654
    %v1020 = vunpack.c.l.b16 %v655
    %v1021 = vunpack.c.h.b16 %v655
    %v1022 = vunpack.c.l.b16 %v656
    %v1023 = vunpack.c.h.b16 %v656
    %v1024 = vunpack.c.l.b16 %v657
    %v1025 = vunpack.c.h.b16 %v657
    %v1026 = vunpack.c.l.b16 %v658
    %v1027 = vunpack.c.h.b16 %v658
    %v1028 = vunpack.c.l.b16 %v659
    %v1029 = vunpack.c.h.b16 %v659
    %v1030 = vunpack.c.l.b16 %v660
    %v1031 = vunpack.c.h.b16 %v660
    %v1032 = vunpack.c.l.b16 %v661
    %v1033 = vunpack.c.h.b16 %v661
    %v1034 = vunpack.c.l.b16 %v662
    %v1035 = vunpack.c.h.b16 %v662
    %v1036 = vunpack.c.l.b16 %v663
    %v1037 = vunpack.c.h.b16 %v663
    %v1038 = vunpack.c.l.b16 %v664
    %v1039 = vunpack.c.h.b16 %v664
    %v1040 = vunpack.c.l.b16 %v665
    %v1041 = vunpack.c.h.b16 %v665
    %v1042 = vunpack.c.l.b16 %v666
    %v1043 = vunpack.c.h.b16 %v666
    %v1044 = vunpack.c.l.b16 %v667
    %v1045 = vunpack.c.h.b16 %v667
    %v1046 = vunpack.c.l.b16 %v668
    %v1047 = vunpack.c.h.b16 %v668
    %v1048 = vunpack.c.l.b16 %v669
    %v1049 = vunpack.c.h.b16 %v669
    %v1050 = vunpack.c.l.b16 %v670
    %v1051 = vunpack.c.h.b16 %v670
    %v1052 = vunpack.c.l.b16 %v671
    %v1053 = vunpack.c.h.b16 %v671
    %v1054 = vunpack.c.l.b16 %v672
    %v1055 = vunpack.c.h.b16 %v672
    %v1056 = vunpack.c.l.b16 %v673
    %v1057 = vunpack.c.h.b16 %v673
    %v1058 = vpack.c.b16 %v806, %v802
    %v1059 = vpack.c.b16 %v807, %v803
    %v1060 = vpack.c.b16 %v808, %v804
    %v1061 = vpack.c.b16 %v809, %v805
    %v1062 = vpack.c.b16 %v814, %v810
    %v1063 = vpack.c.b16 %v815, %v811
    %v1064 = vpack.c.b16 %v816, %v812
    %v1065 = vpack.c.b16 %v817, %v813
    %v1066 = vpack.c.b16 %v822, %v818
    %v1067 = vpack.c.b16 %v823, %v819
    %v1068 = vpack.c.b16 %v824, %v820
    %v1069 = vpack.c.b16 %v825, %v821
    %v1070 = vpack.c.b16 %v830, %v826
    %v1071 = vpack.c.b16 %v831, %v827
    %v1072 = vpack.c.b16 %v832, %v828
    %v1073 = vpack.c.b16 %v833, %v829
    %v1074 = vpack.c.b16 %v838, %v834
    %v1075 = vpack.c.b16 %v839, %v835
    %v1076 = vpack.c.b16 %v840, %v836
    %v1077 = vpack.c.b16 %v841, %v837
    %v1078 = vpack.c.b16 %v846, %v842
    %v1079 = vpack.c.b16 %v847, %v843
    %v1080 = vpack.c.b16 %v848, %v844
    %v1081 = vpack.c.b16 %v849, %v845
    %v1082 = vpack.c.b16 %v854, %v850
    %v1083 = vpack.c.b16 %v855, %v851
    %v1084 = vpack.c.b16 %v856, %v852
    %v1085 = vpack.c.b16 %v857, %v853
    %v1086 = vpack.c.b16 %v862, %v858
    %v1087 = vpack.c.b16 %v863, %v859
    %v1088 = vpack.c.b16 %v864, %v860
    %v1089 = vpack.c.b16 %v865, %v861
    %v1090 = vpack.c.b16 %v870, %v866
    %v1091 = vpack.c.b16 %v871, %v867
    %v1092 = vpack.c.b16 %v872, %v868
    %v1093 = vpack.c.b16 %v873, %v869
    %v1094 = vpack.c.b16 %v878, %v874
    %v1095 = vpack.c.b16 %v879, %v875
    %v1096 = vpack.c.b16 %v880, %v876
    %v1097 = vpack.c.b16 %v881, %v877
    %v1098 = vpack.c.b16 %v886, %v882
    %v1099 = vpack.c.b16 %v887, %v883
    %v1100 = vpack.c.b16 %v888, %v884
    %v1101 = vpack.c.b16 %v889, %v885
    %v1102 = vpack.c.b16 %v894, %v890
    %v1103 = vpack.c.b16 %v895, %v891
    %v1104 = vpack.c.b16 %v896, %v892
    %v1105 = vpack.c.b16 %v897, %v893
    %v1106 = vpack.c.b16 %v902, %v898
    %v1107 = vpack.c.b16 %v903, %v899
    %v1108 = vpack.c.b16 %v904, %v900
    %v1109 = vpack.c.b16 %v905, %v901
    %v1110 = vpack.c.b16 %v910, %v906
    %v1111 = vpack.c.b16 %v911, %v907
    %v1112 = vpack.c.b16 %v912, %v908
    %v1113 = vpack.c.b16 %v913, %v909
    %v1114 = vpack.c.b16 %v918, %v914
    %v1115 = vpack.c.b16 %v919, %v915
    %v1116 = vpack.c.b16 %v920, %v916
    %v1117 = vpack.c.b16 %v921, %v917
    %v1118 = vpack.c.b16 %v926, %v922
    %v1119 = vpack.c.b16 %v927, %v923
    %v1120 = vpack.c.b16 %v928, %v924
    %v1121 = vpack.c.b16 %v929, %v925
    %v1122 = vpack.c.b16 %v934, %v930
    %v1123 = vpack.c.b16 %v935, %v931
    %v1124 = vpack.c.b16 %v936, %v932
    %v1125 = vpack.c.b16 %v937, %v933
    %v1126 = vpack.c.b16 %v942, %v938
    %v1127 = vpack.c.b16 %v943, %v939
    %v1128 = vpack.c.b16 %v944, %v940
    %v1129 = vpack.c.b16 %v945, %v941
    %v1130 = vpack.c.b16 %v950, %v946
    %v1131 = vpack.c.b16 %v951, %v947
    %v1132 = vpack.c.b16 %v952, %v948
    %v1133 = vpack.c.b16 %v953, %v949
    %v1134 = vpack.c.b16 %v958, %v954
    %v1135 = vpack.c.b16 %v959, %v955
    %v1136 = vpack.c.b16 %v960, %v956
    %v1137 = vpack.c.b16 %v961, %v957
    %v1138 = vpack.c.b16 %v966, %v962
    %v1139 = vpack.c.b16 %v967, %v963
    %v1140 = vpack.c.b16 %v968, %v964
    %v1141 = vpack.c.b16 %v969, %v965
    %v1142 = vpack.c.b16 %v974, %v970
    %v1143 = vpack.c.b16 %v975, %v971
    %v1144 = vpack.c.b16 %v976, %v972
    %v1145 = vpack.c.b16 %v977, %v973
    %v1146 = vpack.c.b16 %v982, %v978
    %v1147 = vpack.c.b16 %v983, %v979
    %v1148 = vpack.c.b16 %v984, %v980
    %v1149 = vpack.c.b16 %v985, %v981
    %v1150 = vpack.c.b16 %v990, %v986
    %v1151 = vpack.c.b16 %v991, %v987
    %v1152 = vpack.c.b16 %v992, %v988
    %v1153 = vpack.c.b16 %v993, %v989
    %v1154 = vpack.c.b16 %v998, %v994
    %v1155 = vpack.c.b16 %v999, %v995
    %v1156 = vpack.c.b16 %v1000, %v996
    %v1157 = vpack.c.b16 %v1001, %v997
    %v1158 = vpack.c.b16 %v1006, %v1002
    %v1159 = vpack.c.b16 %v1007, %v1003
    %v1160 = vpack.c.b16 %v1008, %v1004
    %v1161 = vpack.c.b16 %v1009, %v1005
    %v1162 = vpack.c.b16 %v1014, %v1010
    %v1163 = vpack.c.b16 %v1015, %v1011
    %v1164 = vpack.c.b16 %v1016, %v1012
    %v1165 = vpack.c.b16 %v1017, %v1013
    %v1166 = vpack.c.b16 %v1022, %v1018
    %v1167 = vpack.c.b16 %v1023, %v1019
    %v1168 = vpack.c.b16 %v1024, %v1020
    %v1169 = vpack.c.b16 %v1025, %v1021
    %v1170 = vpack.c.b16 %v1030, %v1026
    %v1171 = vpack.c.b16 %v1031, %v1027
    %v1172 = vpack.c.b16 %v1032, %v1028
    %v1173 = vpack.c.b16 %v1033, %v1029
    %v1174 = vpack.c.b16 %v1038, %v1034
    %v1175 = vpack.c.b16 %v1039, %v1035
    %v1176 = vpack.c.b16 %v1040, %v1036
    %v1177 = vpack.c.b16 %v1041, %v1037
    %v1178 = vpack.c.b16 %v1046, %v1042
    %v1179 = vpack.c.b16 %v1047, %v1043
    %v1180 = vpack.c.b16 %v1048, %v1044
    %v1181 = vpack.c.b16 %v1049, %v1045
    %v1182 = vpack.c.b16 %v1054, %v1050
    %v1183 = vpack.c.b16 %v1055, %v1051
    %v1184 = vpack.c.b16 %v1056, %v1052
    %v1185 = vpack.c.b16 %v1057, %v1053
    %1314 = vmatpush.bf16.msra.mxu0 %v1086
    %1315 = vmatpush.bf16.msra.mxu0 %v1082
    %1316 = vmatpush.bf16.msra.mxu0 %v1078
    %1317 = vmatpush.bf16.msra.mxu0 %v1074
    %1318 = vmatpush.bf16.msra.mxu0 %v1070
    %1319 = vmatpush.bf16.msra.mxu0 %v1066
    %1320 = vmatpush.bf16.msra.mxu0 %v1062
    %1321 = vmatpush.bf16.msra.mxu0 %v1058
    %1322 = vmatmul.bf16.gmra.mxu0 %v542
    %v1323 = vpop.f32.mrf.mxu0
    %v1324 = vadd.f32 0.0, %v1323
    %v1325 = vpop.f32.mrf.mxu0
    %1326 = vdwg.mxu0
    %1327 = vmatpush.bf16.msra.mxu0 %v1118
    %1328 = vmatpush.bf16.msra.mxu0 %v1114
    %1329 = vmatpush.bf16.msra.mxu0 %v1110
    %1330 = vmatpush.bf16.msra.mxu0 %v1106
    %1331 = vmatpush.bf16.msra.mxu0 %v1102
    %1332 = vmatpush.bf16.msra.mxu0 %v1098
    %1333 = vmatpush.bf16.msra.mxu0 %v1094
    %1334 = vmatpush.bf16.msra.mxu0 %v1090
    %1335 = vmatmul.bf16.gmra.mxu0 %v543
    %v1336 = vpop.f32.mrf.mxu0
    %v1337 = vadd.f32 %v1324, %v1336
    %v1338 = vpop.f32.mrf.mxu0
    %1339 = vdwg.mxu0
    %1340 = vmatpush.bf16.msra.mxu0 %v1150
    %1341 = vmatpush.bf16.msra.mxu0 %v1146
    %1342 = vmatpush.bf16.msra.mxu0 %v1142
    %1343 = vmatpush.bf16.msra.mxu0 %v1138
    %1344 = vmatpush.bf16.msra.mxu0 %v1134
    %1345 = vmatpush.bf16.msra.mxu0 %v1130
    %1346 = vmatpush.bf16.msra.mxu0 %v1126
    %1347 = vmatpush.bf16.msra.mxu0 %v1122
    %1348 = vmatmul.bf16.gmra.mxu0 %v544
    %v1349 = vpop.f32.mrf.mxu0
    %v1350 = vadd.f32 %v1337, %v1349
    %v1351 = vpop.f32.mrf.mxu0
    %1352 = vdwg.mxu0
    %1353 = vmatpush.bf16.msra.mxu0 %v1182
    %1354 = vmatpush.bf16.msra.mxu0 %v1178
    %1355 = vmatpush.bf16.msra.mxu0 %v1174
    %1356 = vmatpush.bf16.msra.mxu0 %v1170
    %1357 = vmatpush.bf16.msra.mxu0 %v1166
    %1358 = vmatpush.bf16.msra.mxu0 %v1162
    %1359 = vmatpush.bf16.msra.mxu0 %v1158
    %1360 = vmatpush.bf16.msra.mxu0 %v1154
    %1361 = vmatmul.bf16.gmra.mxu0 %v545
    %v1362 = vpop.f32.mrf.mxu0
    %v1363 = vadd.f32 %v1350, %v1362
    %v1364 = vpop.f32.mrf.mxu0
    %1365 = vdwg.mxu0
    %1366 = vmatpush.bf16.msra.mxu0 %v1087
    %1367 = vmatpush.bf16.msra.mxu0 %v1083
    %1368 = vmatpush.bf16.msra.mxu0 %v1079
    %1369 = vmatpush.bf16.msra.mxu0 %v1075
    %1370 = vmatpush.bf16.msra.mxu0 %v1071
    %1371 = vmatpush.bf16.msra.mxu0 %v1067
    %1372 = vmatpush.bf16.msra.mxu0 %v1063
    %1373 = vmatpush.bf16.msra.mxu0 %v1059
    %1374 = vmatmul.bf16.gmra.mxu0 %v542
    %v1375 = vpop.f32.mrf.mxu0
    %v1376 = vadd.f32 0.0, %v1375
    %v1377 = vpop.f32.mrf.mxu0
    %1378 = vdwg.mxu0
    %1379 = vmatpush.bf16.msra.mxu0 %v1119
    %1380 = vmatpush.bf16.msra.mxu0 %v1115
    %1381 = vmatpush.bf16.msra.mxu0 %v1111
    %1382 = vmatpush.bf16.msra.mxu0 %v1107
    %1383 = vmatpush.bf16.msra.mxu0 %v1103
    %1384 = vmatpush.bf16.msra.mxu0 %v1099
    %1385 = vmatpush.bf16.msra.mxu0 %v1095
    %1386 = vmatpush.bf16.msra.mxu0 %v1091
    %1387 = vmatmul.bf16.gmra.mxu0 %v543
    %v1388 = vpop.f32.mrf.mxu0
    %v1389 = vadd.f32 %v1376, %v1388
    %v1390 = vpop.f32.mrf.mxu0
    %1391 = vdwg.mxu0
    %1392 = vmatpush.bf16.msra.mxu0 %v1151
    %1393 = vmatpush.bf16.msra.mxu0 %v1147
    %1394 = vmatpush.bf16.msra.mxu0 %v1143
    %1395 = vmatpush.bf16.msra.mxu0 %v1139
    %1396 = vmatpush.bf16.msra.mxu0 %v1135
    %1397 = vmatpush.bf16.msra.mxu0 %v1131
    %1398 = vmatpush.bf16.msra.mxu0 %v1127
    %1399 = vmatpush.bf16.msra.mxu0 %v1123
    %1400 = vmatmul.bf16.gmra.mxu0 %v544
    %v1401 = vpop.f32.mrf.mxu0
    %v1402 = vadd.f32 %v1389, %v1401
    %v1403 = vpop.f32.mrf.mxu0
    %1404 = vdwg.mxu0
    %1405 = vmatpush.bf16.msra.mxu0 %v1183
    %1406 = vmatpush.bf16.msra.mxu0 %v1179
    %1407 = vmatpush.bf16.msra.mxu0 %v1175
    %1408 = vmatpush.bf16.msra.mxu0 %v1171
    %1409 = vmatpush.bf16.msra.mxu0 %v1167
    %1410 = vmatpush.bf16.msra.mxu0 %v1163
    %1411 = vmatpush.bf16.msra.mxu0 %v1159
    %1412 = vmatpush.bf16.msra.mxu0 %v1155
    %1413 = vmatmul.bf16.gmra.mxu0 %v545
    %v1414 = vpop.f32.mrf.mxu0
    %v1415 = vadd.f32 %v1402, %v1414
    %v1416 = vpop.f32.mrf.mxu0
    %1417 = vdwg.mxu0
    %1418 = vmatpush.bf16.msra.mxu0 %v1088
    %1419 = vmatpush.bf16.msra.mxu0 %v1084
    %1420 = vmatpush.bf16.msra.mxu0 %v1080
    %1421 = vmatpush.bf16.msra.mxu0 %v1076
    %1422 = vmatpush.bf16.msra.mxu0 %v1072
    %1423 = vmatpush.bf16.msra.mxu0 %v1068
    %1424 = vmatpush.bf16.msra.mxu0 %v1064
    %1425 = vmatpush.bf16.msra.mxu0 %v1060
    %1426 = vmatmul.bf16.gmra.mxu0 %v542
    %v1427 = vpop.f32.mrf.mxu0
    %v1428 = vadd.f32 0.0, %v1427
    %v1429 = vpop.f32.mrf.mxu0
    %1430 = vdwg.mxu0
    %1431 = vmatpush.bf16.msra.mxu0 %v1120
    %1432 = vmatpush.bf16.msra.mxu0 %v1116
    %1433 = vmatpush.bf16.msra.mxu0 %v1112
    %1434 = vmatpush.bf16.msra.mxu0 %v1108
    %1435 = vmatpush.bf16.msra.mxu0 %v1104
    %1436 = vmatpush.bf16.msra.mxu0 %v1100
    %1437 = vmatpush.bf16.msra.mxu0 %v1096
    %1438 = vmatpush.bf16.msra.mxu0 %v1092
    %1439 = vmatmul.bf16.gmra.mxu0 %v543
    %v1440 = vpop.f32.mrf.mxu0
    %v1441 = vadd.f32 %v1428, %v1440
    %v1442 = vpop.f32.mrf.mxu0
    %1443 = vdwg.mxu0
    %1444 = vmatpush.bf16.msra.mxu0 %v1152
    %1445 = vmatpush.bf16.msra.mxu0 %v1148
    %1446 = vmatpush.bf16.msra.mxu0 %v1144
    %1447 = vmatpush.bf16.msra.mxu0 %v1140
    %1448 = vmatpush.bf16.msra.mxu0 %v1136
    %1449 = vmatpush.bf16.msra.mxu0 %v1132
    %1450 = vmatpush.bf16.msra.mxu0 %v1128
    %1451 = vmatpush.bf16.msra.mxu0 %v1124
    %1452 = vmatmul.bf16.gmra.mxu0 %v544
    %v1453 = vpop.f32.mrf.mxu0
    %v1454 = vadd.f32 %v1441, %v1453
    %v1455 = vpop.f32.mrf.mxu0
    %1456 = vdwg.mxu0
    %1457 = vmatpush.bf16.msra.mxu0 %v1184
    %1458 = vmatpush.bf16.msra.mxu0 %v1180
    %1459 = vmatpush.bf16.msra.mxu0 %v1176
    %1460 = vmatpush.bf16.msra.mxu0 %v1172
    %1461 = vmatpush.bf16.msra.mxu0 %v1168
    %1462 = vmatpush.bf16.msra.mxu0 %v1164
    %1463 = vmatpush.bf16.msra.mxu0 %v1160
    %1464 = vmatpush.bf16.msra.mxu0 %v1156
    %1465 = vmatmul.bf16.gmra.mxu0 %v545
    %v1466 = vpop.f32.mrf.mxu0
    %v1467 = vadd.f32 %v1454, %v1466
    %v1468 = vpop.f32.mrf.mxu0
    %1469 = vdwg.mxu0
    %1470 = vmatpush.bf16.msra.mxu0 %v1089
    %1471 = vmatpush.bf16.msra.mxu0 %v1085
    %1472 = vmatpush.bf16.msra.mxu0 %v1081
    %1473 = vmatpush.bf16.msra.mxu0 %v1077
    %1474 = vmatpush.bf16.msra.mxu0 %v1073
    %1475 = vmatpush.bf16.msra.mxu0 %v1069
    %1476 = vmatpush.bf16.msra.mxu0 %v1065
    %1477 = vmatpush.bf16.msra.mxu0 %v1061
    %1478 = vmatmul.bf16.gmra.mxu0 %v542
    %v1479 = vpop.f32.mrf.mxu0
    %v1480 = vadd.f32 0.0, %v1479
    %v1481 = vpop.f32.mrf.mxu0
    %1482 = vdwg.mxu0
    %1483 = vmatpush.bf16.msra.mxu0 %v1121
    %1484 = vmatpush.bf16.msra.mxu0 %v1117
    %1485 = vmatpush.bf16.msra.mxu0 %v1113
    %1486 = vmatpush.bf16.msra.mxu0 %v1109
    %1487 = vmatpush.bf16.msra.mxu0 %v1105
    %1488 = vmatpush.bf16.msra.mxu0 %v1101
    %1489 = vmatpush.bf16.msra.mxu0 %v1097
    %1490 = vmatpush.bf16.msra.mxu0 %v1093
    %1491 = vmatmul.bf16.gmra.mxu0 %v543
    %v1492 = vpop.f32.mrf.mxu0
    %v1493 = vadd.f32 %v1480, %v1492
    %v1494 = vpop.f32.mrf.mxu0
    %1495 = vdwg.mxu0
    %1496 = vmatpush.bf16.msra.mxu0 %v1153
    %1497 = vmatpush.bf16.msra.mxu0 %v1149
    %1498 = vmatpush.bf16.msra.mxu0 %v1145
    %1499 = vmatpush.bf16.msra.mxu0 %v1141
    %1500 = vmatpush.bf16.msra.mxu0 %v1137
    %1501 = vmatpush.bf16.msra.mxu0 %v1133
    %1502 = vmatpush.bf16.msra.mxu0 %v1129
    %1503 = vmatpush.bf16.msra.mxu0 %v1125
    %1504 = vmatmul.bf16.gmra.mxu0 %v544
    %v1505 = vpop.f32.mrf.mxu0
    %v1506 = vadd.f32 %v1493, %v1505
    %v1507 = vpop.f32.mrf.mxu0
    %1508 = vdwg.mxu0
    %1509 = vmatpush.bf16.msra.mxu0 %v1185
    %1510 = vmatpush.bf16.msra.mxu0 %v1181
    %1511 = vmatpush.bf16.msra.mxu0 %v1177
    %1512 = vmatpush.bf16.msra.mxu0 %v1173
    %1513 = vmatpush.bf16.msra.mxu0 %v1169
    %1514 = vmatpush.bf16.msra.mxu0 %v1165
    %1515 = vmatpush.bf16.msra.mxu0 %v1161
    %1516 = vmatpush.bf16.msra.mxu0 %v1157
    %1517 = vmatmul.bf16.gmra.mxu0 %v545
    %v1518 = vpop.f32.mrf.mxu0
    %v1519 = vadd.f32 %v1506, %v1518
    %v1520 = vpop.f32.mrf.mxu0
    %1521 = vdwg.mxu0
    %v1522 = vmul.f32 %v1363, %v1363
    %v1523 = vmul.f32 %v1415, %v1415
    %v1524 = vmul.f32 %v1467, %v1467
    %v1525 = vmul.f32 %v1519, %v1519
    %v1526 = vadd.f32 %v1522, %v1524
    %v1527 = vadd.f32 %v1523, %v1525
    %v1528 = vrsqrt.pop %v1526
    %v1529 = vmul.f32 %v1528, %v1526
    %v1530 = vmul.f32 %v1529, %v1528
    %v1531 = vmul.f32 0.5, %v1530
    %v1532 = vsub.f32 1.5, %v1531
    %v1533 = vmul.f32 %v1528, %v1532
    %v1534 = vmul.f32 %v1526, %v1533
    %vm1535 = vcmp.eq.f32.partialorder %v1526, inf
    %v1536 = vsel %vm1535, %v1526, %v1534
    %vm1537 = vcmp.eq.f32.partialorder %v1526, 0.0
    %v1538 = vand.u32 %v1526, 2147483648
    %v1539 = vsel %vm1537, %v1538, %v1536
    %v1540 = vrsqrt.pop %v1527
    %v1541 = vmul.f32 %v1540, %v1527
    %v1542 = vmul.f32 %v1541, %v1540
    %v1543 = vmul.f32 0.5, %v1542
    %v1544 = vsub.f32 1.5, %v1543
    %v1545 = vmul.f32 %v1540, %v1544
    %v1546 = vmul.f32 %v1527, %v1545
    %vm1547 = vcmp.eq.f32.partialorder %v1527, inf
    %v1548 = vsel %vm1547, %v1527, %v1546
    %vm1549 = vcmp.eq.f32.partialorder %v1527, 0.0
    %v1550 = vand.u32 %v1527, 2147483648
    %v1551 = vsel %vm1549, %v1550, %v1548
    %v1552 = vld [vmem:[%s2] sm:$0xff]
    %v1553 = vunpack.c.l.bf16 %v1552
    %v1554 = vunpack.c.h.bf16 %v1552
    %v1555 = vld [vmem:[%s3] sm:$0xff]
    %1557 = vset.pattern.permute.xlu0 0
    %1558 = vperm.xlu0 %1557, %v1555
    %v1559 = vpop.permute.xlu0 %1558
    %v1561 = vmul.f32 %v1559, %v1539
    %v1562 = vmul.f32 %v1559, %v1551
    %v1563 = vadd.f32 %v1553, %v1561
    %v1564 = vadd.f32 %v1554, %v1562
    %v1565 = vmax.f32 %v1563, 0.0
    %v1566 = vmax.f32 %v1564, 0.0
    %v1567 = vpack.c.bf16 %v1566, %v1565
    %1568 = vst [vmem:[%s6] sm:$0xff] %v1567
    // Predicated region
    $region30: #{ddf_forward.4} parent=1 // pred_check
      _
    $region31: #{ddf_forward.4} parent=1 // pred_check_branch
      %1570 = sbr.rel (0) target = $region33
    $region32: #{ddf_forward.4} parent=1 // pred_region
      _
    $region33: #{ddf_forward.4} parent=1 // pred_fallthru
      _
    // Predicated region
    $region34: #{ddf_forward.4} parent=1 // pred_check
      _
    $region35: #{ddf_forward.4} parent=1 // pred_check_branch
      %1572 = sbr.rel (0) target = $region37
    $region36: #{ddf_forward.4} parent=1 // pred_region
      _
    $region37: #{ddf_forward.4} parent=1 // pred_fallthru
      _
    %1573 = vsyncpa [#allocation3], 1

</llo_original>
